<compile_context>
chip_gen: v5e
topology: v5e:2x2
jax: 0.10.0
libtpu: 0.0.40
codegen_flags: <defaults>
</compile_context>

<pallas_src>
import functools

import jax
import jax.numpy as jnp
import numpy as np
from jax.experimental import pallas as pl
from jax.experimental.pallas import tpu as pltpu


def _window_attn_kernel(x_ref, qkv_w_ref, qkv_b_ref, proj_w_ref, proj_b_ref,
                        bias_ref, o_ref, ho_ref, *, num_heads,
                        tokens_per_window):
    """One grid step = TB fused windows.

    x_ref      : (TB*N, C)   bf16 input tokens (TB windows, row-flattened)
    qkv_w_ref  : (C, 3C)     bf16 qkv weight (transposed: y = x @ W), q cols
                             pre-scaled by the softmax scale
    qkv_b_ref  : (1, 3C)     f32 qkv bias (q entries pre-scaled)
    proj_w_ref : (C, C)      bf16 output projection weight (transposed)
    proj_b_ref : (1, C)      f32 output projection bias
    bias_ref   : (H, N, N)   f32 relative position bias (pre-gathered)
    o_ref      : (TB*N, C)   output
    ho_ref     : (TB*N, C)   bf16 VMEM scratch holding all head outputs
    """
    rows, C = x_ref.shape
    N = tokens_per_window
    TB = rows // N
    H = num_heads
    dh = C // H

    # Fused qkv projection for all TB windows at once (scale already folded
    # into the q columns).  f32 accumulate + bias, then ONE downcast to bf16.
    qkv = jnp.dot(x_ref[...], qkv_w_ref[...],
                  preferred_element_type=jnp.float32) + qkv_b_ref[...]
    qkv = qkv.astype(jnp.bfloat16)                       # (rows, 3C) bf16

    # Split into q / k / v C-wide slabs first (tile-aligned when C % 128 == 0)
    # and take dh-wide head slices from those smaller slabs.
    q_all = qkv[:, 0 * C:1 * C].reshape(TB, N, C)
    k_all = qkv[:, 1 * C:2 * C].reshape(TB, N, C)
    v_all = qkv[:, 2 * C:3 * C].reshape(TB, N, C)

    for h in range(H):                                   # static unroll; H small
        q = q_all[:, :, h * dh:(h + 1) * dh]             # (TB, N, dh) bf16
        k = k_all[:, :, h * dh:(h + 1) * dh]
        v = v_all[:, :, h * dh:(h + 1) * dh]

        # Scores batched over the fused-window axis; f32 accumulation.
        s = jnp.einsum("bnd,bmd->bnm", q, k,
                       preferred_element_type=jnp.float32)       # (TB, N, N)
        s = s + bias_ref[h]

        # Un-normalized softmax -> p @ v, then normalize the (N, dh) head
        # output (dh <= N, so fewer VPU multiplies than normalizing p).
        s = s - jnp.max(s, axis=-1, keepdims=True)
        p = jnp.exp(s)
        l = jnp.sum(p, axis=-1, keepdims=True)                   # (TB, N, 1)
        ho = jnp.einsum("bnm,bmd->bnd", p.astype(jnp.bfloat16), v,
                        preferred_element_type=jnp.float32)      # (TB, N, dh)
        ho = ho * pl.reciprocal(l, approx=True)

        # Drop the head output into its lane slot of the bf16 scratch; the
        # output projection runs once, after the loop.
        ho_ref[:, h * dh:(h + 1) * dh] = (
            ho.reshape(rows, dh).astype(jnp.bfloat16))

    # Single output-projection matmul over all heads / all fused windows.
    out = jnp.dot(ho_ref[...], proj_w_ref[...],
                  preferred_element_type=jnp.float32) + proj_b_ref[...]
    o_ref[...] = out.astype(o_ref.dtype)


def _pick_tb(num_windows, tokens, target_rows=1024):
    """Largest divisor of num_windows with tb * tokens <= target_rows."""
    tb = 1
    for cand in range(1, num_windows + 1):
        if num_windows % cand == 0 and cand * tokens <= target_rows:
            tb = cand
    return tb


def window_attention_pallas(x, qkv_w, qkv_b, proj_w, proj_b, rel_bias,
                            num_heads, scale, tb=None, out_dtype=None):
    """x: (B_, N, C); rel_bias: (num_heads, N, N)."""
    B_, N, C = x.shape
    assert C % num_heads == 0
    assert N % 8 == 0, "pad tokens-per-window to a multiple of 8"
    # TODO(synk): real Swin uses N=49 (7x7) windows and an optional shifted-
    # window mask; pad tokens to 56 on the wrapper side and mask padded /
    # masked key columns to -inf before the softmax for those configs.
    if out_dtype is None:
        out_dtype = x.dtype
    if tb is None:
        tb = _pick_tb(B_, N)
    assert B_ % tb == 0
    rows = tb * N

    # Fold the softmax scale into the q columns of the qkv weight / bias
    # (one-time weight transform: removes the per-head N*N VPU multiply).
    col_scale = jnp.concatenate(
        [jnp.full((C,), scale, jnp.float32), jnp.ones((2 * C,), jnp.float32)])
    qkv_w_b = (qkv_w.astype(jnp.float32) * col_scale[None, :]).astype(jnp.bfloat16)
    qkv_b_f = qkv_b.astype(jnp.float32) * col_scale[None, :]
    proj_w_b = proj_w.astype(jnp.bfloat16)
    proj_b_f = proj_b.astype(jnp.float32)
    bias_f = rel_bias.astype(jnp.float32)

    # bf16 MXU operands at the pallas_call boundary; all accumulation and the
    # softmax stay f32 inside the kernel.
    x2d = x.reshape(B_ * N, C).astype(jnp.bfloat16)
    out_isz = jnp.dtype(out_dtype).itemsize
    # TODO(synk): for C < 128 stages (demo C=32, Swin stage-1 C=96) output
    # stores are masked sub-lane-width; a lane-dense output slab would need a
    # different wrapper-side data arrangement.

    # Generation-aware VMEM budget (double-buffered x/out blocks, single-
    # buffered weights, in-kernel qkv / head-output buffers), capped so the
    # tile still fits v7x's 64 MiB physical VMEM.
    est = (2 * rows * C * 2                      # x blocks (bf16, 2 buffers)
           + 2 * rows * C * out_isz              # out blocks (2 buffers)
           + C * 3 * C * 2 + C * C * 2           # weights (single-buffered)
           + 3 * C * 4 + C * 4                   # biases
           + num_heads * N * N * 4               # relative position bias
           + rows * 3 * C * (4 + 2)              # qkv f32 accum + bf16 copy
           + rows * C * 2                        # head-output scratch
           + 4 * tb * N * N * 4)                 # per-head f32 temporaries
    vmem_limit = int(min(56 * 1024 * 1024, max(32 * 1024 * 1024, 2 * est)))

    dh = C // num_heads
    flops = (2 * B_ * N * C * 3 * C                 # qkv projection
             + 4 * B_ * num_heads * N * N * dh      # scores + attn @ v
             + 2 * B_ * N * C * C)                  # output projection
    bytes_accessed = (x2d.size * 2 + B_ * N * C * out_isz
                      + qkv_w_b.size * 2 + proj_w_b.size * 2
                      + qkv_b_f.size * 4 + proj_b_f.size * 4 + bias_f.size * 4)

    kernel = functools.partial(_window_attn_kernel, num_heads=num_heads,
                               tokens_per_window=N)
    out2d = pl.pallas_call(
        kernel,
        out_shape=jax.ShapeDtypeStruct((B_ * N, C), out_dtype),
        grid_spec=pltpu.PrefetchScalarGridSpec(
            num_scalar_prefetch=0,
            grid=(B_ // tb,),
            in_specs=[
                pl.BlockSpec((rows, C), lambda b: (b, 0)),
                # Constant block indices + single buffering: weights / biases
                # are DMA'd once, stay VMEM-resident across all grid steps,
                # and don't pay a second (double-buffer) copy.
                pl.BlockSpec((C, 3 * C), lambda b: (0, 0),
                             pipeline_mode=pl.Buffered(1)),
                pl.BlockSpec((1, 3 * C), lambda b: (0, 0),
                             pipeline_mode=pl.Buffered(1)),
                pl.BlockSpec((C, C), lambda b: (0, 0),
                             pipeline_mode=pl.Buffered(1)),
                pl.BlockSpec((1, C), lambda b: (0, 0),
                             pipeline_mode=pl.Buffered(1)),
                pl.BlockSpec((num_heads, N, N), lambda b: (0, 0, 0),
                             pipeline_mode=pl.Buffered(1)),
            ],
            out_specs=pl.BlockSpec((rows, C), lambda b: (b, 0)),
            scratch_shapes=[pltpu.VMEM((rows, C), jnp.bfloat16)],
        ),
        compiler_params=pltpu.CompilerParams(
            # Window axis is embarrassingly parallel -> shards across
            # TensorCores on multi-TC chips (v7x).
            dimension_semantics=("parallel",),
            vmem_limit_bytes=vmem_limit),
        cost_estimate=pl.CostEstimate(
            flops=flops,
            transcendentals=B_ * num_heads * N * (N + 1),
            bytes_accessed=bytes_accessed),
    )(x2d, qkv_w_b, qkv_b_f, proj_w_b, proj_b_f, bias_f)
    return out2d.reshape(B_, N, C)


def make_relative_position_index(window_size):
    """Replicates the PyTorch buffer construction (numpy, static)."""
    coords_h = np.arange(window_size)
    coords_w = np.arange(window_size)
    coords = np.stack(np.meshgrid(coords_h, coords_w, indexing="ij"))  # (2,Wh,Ww)
    coords_flatten = coords.reshape(2, -1)                             # (2, N)
    relative_coords = coords_flatten[:, :, None] - coords_flatten[:, None, :]
    relative_coords = relative_coords.transpose(1, 2, 0).copy()        # (N, N, 2)
    relative_coords[:, :, 0] += window_size - 1
    relative_coords[:, :, 1] += window_size - 1
    relative_coords[:, :, 0] *= 2 * window_size - 1
    return relative_coords.sum(-1)                                     # (N, N)


def window_attention_reference(x, qkv_w, qkv_b, proj_w, proj_b, rel_bias,
                               num_heads, scale):
    """Pure-JAX f32 reference mirroring the PyTorch forward."""
    B_, N, C = x.shape
    dh = C // num_heads
    qkv = x @ qkv_w + qkv_b[0]                          # (B_, N, 3C)
    qkv = qkv.reshape(B_, N, 3, num_heads, dh).transpose(2, 0, 3, 1, 4)
    q, k, v = qkv[0], qkv[1], qkv[2]                    # (B_, H, N, dh)
    attn = jnp.einsum("bhnd,bhmd->bhnm", q, k) * scale  # (B_, H, N, N)
    attn = attn + rel_bias[None]
    attn = jax.nn.softmax(attn, axis=-1)
    out = jnp.einsum("bhnm,bhmd->bhnd", attn, v)        # (B_, H, N, dh)
    out = out.transpose(0, 2, 1, 3).reshape(B_, N, C)
    return out @ proj_w + proj_b[0]


if __name__ == "__main__":
    # Small, module-consistent shapes.
    dim = 32
    window_size = 4
    num_heads = 4
    N = window_size * window_size      # 16 tokens per window
    B_ = 16                            # number of windows * batch
    scale = (dim // num_heads) ** -0.5

    key = jax.random.PRNGKey(0)
    k_x, k_qw, k_qb, k_pw, k_pb, k_tab = jax.random.split(key, 6)

    x = jax.random.normal(k_x, (B_, N, dim), dtype=jnp.float32)

    # Deterministic parameter init (synthetic; not a checkpoint load).
    qkv_w = jax.random.normal(k_qw, (dim, 3 * dim), dtype=jnp.float32) * 0.2
    qkv_b = jax.random.normal(k_qb, (1, 3 * dim), dtype=jnp.float32) * 0.02
    proj_w = jax.random.normal(k_pw, (dim, dim), dtype=jnp.float32) * 0.2
    proj_b = jax.random.normal(k_pb, (1, dim), dtype=jnp.float32) * 0.02
    # Table is zeros in the PyTorch __init__, but small random values exercise
    # the bias path.
    rel_pos_bias_table = jax.random.normal(
        k_tab, ((2 * window_size - 1) ** 2, num_heads), dtype=jnp.float32) * 0.02

    # Gather the relative position bias once in plain JAX (glue).
    rel_index = jnp.asarray(make_relative_position_index(window_size))   # (N, N)
    rel_bias = rel_pos_bias_table[rel_index.reshape(-1)]                 # (N*N, H)
    rel_bias = rel_bias.reshape(N, N, num_heads).transpose(2, 0, 1)      # (H, N, N)

    # All B_=16 windows fused into one 256-row grid step; bf16 output halves
    # writeback bandwidth (all MXU operands are bf16 anyway).
    out = window_attention_pallas(x, qkv_w, qkv_b, proj_w, proj_b, rel_bias,
                                  num_heads, scale, out_dtype=jnp.bfloat16)
    out = jax.block_until_ready(out)

    ref = window_attention_reference(x, qkv_w, qkv_b, proj_w, proj_b, rel_bias,
                                     num_heads, scale)
    # bf16 MXU operands / bf16 output with f32 accumulation vs. pure-f32 ref.
    np.testing.assert_allclose(np.asarray(out.astype(jnp.float32)),
                               np.asarray(ref), rtol=5e-2, atol=3e-2)
    print("KERNEL_OK")
</pallas_src>

<mosaic_0001>
module attributes {stable_mosaic.version = 11 : i64} {
  func.func @_window_attn_kernel(%arg0: i32, %arg1: memref<256x32xbf16, #tpu.memory_space<vmem>>, %arg2: memref<32x96xbf16, #tpu.memory_space<vmem>>, %arg3: memref<1x96xf32, #tpu.memory_space<vmem>>, %arg4: memref<32x32xbf16, #tpu.memory_space<vmem>>, %arg5: memref<1x32xf32, #tpu.memory_space<vmem>>, %arg6: memref<4x16x16xf32, #tpu.memory_space<vmem>>, %arg7: memref<256x32xbf16, #tpu.memory_space<vmem>>, %arg8: memref<256x32xbf16, #tpu.memory_space<vmem>>) attributes {dimension_semantics = [#tpu.dimension_semantics<parallel>], iteration_bounds = array<i64: 1>, scalar_prefetch = 0 : i64, scratch_operands = 1 : i64, tpu.core_type = #tpu.core_type<tc>, window_params = [{transform_indices = @transform_0, window_bounds = array<i64: 256, 32>}, {pipeline_mode = #tpu.pipeline_mode<synchronous>, transform_indices = @transform_1, window_bounds = array<i64: 32, 96>}, {pipeline_mode = #tpu.pipeline_mode<synchronous>, transform_indices = @transform_2, window_bounds = array<i64: 1, 96>}, {pipeline_mode = #tpu.pipeline_mode<synchronous>, transform_indices = @transform_3, window_bounds = array<i64: 32, 32>}, {pipeline_mode = #tpu.pipeline_mode<synchronous>, transform_indices = @transform_4, window_bounds = array<i64: 1, 32>}, {pipeline_mode = #tpu.pipeline_mode<synchronous>, transform_indices = @transform_5, window_bounds = array<i64: 4, 16, 16>}, {transform_indices = @transform_6, window_bounds = array<i64: 256, 32>}]} {
    %c0 = arith.constant 0 : index
    %c0_0 = arith.constant 0 : index
    %0 = vector.load %arg1[%c0, %c0_0] : memref<256x32xbf16, #tpu.memory_space<vmem>>, vector<256x32xbf16>
    %c0_1 = arith.constant 0 : index
    %c0_2 = arith.constant 0 : index
    %1 = vector.load %arg2[%c0_1, %c0_2] : memref<32x96xbf16, #tpu.memory_space<vmem>>, vector<32x96xbf16>
    %cst = arith.constant dense<0.000000e+00> : vector<256x96xf32>
    %2 = tpu.matmul %0, %1, %cst {dimension_numbers = #tpu.dot_dimension_numbers<[1], [0], [0], [1], [0, 0, 1, 1], [], []>} : vector<256x32xbf16>, vector<32x96xbf16>, vector<256x96xf32> -> vector<256x96xf32>
    %c0_3 = arith.constant 0 : index
    %c0_4 = arith.constant 0 : index
    %3 = vector.load %arg3[%c0_3, %c0_4] : memref<1x96xf32, #tpu.memory_space<vmem>>, vector<1x96xf32>
    %4 = vector.broadcast %3 : vector<1x96xf32> to vector<256x96xf32>
    %5 = arith.addf %2, %4 : vector<256x96xf32>
    %6 = arith.truncf %5 : vector<256x96xf32> to vector<256x96xbf16>
    %7 = vector.extract_strided_slice %6 {offsets = [0, 0], sizes = [256, 32], strides = [1, 1]} : vector<256x96xbf16> to vector<256x32xbf16>
    %8 = vector.shape_cast %7 : vector<256x32xbf16> to vector<16x16x32xbf16>
    %9 = vector.extract_strided_slice %6 {offsets = [0, 32], sizes = [256, 32], strides = [1, 1]} : vector<256x96xbf16> to vector<256x32xbf16>
    %10 = vector.shape_cast %9 : vector<256x32xbf16> to vector<16x16x32xbf16>
    %11 = vector.extract_strided_slice %6 {offsets = [0, 64], sizes = [256, 32], strides = [1, 1]} : vector<256x96xbf16> to vector<256x32xbf16>
    %12 = vector.shape_cast %11 : vector<256x32xbf16> to vector<16x16x32xbf16>
    %13 = vector.extract_strided_slice %8 {offsets = [0, 0, 0], sizes = [16, 16, 8], strides = [1, 1, 1]} : vector<16x16x32xbf16> to vector<16x16x8xbf16>
    %14 = vector.extract_strided_slice %10 {offsets = [0, 0, 0], sizes = [16, 16, 8], strides = [1, 1, 1]} : vector<16x16x32xbf16> to vector<16x16x8xbf16>
    %15 = vector.extract_strided_slice %12 {offsets = [0, 0, 0], sizes = [16, 16, 8], strides = [1, 1, 1]} : vector<16x16x32xbf16> to vector<16x16x8xbf16>
    "tpu.trace_start"() <{level = 10 : i32, message = "bnd,bmd->bnm"}> : () -> ()
    %cst_5 = arith.constant dense<0.000000e+00> : vector<16x16x16xf32>
    %16 = tpu.matmul %13, %14, %cst_5 {dimension_numbers = #tpu.dot_dimension_numbers<[2], [2], [1], [1], [0, 0, 0, 1, 1, 1], [0], [0]>} : vector<16x16x8xbf16>, vector<16x16x8xbf16>, vector<16x16x16xf32> -> vector<16x16x16xf32>
    "tpu.trace_stop"() : () -> ()
    %c0_6 = arith.constant 0 : index
    %c0_7 = arith.constant 0 : index
    %c0_8 = arith.constant 0 : index
    %17 = vector.load %arg6[%c0_6, %c0_7, %c0_8] : memref<4x16x16xf32, #tpu.memory_space<vmem>>, vector<1x16x16xf32>
    %18 = vector.shape_cast %17 : vector<1x16x16xf32> to vector<16x16xf32>
    %19 = vector.shape_cast %18 : vector<16x16xf32> to vector<1x16x16xf32>
    %20 = vector.broadcast %19 : vector<1x16x16xf32> to vector<16x16x16xf32>
    %21 = arith.addf %16, %20 : vector<16x16x16xf32>
    %cst_9 = arith.constant dense<0xFF800000> : vector<16x16xf32>
    %22 = vector.multi_reduction <maximumf>, %21, %cst_9 [2] : vector<16x16x16xf32> to vector<16x16xf32>
    %23 = vector.shape_cast %22 : vector<16x16xf32> to vector<16x16x1xf32>
    %24 = vector.broadcast %23 : vector<16x16x1xf32> to vector<16x16x16xf32>
    %25 = arith.subf %21, %24 : vector<16x16x16xf32>
    %26 = math.exp %25 : vector<16x16x16xf32>
    %cst_10 = arith.constant dense<0.000000e+00> : vector<16x16xf32>
    %27 = vector.multi_reduction <add>, %26, %cst_10 [2] : vector<16x16x16xf32> to vector<16x16xf32>
    %28 = vector.shape_cast %27 : vector<16x16xf32> to vector<16x16x1xf32>
    %29 = arith.truncf %26 : vector<16x16x16xf32> to vector<16x16x16xbf16>
    "tpu.trace_start"() <{level = 10 : i32, message = "bnm,bmd->bnd"}> : () -> ()
    %cst_11 = arith.constant dense<0.000000e+00> : vector<16x16x8xf32>
    %30 = tpu.matmul %29, %15, %cst_11 {dimension_numbers = #tpu.dot_dimension_numbers<[2], [1], [1], [2], [0, 0, 0, 1, 1, 2], [0], [0]>} : vector<16x16x16xbf16>, vector<16x16x8xbf16>, vector<16x16x8xf32> -> vector<16x16x8xf32>
    "tpu.trace_stop"() : () -> ()
    %31 = tpu.reciprocal %28 {approx = true} : vector<16x16x1xf32> -> vector<16x16x1xf32>
    %32 = vector.broadcast %31 : vector<16x16x1xf32> to vector<16x16x8xf32>
    %33 = arith.mulf %30, %32 : vector<16x16x8xf32>
    %34 = vector.shape_cast %33 : vector<16x16x8xf32> to vector<256x8xf32>
    %35 = arith.truncf %34 : vector<256x8xf32> to vector<256x8xbf16>
    %c0_12 = arith.constant 0 : index
    %c0_13 = arith.constant 0 : index
    %36 = vector.load %arg8[%c0_12, %c0_13] : memref<256x32xbf16, #tpu.memory_space<vmem>>, vector<256x8xbf16>
    tpu.vector_store %arg8[%c0_12, %c0_13], %35 {strides = array<i32>} : memref<256x32xbf16, #tpu.memory_space<vmem>>, vector<256x8xbf16>,
    %37 = vector.extract_strided_slice %8 {offsets = [0, 0, 8], sizes = [16, 16, 8], strides = [1, 1, 1]} : vector<16x16x32xbf16> to vector<16x16x8xbf16>
    %38 = vector.extract_strided_slice %10 {offsets = [0, 0, 8], sizes = [16, 16, 8], strides = [1, 1, 1]} : vector<16x16x32xbf16> to vector<16x16x8xbf16>
    %39 = vector.extract_strided_slice %12 {offsets = [0, 0, 8], sizes = [16, 16, 8], strides = [1, 1, 1]} : vector<16x16x32xbf16> to vector<16x16x8xbf16>
    "tpu.trace_start"() <{level = 10 : i32, message = "bnd,bmd->bnm"}> : () -> ()
    %cst_14 = arith.constant dense<0.000000e+00> : vector<16x16x16xf32>
    %40 = tpu.matmul %37, %38, %cst_14 {dimension_numbers = #tpu.dot_dimension_numbers<[2], [2], [1], [1], [0, 0, 0, 1, 1, 1], [0], [0]>} : vector<16x16x8xbf16>, vector<16x16x8xbf16>, vector<16x16x16xf32> -> vector<16x16x16xf32>
    "tpu.trace_stop"() : () -> ()
    %c1 = arith.constant 1 : index
    %c0_15 = arith.constant 0 : index
    %c0_16 = arith.constant 0 : index
    %41 = vector.load %arg6[%c1, %c0_15, %c0_16] : memref<4x16x16xf32, #tpu.memory_space<vmem>>, vector<1x16x16xf32>
    %42 = vector.shape_cast %41 : vector<1x16x16xf32> to vector<16x16xf32>
    %43 = vector.shape_cast %42 : vector<16x16xf32> to vector<1x16x16xf32>
    %44 = vector.broadcast %43 : vector<1x16x16xf32> to vector<16x16x16xf32>
    %45 = arith.addf %40, %44 : vector<16x16x16xf32>
    %cst_17 = arith.constant dense<0xFF800000> : vector<16x16xf32>
    %46 = vector.multi_reduction <maximumf>, %45, %cst_17 [2] : vector<16x16x16xf32> to vector<16x16xf32>
    %47 = vector.shape_cast %46 : vector<16x16xf32> to vector<16x16x1xf32>
    %48 = vector.broadcast %47 : vector<16x16x1xf32> to vector<16x16x16xf32>
    %49 = arith.subf %45, %48 : vector<16x16x16xf32>
    %50 = math.exp %49 : vector<16x16x16xf32>
    %cst_18 = arith.constant dense<0.000000e+00> : vector<16x16xf32>
    %51 = vector.multi_reduction <add>, %50, %cst_18 [2] : vector<16x16x16xf32> to vector<16x16xf32>
    %52 = vector.shape_cast %51 : vector<16x16xf32> to vector<16x16x1xf32>
    %53 = arith.truncf %50 : vector<16x16x16xf32> to vector<16x16x16xbf16>
    "tpu.trace_start"() <{level = 10 : i32, message = "bnm,bmd->bnd"}> : () -> ()
    %cst_19 = arith.constant dense<0.000000e+00> : vector<16x16x8xf32>
    %54 = tpu.matmul %53, %39, %cst_19 {dimension_numbers = #tpu.dot_dimension_numbers<[2], [1], [1], [2], [0, 0, 0, 1, 1, 2], [0], [0]>} : vector<16x16x16xbf16>, vector<16x16x8xbf16>, vector<16x16x8xf32> -> vector<16x16x8xf32>
    "tpu.trace_stop"() : () -> ()
    %55 = tpu.reciprocal %52 {approx = true} : vector<16x16x1xf32> -> vector<16x16x1xf32>
    %56 = vector.broadcast %55 : vector<16x16x1xf32> to vector<16x16x8xf32>
    %57 = arith.mulf %54, %56 : vector<16x16x8xf32>
    %58 = vector.shape_cast %57 : vector<16x16x8xf32> to vector<256x8xf32>
    %59 = arith.truncf %58 : vector<256x8xf32> to vector<256x8xbf16>
    %c0_20 = arith.constant 0 : index
    %c8 = arith.constant 8 : index
    %60 = vector.load %arg8[%c0_20, %c8] : memref<256x32xbf16, #tpu.memory_space<vmem>>, vector<256x8xbf16>
    tpu.vector_store %arg8[%c0_20, %c8], %59 {strides = array<i32>} : memref<256x32xbf16, #tpu.memory_space<vmem>>, vector<256x8xbf16>,
    %61 = vector.extract_strided_slice %8 {offsets = [0, 0, 16], sizes = [16, 16, 8], strides = [1, 1, 1]} : vector<16x16x32xbf16> to vector<16x16x8xbf16>
    %62 = vector.extract_strided_slice %10 {offsets = [0, 0, 16], sizes = [16, 16, 8], strides = [1, 1, 1]} : vector<16x16x32xbf16> to vector<16x16x8xbf16>
    %63 = vector.extract_strided_slice %12 {offsets = [0, 0, 16], sizes = [16, 16, 8], strides = [1, 1, 1]} : vector<16x16x32xbf16> to vector<16x16x8xbf16>
    "tpu.trace_start"() <{level = 10 : i32, message = "bnd,bmd->bnm"}> : () -> ()
    %cst_21 = arith.constant dense<0.000000e+00> : vector<16x16x16xf32>
    %64 = tpu.matmul %61, %62, %cst_21 {dimension_numbers = #tpu.dot_dimension_numbers<[2], [2], [1], [1], [0, 0, 0, 1, 1, 1], [0], [0]>} : vector<16x16x8xbf16>, vector<16x16x8xbf16>, vector<16x16x16xf32> -> vector<16x16x16xf32>
    "tpu.trace_stop"() : () -> ()
    %c2 = arith.constant 2 : index
    %c0_22 = arith.constant 0 : index
    %c0_23 = arith.constant 0 : index
    %65 = vector.load %arg6[%c2, %c0_22, %c0_23] : memref<4x16x16xf32, #tpu.memory_space<vmem>>, vector<1x16x16xf32>
    %66 = vector.shape_cast %65 : vector<1x16x16xf32> to vector<16x16xf32>
    %67 = vector.shape_cast %66 : vector<16x16xf32> to vector<1x16x16xf32>
    %68 = vector.broadcast %67 : vector<1x16x16xf32> to vector<16x16x16xf32>
    %69 = arith.addf %64, %68 : vector<16x16x16xf32>
    %cst_24 = arith.constant dense<0xFF800000> : vector<16x16xf32>
    %70 = vector.multi_reduction <maximumf>, %69, %cst_24 [2] : vector<16x16x16xf32> to vector<16x16xf32>
    %71 = vector.shape_cast %70 : vector<16x16xf32> to vector<16x16x1xf32>
    %72 = vector.broadcast %71 : vector<16x16x1xf32> to vector<16x16x16xf32>
    %73 = arith.subf %69, %72 : vector<16x16x16xf32>
    %74 = math.exp %73 : vector<16x16x16xf32>
    %cst_25 = arith.constant dense<0.000000e+00> : vector<16x16xf32>
    %75 = vector.multi_reduction <add>, %74, %cst_25 [2] : vector<16x16x16xf32> to vector<16x16xf32>
    %76 = vector.shape_cast %75 : vector<16x16xf32> to vector<16x16x1xf32>
    %77 = arith.truncf %74 : vector<16x16x16xf32> to vector<16x16x16xbf16>
    "tpu.trace_start"() <{level = 10 : i32, message = "bnm,bmd->bnd"}> : () -> ()
    %cst_26 = arith.constant dense<0.000000e+00> : vector<16x16x8xf32>
    %78 = tpu.matmul %77, %63, %cst_26 {dimension_numbers = #tpu.dot_dimension_numbers<[2], [1], [1], [2], [0, 0, 0, 1, 1, 2], [0], [0]>} : vector<16x16x16xbf16>, vector<16x16x8xbf16>, vector<16x16x8xf32> -> vector<16x16x8xf32>
    "tpu.trace_stop"() : () -> ()
    %79 = tpu.reciprocal %76 {approx = true} : vector<16x16x1xf32> -> vector<16x16x1xf32>
    %80 = vector.broadcast %79 : vector<16x16x1xf32> to vector<16x16x8xf32>
    %81 = arith.mulf %78, %80 : vector<16x16x8xf32>
    %82 = vector.shape_cast %81 : vector<16x16x8xf32> to vector<256x8xf32>
    %83 = arith.truncf %82 : vector<256x8xf32> to vector<256x8xbf16>
    %c0_27 = arith.constant 0 : index
    %c16 = arith.constant 16 : index
    %84 = vector.load %arg8[%c0_27, %c16] : memref<256x32xbf16, #tpu.memory_space<vmem>>, vector<256x8xbf16>
    tpu.vector_store %arg8[%c0_27, %c16], %83 {strides = array<i32>} : memref<256x32xbf16, #tpu.memory_space<vmem>>, vector<256x8xbf16>,
    %85 = vector.extract_strided_slice %8 {offsets = [0, 0, 24], sizes = [16, 16, 8], strides = [1, 1, 1]} : vector<16x16x32xbf16> to vector<16x16x8xbf16>
    %86 = vector.extract_strided_slice %10 {offsets = [0, 0, 24], sizes = [16, 16, 8], strides = [1, 1, 1]} : vector<16x16x32xbf16> to vector<16x16x8xbf16>
    %87 = vector.extract_strided_slice %12 {offsets = [0, 0, 24], sizes = [16, 16, 8], strides = [1, 1, 1]} : vector<16x16x32xbf16> to vector<16x16x8xbf16>
    "tpu.trace_start"() <{level = 10 : i32, message = "bnd,bmd->bnm"}> : () -> ()
    %cst_28 = arith.constant dense<0.000000e+00> : vector<16x16x16xf32>
    %88 = tpu.matmul %85, %86, %cst_28 {dimension_numbers = #tpu.dot_dimension_numbers<[2], [2], [1], [1], [0, 0, 0, 1, 1, 1], [0], [0]>} : vector<16x16x8xbf16>, vector<16x16x8xbf16>, vector<16x16x16xf32> -> vector<16x16x16xf32>
    "tpu.trace_stop"() : () -> ()
    %c3 = arith.constant 3 : index
    %c0_29 = arith.constant 0 : index
    %c0_30 = arith.constant 0 : index
    %89 = vector.load %arg6[%c3, %c0_29, %c0_30] : memref<4x16x16xf32, #tpu.memory_space<vmem>>, vector<1x16x16xf32>
    %90 = vector.shape_cast %89 : vector<1x16x16xf32> to vector<16x16xf32>
    %91 = vector.shape_cast %90 : vector<16x16xf32> to vector<1x16x16xf32>
    %92 = vector.broadcast %91 : vector<1x16x16xf32> to vector<16x16x16xf32>
    %93 = arith.addf %88, %92 : vector<16x16x16xf32>
    %cst_31 = arith.constant dense<0xFF800000> : vector<16x16xf32>
    %94 = vector.multi_reduction <maximumf>, %93, %cst_31 [2] : vector<16x16x16xf32> to vector<16x16xf32>
    %95 = vector.shape_cast %94 : vector<16x16xf32> to vector<16x16x1xf32>
    %96 = vector.broadcast %95 : vector<16x16x1xf32> to vector<16x16x16xf32>
    %97 = arith.subf %93, %96 : vector<16x16x16xf32>
    %98 = math.exp %97 : vector<16x16x16xf32>
    %cst_32 = arith.constant dense<0.000000e+00> : vector<16x16xf32>
    %99 = vector.multi_reduction <add>, %98, %cst_32 [2] : vector<16x16x16xf32> to vector<16x16xf32>
    %100 = vector.shape_cast %99 : vector<16x16xf32> to vector<16x16x1xf32>
    %101 = arith.truncf %98 : vector<16x16x16xf32> to vector<16x16x16xbf16>
    "tpu.trace_start"() <{level = 10 : i32, message = "bnm,bmd->bnd"}> : () -> ()
    %cst_33 = arith.constant dense<0.000000e+00> : vector<16x16x8xf32>
    %102 = tpu.matmul %101, %87, %cst_33 {dimension_numbers = #tpu.dot_dimension_numbers<[2], [1], [1], [2], [0, 0, 0, 1, 1, 2], [0], [0]>} : vector<16x16x16xbf16>, vector<16x16x8xbf16>, vector<16x16x8xf32> -> vector<16x16x8xf32>
    "tpu.trace_stop"() : () -> ()
    %103 = tpu.reciprocal %100 {approx = true} : vector<16x16x1xf32> -> vector<16x16x1xf32>
    %104 = vector.broadcast %103 : vector<16x16x1xf32> to vector<16x16x8xf32>
    %105 = arith.mulf %102, %104 : vector<16x16x8xf32>
    %106 = vector.shape_cast %105 : vector<16x16x8xf32> to vector<256x8xf32>
    %107 = arith.truncf %106 : vector<256x8xf32> to vector<256x8xbf16>
    %c0_34 = arith.constant 0 : index
    %c24 = arith.constant 24 : index
    %108 = vector.load %arg8[%c0_34, %c24] : memref<256x32xbf16, #tpu.memory_space<vmem>>, vector<256x8xbf16>
    tpu.vector_store %arg8[%c0_34, %c24], %107 {strides = array<i32>} : memref<256x32xbf16, #tpu.memory_space<vmem>>, vector<256x8xbf16>,
    %c0_35 = arith.constant 0 : index
    %c0_36 = arith.constant 0 : index
    %109 = vector.load %arg8[%c0_35, %c0_36] : memref<256x32xbf16, #tpu.memory_space<vmem>>, vector<256x32xbf16>
    %c0_37 = arith.constant 0 : index
    %c0_38 = arith.constant 0 : index
    %110 = vector.load %arg4[%c0_37, %c0_38] : memref<32x32xbf16, #tpu.memory_space<vmem>>, vector<32x32xbf16>
    %cst_39 = arith.constant dense<0.000000e+00> : vector<256x32xf32>
    %111 = tpu.matmul %109, %110, %cst_39 {dimension_numbers = #tpu.dot_dimension_numbers<[1], [0], [0], [1], [0, 0, 1, 1], [], []>} : vector<256x32xbf16>, vector<32x32xbf16>, vector<256x32xf32> -> vector<256x32xf32>
    %c0_40 = arith.constant 0 : index
    %c0_41 = arith.constant 0 : index
    %112 = vector.load %arg5[%c0_40, %c0_41] : memref<1x32xf32, #tpu.memory_space<vmem>>, vector<1x32xf32>
    %113 = vector.broadcast %112 : vector<1x32xf32> to vector<256x32xf32>
    %114 = arith.addf %111, %113 : vector<256x32xf32>
    %115 = arith.truncf %114 : vector<256x32xf32> to vector<256x32xbf16>
    %c0_42 = arith.constant 0 : index
    %c0_43 = arith.constant 0 : index
    %116 = vector.load %arg7[%c0_42, %c0_43] : memref<256x32xbf16, #tpu.memory_space<vmem>>, vector<256x32xbf16>
    tpu.vector_store %arg7[%c0_42, %c0_43], %115 {strides = array<i32>} : memref<256x32xbf16, #tpu.memory_space<vmem>>, vector<256x32xbf16>,
    return
  }
  func.func @transform_0(%arg0: i32) -> (i32, i32) {
    %c0_i32 = arith.constant 0 : i32
    %c0_i32_0 = arith.constant 0 : i32
    return %arg0, %c0_i32 : i32, i32
  }
  func.func @transform_1(%arg0: i32) -> (i32, i32) {
    %c0_i32 = arith.constant 0 : i32
    %c0_i32_0 = arith.constant 0 : i32
    %c0_i32_1 = arith.constant 0 : i32
    return %c0_i32, %c0_i32_0 : i32, i32
  }
  func.func @transform_2(%arg0: i32) -> (i32, i32) {
    %c0_i32 = arith.constant 0 : i32
    %c0_i32_0 = arith.constant 0 : i32
    %c0_i32_1 = arith.constant 0 : i32
    return %c0_i32, %c0_i32_0 : i32, i32
  }
  func.func @transform_3(%arg0: i32) -> (i32, i32) {
    %c0_i32 = arith.constant 0 : i32
    %c0_i32_0 = arith.constant 0 : i32
    %c0_i32_1 = arith.constant 0 : i32
    return %c0_i32, %c0_i32_0 : i32, i32
  }
  func.func @transform_4(%arg0: i32) -> (i32, i32) {
    %c0_i32 = arith.constant 0 : i32
    %c0_i32_0 = arith.constant 0 : i32
    %c0_i32_1 = arith.constant 0 : i32
    return %c0_i32, %c0_i32_0 : i32, i32
  }
  func.func @transform_5(%arg0: i32) -> (i32, i32, i32) {
    %c0_i32 = arith.constant 0 : i32
    %c0_i32_0 = arith.constant 0 : i32
    %c0_i32_1 = arith.constant 0 : i32
    %c0_i32_2 = arith.constant 0 : i32
    return %c0_i32, %c0_i32_0, %c0_i32_1 : i32, i32, i32
  }
  func.func @transform_6(%arg0: i32) -> (i32, i32) {
    %c0_i32 = arith.constant 0 : i32
    %c0_i32_0 = arith.constant 0 : i32
    return %arg0, %c0_i32 : i32, i32
  }
}

</mosaic_0001>

<llo_original>
// kernel: tpu_custom_call.1
$region0: #{tpu_custom_call.1}
  #allocation0 [shape = 'u32[]', space=smem, size = 0x4, offset = 0x4, fixed_abs, tag = 'smem constant byte address 0x4 - core index']
  #allocation1 [shape = 'u32[72,128]{1,0:T(1,128)}', space=vmem, size = 0x9000, scoped, tag = 'internal scratch']
  #allocation2 [shape = 'bf16[256,32]{1,0:T(8,128)(2,1)}', space=vmem, size = 0x10000, scoped, tag = 'scratch operand']
  %s0 = inlined_call_operand.vmem [shape: bf16[256,32], index: 0, kind: input, shape index: {}]
  %s1 = inlined_call_operand.vmem [shape: bf16[32,96], index: 1, kind: input, shape index: {}]
  %s2 = inlined_call_operand.vmem [shape: f32[1,96], index: 2, kind: input, shape index: {}]
  %s3 = inlined_call_operand.vmem [shape: bf16[32,32], index: 3, kind: input, shape index: {}]
  %s4 = inlined_call_operand.vmem [shape: f32[1,32], index: 4, kind: input, shape index: {}]
  %s5 = inlined_call_operand.vmem [shape: f32[4,16,16], index: 5, kind: input, shape index: {}]
  %s6 = inlined_call_operand.vmem [shape: bf16[256,32], index: 6, kind: output, shape index: {}]
  %s7 = sld [smem:[#allocation0]]
  $region34: #{tpu_custom_call.1} parent=0
    _
  %s9 = ssub.s32 1, %s7
  %s10 = scalar_select 0, %s9, %s7
  // Predicated region
  $region2: #{tpu_custom_call.1} parent=0 // pred_check
    _
  $region3: #{tpu_custom_call.1} parent=0 // pred_check_branch
    %12 = sbr.rel (0) target = $region5
  $region4: #{tpu_custom_call.1} parent=0 // pred_region
    _
  $region5: #{tpu_custom_call.1} parent=0 // pred_fallthru
    _
  // Predicated region
  $region6: #{tpu_custom_call.1} parent=0 // pred_check
    _
  $region7: #{tpu_custom_call.1} parent=0 // pred_check_branch
    %14 = sbr.rel (0) target = $region9
  $region8: #{tpu_custom_call.1} parent=0 // pred_region
    _
  $region9: #{tpu_custom_call.1} parent=0 // pred_fallthru
    _
  // Predicated region
  $region10: #{tpu_custom_call.1} parent=0 // pred_check
    _
  $region11: #{tpu_custom_call.1} parent=0 // pred_check_branch
    %16 = sbr.rel (0) target = $region13
  $region12: #{tpu_custom_call.1} parent=0 // pred_region
    _
  $region13: #{tpu_custom_call.1} parent=0 // pred_fallthru
    _
  // Predicated region
  $region14: #{tpu_custom_call.1} parent=0 // pred_check
    _
  $region15: #{tpu_custom_call.1} parent=0 // pred_check_branch
    %18 = sbr.rel (0) target = $region17
  $region16: #{tpu_custom_call.1} parent=0 // pred_region
    _
  $region17: #{tpu_custom_call.1} parent=0 // pred_fallthru
    _
  // Predicated region
  $region18: #{tpu_custom_call.1} parent=0 // pred_check
    _
  $region19: #{tpu_custom_call.1} parent=0 // pred_check_branch
    %20 = sbr.rel (0) target = $region21
  $region20: #{tpu_custom_call.1} parent=0 // pred_region
    _
  $region21: #{tpu_custom_call.1} parent=0 // pred_fallthru
    _
  // Predicated region
  $region22: #{tpu_custom_call.1} parent=0 // pred_check
    _
  $region23: #{tpu_custom_call.1} parent=0 // pred_check_branch
    %22 = sbr.rel (0) target = $region25
  $region24: #{tpu_custom_call.1} parent=0 // pred_region
    _
  $region25: #{tpu_custom_call.1} parent=0 // pred_fallthru
    _
  %v24 = vld [vmem:[%s0] sm:$0xf]
  %v25 = vld [vmem:[%s0 + $0x4] sm:$0xf]
  %v26 = vld [vmem:[%s0 + $0x8] sm:$0xf]
  %v27 = vld [vmem:[%s0 + $0xc] sm:$0xf]
  %v28 = vld [vmem:[%s0 + $0x10] sm:$0xf]
  %v29 = vld [vmem:[%s0 + $0x14] sm:$0xf]
  %v30 = vld [vmem:[%s0 + $0x18] sm:$0xf]
  %v31 = vld [vmem:[%s0 + $0x1c] sm:$0xf]
  %v32 = vld [vmem:[%s0 + $0x20] sm:$0xf]
  %v33 = vld [vmem:[%s0 + $0x24] sm:$0xf]
  %v34 = vld [vmem:[%s0 + $0x28] sm:$0xf]
  %v35 = vld [vmem:[%s0 + $0x2c] sm:$0xf]
  %v36 = vld [vmem:[%s0 + $0x30] sm:$0xf]
  %v37 = vld [vmem:[%s0 + $0x34] sm:$0xf]
  %v38 = vld [vmem:[%s0 + $0x38] sm:$0xf]
  %v39 = vld [vmem:[%s0 + $0x3c] sm:$0xf]
  %v40 = vld [vmem:[%s0 + $0x40] sm:$0xf]
  %v41 = vld [vmem:[%s0 + $0x44] sm:$0xf]
  %v42 = vld [vmem:[%s0 + $0x48] sm:$0xf]
  %v43 = vld [vmem:[%s0 + $0x4c] sm:$0xf]
  %v44 = vld [vmem:[%s0 + $0x50] sm:$0xf]
  %v45 = vld [vmem:[%s0 + $0x54] sm:$0xf]
  %v46 = vld [vmem:[%s0 + $0x58] sm:$0xf]
  %v47 = vld [vmem:[%s0 + $0x5c] sm:$0xf]
  %v48 = vld [vmem:[%s0 + $0x60] sm:$0xf]
  %v49 = vld [vmem:[%s0 + $0x64] sm:$0xf]
  %v50 = vld [vmem:[%s0 + $0x68] sm:$0xf]
  %v51 = vld [vmem:[%s0 + $0x6c] sm:$0xf]
  %v52 = vld [vmem:[%s0 + $0x70] sm:$0xf]
  %v53 = vld [vmem:[%s0 + $0x74] sm:$0xf]
  %v54 = vld [vmem:[%s0 + $0x78] sm:$0xf]
  %v55 = vld [vmem:[%s0 + $0x7c] sm:$0xf]
  %v56 = vld [vmem:[%s1] sm:$0xf]
  %v57 = vld [vmem:[%s1 + $0x4] sm:$0xf]
  %v58 = vld [vmem:[%s1 + $0x8] sm:$0xf]
  %v59 = vld [vmem:[%s1 + $0xc] sm:$0xf]
  %v60 = vld [vmem:[%s2] sm:$0x1]
  %v62 = vperm.slane %v60, 0
  %v96 = vunpack.c.l.b16 %v24
  %v97 = vunpack.c.l.b16 %v25
  %v98 = vunpack.c.l.b16 %v26
  %v99 = vunpack.c.l.b16 %v27
  %v100 = vunpack.c.l.b16 %v28
  %v101 = vunpack.c.l.b16 %v29
  %v102 = vunpack.c.l.b16 %v30
  %v103 = vunpack.c.l.b16 %v31
  %v104 = vunpack.c.l.b16 %v32
  %v105 = vunpack.c.l.b16 %v33
  %v106 = vunpack.c.l.b16 %v34
  %v107 = vunpack.c.l.b16 %v35
  %v108 = vunpack.c.l.b16 %v36
  %v109 = vunpack.c.l.b16 %v37
  %v110 = vunpack.c.l.b16 %v38
  %v111 = vunpack.c.l.b16 %v39
  %v112 = vunpack.c.l.b16 %v40
  %v113 = vunpack.c.l.b16 %v41
  %v114 = vunpack.c.l.b16 %v42
  %v115 = vunpack.c.l.b16 %v43
  %v116 = vunpack.c.l.b16 %v44
  %v117 = vunpack.c.l.b16 %v45
  %v118 = vunpack.c.l.b16 %v46
  %v119 = vunpack.c.l.b16 %v47
  %v120 = vunpack.c.l.b16 %v48
  %v121 = vunpack.c.l.b16 %v49
  %v122 = vunpack.c.l.b16 %v50
  %v123 = vunpack.c.l.b16 %v51
  %v124 = vunpack.c.l.b16 %v52
  %v125 = vunpack.c.l.b16 %v53
  %v126 = vunpack.c.l.b16 %v54
  %v127 = vunpack.c.l.b16 %v55
  %v128 = vpack.c.b16 %v97, %v96
  %v129 = vpack.c.b16 %v99, %v98
  %v130 = vpack.c.b16 %v101, %v100
  %v131 = vpack.c.b16 %v103, %v102
  %v132 = vpack.c.b16 %v105, %v104
  %v133 = vpack.c.b16 %v107, %v106
  %v134 = vpack.c.b16 %v109, %v108
  %v135 = vpack.c.b16 %v111, %v110
  %v136 = vpack.c.b16 %v113, %v112
  %v137 = vpack.c.b16 %v115, %v114
  %v138 = vpack.c.b16 %v117, %v116
  %v139 = vpack.c.b16 %v119, %v118
  %v140 = vpack.c.b16 %v121, %v120
  %v141 = vpack.c.b16 %v123, %v122
  %v142 = vpack.c.b16 %v125, %v124
  %v143 = vpack.c.b16 %v127, %v126
  %v148 = vunpack.c.l.b16 %v56
  %v149 = vunpack.c.l.b16 %v57
  %v150 = vunpack.c.l.b16 %v58
  %v151 = vunpack.c.l.b16 %v59
  %v152 = vpack.c.b16 %v149, %v148
  %v153 = vpack.c.b16 %v151, %v150
  %vm156 = vcmask 261120
  %v158 = vsel %vm156, %v128, 0
  %v161 = vsel %vm156, %v129, 0
  %v164 = vsel %vm156, %v130, 0
  %v167 = vsel %vm156, %v131, 0
  %v170 = vsel %vm156, %v132, 0
  %v173 = vsel %vm156, %v133, 0
  %v176 = vsel %vm156, %v134, 0
  %v179 = vsel %vm156, %v135, 0
  %v182 = vsel %vm156, %v136, 0
  %v185 = vsel %vm156, %v137, 0
  %v188 = vsel %vm156, %v138, 0
  %v191 = vsel %vm156, %v139, 0
  %v194 = vsel %vm156, %v140, 0
  %v197 = vsel %vm156, %v141, 0
  %v200 = vsel %vm156, %v142, 0
  %v203 = vsel %vm156, %v143, 0
  %205 = vmatpush.bf16.msra.mxu0 0
  %206 = vmatpush.bf16.msra.mxu0 0
  %207 = vmatpush.bf16.msra.mxu0 0
  %208 = vmatpush.bf16.msra.mxu0 0
  %209 = vmatpush.bf16.msra.mxu0 0
  %210 = vmatpush.bf16.msra.mxu0 0
  %211 = vmatpush.bf16.msra.mxu0 %v153
  %212 = vmatpush.bf16.msra.mxu0 %v152
  %213 = vmatmul.bf16.gmra.mxu0 %v158
  %v214 = vpop.f32.mrf.mxu0
  %v215 = vadd.f32 %v62, %v214
  %v216 = vpop.f32.mrf.mxu0
  %v217 = vadd.f32 %v62, %v216
  %218 = vmatmul.bf16.gmra.mxu0 %v161
  %v219 = vpop.f32.mrf.mxu0
  %v220 = vadd.f32 %v62, %v219
  %v221 = vpop.f32.mrf.mxu0
  %v222 = vadd.f32 %v62, %v221
  %223 = vmatmul.bf16.gmra.mxu0 %v164
  %v224 = vpop.f32.mrf.mxu0
  %v225 = vadd.f32 %v62, %v224
  %v226 = vpop.f32.mrf.mxu0
  %v227 = vadd.f32 %v62, %v226
  %228 = vmatmul.bf16.gmra.mxu0 %v167
  %v229 = vpop.f32.mrf.mxu0
  %v230 = vadd.f32 %v62, %v229
  %v231 = vpop.f32.mrf.mxu0
  %v232 = vadd.f32 %v62, %v231
  %233 = vmatmul.bf16.gmra.mxu0 %v170
  %v234 = vpop.f32.mrf.mxu0
  %v235 = vadd.f32 %v62, %v234
  %v236 = vpop.f32.mrf.mxu0
  %v237 = vadd.f32 %v62, %v236
  %238 = vmatmul.bf16.gmra.mxu0 %v173
  %v239 = vpop.f32.mrf.mxu0
  %v240 = vadd.f32 %v62, %v239
  %v241 = vpop.f32.mrf.mxu0
  %v242 = vadd.f32 %v62, %v241
  %243 = vmatmul.bf16.gmra.mxu0 %v176
  %v244 = vpop.f32.mrf.mxu0
  %v245 = vadd.f32 %v62, %v244
  %v246 = vpop.f32.mrf.mxu0
  %v247 = vadd.f32 %v62, %v246
  %248 = vmatmul.bf16.gmra.mxu0 %v179
  %v249 = vpop.f32.mrf.mxu0
  %v250 = vadd.f32 %v62, %v249
  %v251 = vpop.f32.mrf.mxu0
  %v252 = vadd.f32 %v62, %v251
  %253 = vmatmul.bf16.gmra.mxu0 %v182
  %v254 = vpop.f32.mrf.mxu0
  %v255 = vadd.f32 %v62, %v254
  %v256 = vpop.f32.mrf.mxu0
  %v257 = vadd.f32 %v62, %v256
  %258 = vmatmul.bf16.gmra.mxu0 %v185
  %v259 = vpop.f32.mrf.mxu0
  %v260 = vadd.f32 %v62, %v259
  %v261 = vpop.f32.mrf.mxu0
  %v262 = vadd.f32 %v62, %v261
  %263 = vmatmul.bf16.gmra.mxu0 %v188
  %v264 = vpop.f32.mrf.mxu0
  %v265 = vadd.f32 %v62, %v264
  %v266 = vpop.f32.mrf.mxu0
  %v267 = vadd.f32 %v62, %v266
  %268 = vmatmul.bf16.gmra.mxu0 %v191
  %v269 = vpop.f32.mrf.mxu0
  %v270 = vadd.f32 %v62, %v269
  %v271 = vpop.f32.mrf.mxu0
  %v272 = vadd.f32 %v62, %v271
  %273 = vmatmul.bf16.gmra.mxu0 %v194
  %v274 = vpop.f32.mrf.mxu0
  %v275 = vadd.f32 %v62, %v274
  %v276 = vpop.f32.mrf.mxu0
  %v277 = vadd.f32 %v62, %v276
  %278 = vmatmul.bf16.gmra.mxu0 %v197
  %v279 = vpop.f32.mrf.mxu0
  %v280 = vadd.f32 %v62, %v279
  %v281 = vpop.f32.mrf.mxu0
  %v282 = vadd.f32 %v62, %v281
  %283 = vmatmul.bf16.gmra.mxu0 %v200
  %v284 = vpop.f32.mrf.mxu0
  %v285 = vadd.f32 %v62, %v284
  %v286 = vpop.f32.mrf.mxu0
  %v287 = vadd.f32 %v62, %v286
  %288 = vmatmul.bf16.gmra.mxu0 %v203
  %v289 = vpop.f32.mrf.mxu0
  %v290 = vadd.f32 %v62, %v289
  %v291 = vpop.f32.mrf.mxu0
  %v292 = vadd.f32 %v62, %v291
  %293 = vdwg.mxu0
  %v294 = vpack.c.bf16 %v215, %v215
  %v295 = vpack.c.bf16 %v217, %v217
  %v296 = vpack.c.bf16 %v220, %v220
  %v297 = vpack.c.bf16 %v222, %v222
  %v298 = vpack.c.bf16 %v225, %v225
  %v299 = vpack.c.bf16 %v227, %v227
  %v300 = vpack.c.bf16 %v230, %v230
  %v301 = vpack.c.bf16 %v232, %v232
  %v302 = vpack.c.bf16 %v235, %v235
  %v303 = vpack.c.bf16 %v237, %v237
  %v304 = vpack.c.bf16 %v240, %v240
  %v305 = vpack.c.bf16 %v242, %v242
  %v306 = vpack.c.bf16 %v245, %v245
  %v307 = vpack.c.bf16 %v247, %v247
  %v308 = vpack.c.bf16 %v250, %v250
  %v309 = vpack.c.bf16 %v252, %v252
  %v310 = vpack.c.bf16 %v255, %v255
  %v311 = vpack.c.bf16 %v257, %v257
  %v312 = vpack.c.bf16 %v260, %v260
  %v313 = vpack.c.bf16 %v262, %v262
  %v314 = vpack.c.bf16 %v265, %v265
  %v315 = vpack.c.bf16 %v267, %v267
  %v316 = vpack.c.bf16 %v270, %v270
  %v317 = vpack.c.bf16 %v272, %v272
  %v318 = vpack.c.bf16 %v275, %v275
  %v319 = vpack.c.bf16 %v277, %v277
  %v320 = vpack.c.bf16 %v280, %v280
  %v321 = vpack.c.bf16 %v282, %v282
  %v322 = vpack.c.bf16 %v285, %v285
  %v323 = vpack.c.bf16 %v287, %v287
  %v324 = vpack.c.bf16 %v290, %v290
  %v325 = vpack.c.bf16 %v292, %v292
  %v326 = vld [vmem:[%s5] sm:$0xff]
  %v327 = vld [vmem:[%s5 + $0x8] sm:$0xff]
  %v330 = vunpack.c.l.b16 %v294
  %v331 = vunpack.c.l.b16 %v295
  %v332 = vpack.c.b16 %v331, %v330
  %333 = vrot.lane.b32.xlu0 %v332, 96
  %v334 = vpop.permute.xlu0 %333
  %vm335 = vcmask 64512
  %v337 = vsel %vm335, %v332, 0
  %v340 = vsel %vm335, %v334, 0
  %342 = vmatpush.bf16.xpose.msra.mxu0 0
  %343 = vmatpush.bf16.xpose.msra.mxu0 0
  %344 = vmatpush.bf16.xpose.msra.mxu0 0
  %345 = vmatpush.bf16.xpose.msra.mxu0 0
  %346 = vmatpush.bf16.xpose.msra.mxu0 0
  %347 = vmatpush.bf16.xpose.msra.mxu0 0
  %348 = vmatpush.bf16.xpose.msra.mxu0 0
  %349 = vmatpush.bf16.xpose.msra.mxu0 %v340
  %350 = vmatmul.bf16.gmra.mxu0 %v337
  %v351 = vpop.f32.mrf.mxu0
  %v352 = vadd.f32 %v326, %v351
  %v353 = vpop.f32.mrf.mxu0
  %v354 = vadd.f32 %v327, %v353
  %355 = vdwg.mxu0
  %v358 = vunpack.c.l.b16 %v296
  %v359 = vunpack.c.l.b16 %v297
  %v360 = vpack.c.b16 %v359, %v358
  %361 = vrot.lane.b32.xlu0 %v360, 96
  %v362 = vpop.permute.xlu0 %361
  %v364 = vsel %vm335, %v360, 0
  %v367 = vsel %vm335, %v362, 0
  %369 = vmatpush.bf16.xpose.msra.mxu0 0
  %370 = vmatpush.bf16.xpose.msra.mxu0 0
  %371 = vmatpush.bf16.xpose.msra.mxu0 0
  %372 = vmatpush.bf16.xpose.msra.mxu0 0
  %373 = vmatpush.bf16.xpose.msra.mxu0 0
  %374 = vmatpush.bf16.xpose.msra.mxu0 0
  %375 = vmatpush.bf16.xpose.msra.mxu0 0
  %376 = vmatpush.bf16.xpose.msra.mxu0 %v367
  %377 = vmatmul.bf16.gmra.mxu0 %v364
  %v378 = vpop.f32.mrf.mxu0
  %v379 = vadd.f32 %v326, %v378
  %v380 = vpop.f32.mrf.mxu0
  %v381 = vadd.f32 %v327, %v380
  %382 = vdwg.mxu0
  %v385 = vunpack.c.l.b16 %v298
  %v386 = vunpack.c.l.b16 %v299
  %v387 = vpack.c.b16 %v386, %v385
  %388 = vrot.lane.b32.xlu0 %v387, 96
  %v389 = vpop.permute.xlu0 %388
  %v391 = vsel %vm335, %v387, 0
  %v394 = vsel %vm335, %v389, 0
  %396 = vmatpush.bf16.xpose.msra.mxu0 0
  %397 = vmatpush.bf16.xpose.msra.mxu0 0
  %398 = vmatpush.bf16.xpose.msra.mxu0 0
  %399 = vmatpush.bf16.xpose.msra.mxu0 0
  %400 = vmatpush.bf16.xpose.msra.mxu0 0
  %401 = vmatpush.bf16.xpose.msra.mxu0 0
  %402 = vmatpush.bf16.xpose.msra.mxu0 0
  %403 = vmatpush.bf16.xpose.msra.mxu0 %v394
  %404 = vmatmul.bf16.gmra.mxu0 %v391
  %v405 = vpop.f32.mrf.mxu0
  %v406 = vadd.f32 %v326, %v405
  %v407 = vpop.f32.mrf.mxu0
  %v408 = vadd.f32 %v327, %v407
  %409 = vdwg.mxu0
  %v412 = vunpack.c.l.b16 %v300
  %v413 = vunpack.c.l.b16 %v301
  %v414 = vpack.c.b16 %v413, %v412
  %415 = vrot.lane.b32.xlu0 %v414, 96
  %v416 = vpop.permute.xlu0 %415
  %v418 = vsel %vm335, %v414, 0
  %v421 = vsel %vm335, %v416, 0
  %423 = vmatpush.bf16.xpose.msra.mxu0 0
  %424 = vmatpush.bf16.xpose.msra.mxu0 0
  %425 = vmatpush.bf16.xpose.msra.mxu0 0
  %426 = vmatpush.bf16.xpose.msra.mxu0 0
  %427 = vmatpush.bf16.xpose.msra.mxu0 0
  %428 = vmatpush.bf16.xpose.msra.mxu0 0
  %429 = vmatpush.bf16.xpose.msra.mxu0 0
  %430 = vmatpush.bf16.xpose.msra.mxu0 %v421
  %431 = vmatmul.bf16.gmra.mxu0 %v418
  %v432 = vpop.f32.mrf.mxu0
  %v433 = vadd.f32 %v326, %v432
  %v434 = vpop.f32.mrf.mxu0
  %v435 = vadd.f32 %v327, %v434
  %436 = vdwg.mxu0
  %v439 = vunpack.c.l.b16 %v302
  %v440 = vunpack.c.l.b16 %v303
  %v441 = vpack.c.b16 %v440, %v439
  %442 = vrot.lane.b32.xlu0 %v441, 96
  %v443 = vpop.permute.xlu0 %442
  %v445 = vsel %vm335, %v441, 0
  %v448 = vsel %vm335, %v443, 0
  %450 = vmatpush.bf16.xpose.msra.mxu0 0
  %451 = vmatpush.bf16.xpose.msra.mxu0 0
  %452 = vmatpush.bf16.xpose.msra.mxu0 0
  %453 = vmatpush.bf16.xpose.msra.mxu0 0
  %454 = vmatpush.bf16.xpose.msra.mxu0 0
  %455 = vmatpush.bf16.xpose.msra.mxu0 0
  %456 = vmatpush.bf16.xpose.msra.mxu0 0
  %457 = vmatpush.bf16.xpose.msra.mxu0 %v448
  %458 = vmatmul.bf16.gmra.mxu0 %v445
  %v459 = vpop.f32.mrf.mxu0
  %v460 = vadd.f32 %v326, %v459
  %v461 = vpop.f32.mrf.mxu0
  %v462 = vadd.f32 %v327, %v461
  %463 = vdwg.mxu0
  %v466 = vunpack.c.l.b16 %v304
  %v467 = vunpack.c.l.b16 %v305
  %v468 = vpack.c.b16 %v467, %v466
  %469 = vrot.lane.b32.xlu0 %v468, 96
  %v470 = vpop.permute.xlu0 %469
  %v472 = vsel %vm335, %v468, 0
  %v475 = vsel %vm335, %v470, 0
  %477 = vmatpush.bf16.xpose.msra.mxu0 0
  %478 = vmatpush.bf16.xpose.msra.mxu0 0
  %479 = vmatpush.bf16.xpose.msra.mxu0 0
  %480 = vmatpush.bf16.xpose.msra.mxu0 0
  %481 = vmatpush.bf16.xpose.msra.mxu0 0
  %482 = vmatpush.bf16.xpose.msra.mxu0 0
  %483 = vmatpush.bf16.xpose.msra.mxu0 0
  %484 = vmatpush.bf16.xpose.msra.mxu0 %v475
  %485 = vmatmul.bf16.gmra.mxu0 %v472
  %v486 = vpop.f32.mrf.mxu0
  %v487 = vadd.f32 %v326, %v486
  %v488 = vpop.f32.mrf.mxu0
  %v489 = vadd.f32 %v327, %v488
  %490 = vdwg.mxu0
  %v493 = vunpack.c.l.b16 %v306
  %v494 = vunpack.c.l.b16 %v307
  %v495 = vpack.c.b16 %v494, %v493
  %496 = vrot.lane.b32.xlu0 %v495, 96
  %v497 = vpop.permute.xlu0 %496
  %v499 = vsel %vm335, %v495, 0
  %v502 = vsel %vm335, %v497, 0
  %504 = vmatpush.bf16.xpose.msra.mxu0 0
  %505 = vmatpush.bf16.xpose.msra.mxu0 0
  %506 = vmatpush.bf16.xpose.msra.mxu0 0
  %507 = vmatpush.bf16.xpose.msra.mxu0 0
  %508 = vmatpush.bf16.xpose.msra.mxu0 0
  %509 = vmatpush.bf16.xpose.msra.mxu0 0
  %510 = vmatpush.bf16.xpose.msra.mxu0 0
  %511 = vmatpush.bf16.xpose.msra.mxu0 %v502
  %512 = vmatmul.bf16.gmra.mxu0 %v499
  %v513 = vpop.f32.mrf.mxu0
  %v514 = vadd.f32 %v326, %v513
  %v515 = vpop.f32.mrf.mxu0
  %v516 = vadd.f32 %v327, %v515
  %517 = vdwg.mxu0
  %v520 = vunpack.c.l.b16 %v308
  %v521 = vunpack.c.l.b16 %v309
  %v522 = vpack.c.b16 %v521, %v520
  %523 = vrot.lane.b32.xlu0 %v522, 96
  %v524 = vpop.permute.xlu0 %523
  %v526 = vsel %vm335, %v522, 0
  %v529 = vsel %vm335, %v524, 0
  %531 = vmatpush.bf16.xpose.msra.mxu0 0
  %532 = vmatpush.bf16.xpose.msra.mxu0 0
  %533 = vmatpush.bf16.xpose.msra.mxu0 0
  %534 = vmatpush.bf16.xpose.msra.mxu0 0
  %535 = vmatpush.bf16.xpose.msra.mxu0 0
  %536 = vmatpush.bf16.xpose.msra.mxu0 0
  %537 = vmatpush.bf16.xpose.msra.mxu0 0
  %538 = vmatpush.bf16.xpose.msra.mxu0 %v529
  %539 = vmatmul.bf16.gmra.mxu0 %v526
  %v540 = vpop.f32.mrf.mxu0
  %v541 = vadd.f32 %v326, %v540
  %v542 = vpop.f32.mrf.mxu0
  %v543 = vadd.f32 %v327, %v542
  %544 = vdwg.mxu0
  %v547 = vunpack.c.l.b16 %v310
  %v548 = vunpack.c.l.b16 %v311
  %v549 = vpack.c.b16 %v548, %v547
  %550 = vrot.lane.b32.xlu0 %v549, 96
  %v551 = vpop.permute.xlu0 %550
  %v553 = vsel %vm335, %v549, 0
  %v556 = vsel %vm335, %v551, 0
  %558 = vmatpush.bf16.xpose.msra.mxu0 0
  %559 = vmatpush.bf16.xpose.msra.mxu0 0
  %560 = vmatpush.bf16.xpose.msra.mxu0 0
  %561 = vmatpush.bf16.xpose.msra.mxu0 0
  %562 = vmatpush.bf16.xpose.msra.mxu0 0
  %563 = vmatpush.bf16.xpose.msra.mxu0 0
  %564 = vmatpush.bf16.xpose.msra.mxu0 0
  %565 = vmatpush.bf16.xpose.msra.mxu0 %v556
  %566 = vmatmul.bf16.gmra.mxu0 %v553
  %v567 = vpop.f32.mrf.mxu0
  %v568 = vadd.f32 %v326, %v567
  %v569 = vpop.f32.mrf.mxu0
  %v570 = vadd.f32 %v327, %v569
  %571 = vdwg.mxu0
  %v574 = vunpack.c.l.b16 %v312
  %v575 = vunpack.c.l.b16 %v313
  %v576 = vpack.c.b16 %v575, %v574
  %577 = vrot.lane.b32.xlu0 %v576, 96
  %v578 = vpop.permute.xlu0 %577
  %v580 = vsel %vm335, %v576, 0
  %v583 = vsel %vm335, %v578, 0
  %585 = vmatpush.bf16.xpose.msra.mxu0 0
  %586 = vmatpush.bf16.xpose.msra.mxu0 0
  %587 = vmatpush.bf16.xpose.msra.mxu0 0
  %588 = vmatpush.bf16.xpose.msra.mxu0 0
  %589 = vmatpush.bf16.xpose.msra.mxu0 0
  %590 = vmatpush.bf16.xpose.msra.mxu0 0
  %591 = vmatpush.bf16.xpose.msra.mxu0 0
  %592 = vmatpush.bf16.xpose.msra.mxu0 %v583
  %593 = vmatmul.bf16.gmra.mxu0 %v580
  %v594 = vpop.f32.mrf.mxu0
  %v595 = vadd.f32 %v326, %v594
  %v596 = vpop.f32.mrf.mxu0
  %v597 = vadd.f32 %v327, %v596
  %598 = vdwg.mxu0
  %v601 = vunpack.c.l.b16 %v314
  %v602 = vunpack.c.l.b16 %v315
  %v603 = vpack.c.b16 %v602, %v601
  %604 = vrot.lane.b32.xlu0 %v603, 96
  %v605 = vpop.permute.xlu0 %604
  %v607 = vsel %vm335, %v603, 0
  %v610 = vsel %vm335, %v605, 0
  %612 = vmatpush.bf16.xpose.msra.mxu0 0
  %613 = vmatpush.bf16.xpose.msra.mxu0 0
  %614 = vmatpush.bf16.xpose.msra.mxu0 0
  %615 = vmatpush.bf16.xpose.msra.mxu0 0
  %616 = vmatpush.bf16.xpose.msra.mxu0 0
  %617 = vmatpush.bf16.xpose.msra.mxu0 0
  %618 = vmatpush.bf16.xpose.msra.mxu0 0
  %619 = vmatpush.bf16.xpose.msra.mxu0 %v610
  %620 = vmatmul.bf16.gmra.mxu0 %v607
  %v621 = vpop.f32.mrf.mxu0
  %v622 = vadd.f32 %v326, %v621
  %v623 = vpop.f32.mrf.mxu0
  %v624 = vadd.f32 %v327, %v623
  %625 = vdwg.mxu0
  %v628 = vunpack.c.l.b16 %v316
  %v629 = vunpack.c.l.b16 %v317
  %v630 = vpack.c.b16 %v629, %v628
  %631 = vrot.lane.b32.xlu0 %v630, 96
  %v632 = vpop.permute.xlu0 %631
  %v634 = vsel %vm335, %v630, 0
  %v637 = vsel %vm335, %v632, 0
  %639 = vmatpush.bf16.xpose.msra.mxu0 0
  %640 = vmatpush.bf16.xpose.msra.mxu0 0
  %641 = vmatpush.bf16.xpose.msra.mxu0 0
  %642 = vmatpush.bf16.xpose.msra.mxu0 0
  %643 = vmatpush.bf16.xpose.msra.mxu0 0
  %644 = vmatpush.bf16.xpose.msra.mxu0 0
  %645 = vmatpush.bf16.xpose.msra.mxu0 0
  %646 = vmatpush.bf16.xpose.msra.mxu0 %v637
  %647 = vmatmul.bf16.gmra.mxu0 %v634
  %v648 = vpop.f32.mrf.mxu0
  %v649 = vadd.f32 %v326, %v648
  %v650 = vpop.f32.mrf.mxu0
  %v651 = vadd.f32 %v327, %v650
  %652 = vdwg.mxu0
  %v655 = vunpack.c.l.b16 %v318
  %v656 = vunpack.c.l.b16 %v319
  %v657 = vpack.c.b16 %v656, %v655
  %658 = vrot.lane.b32.xlu0 %v657, 96
  %v659 = vpop.permute.xlu0 %658
  %v661 = vsel %vm335, %v657, 0
  %v664 = vsel %vm335, %v659, 0
  %666 = vmatpush.bf16.xpose.msra.mxu0 0
  %667 = vmatpush.bf16.xpose.msra.mxu0 0
  %668 = vmatpush.bf16.xpose.msra.mxu0 0
  %669 = vmatpush.bf16.xpose.msra.mxu0 0
  %670 = vmatpush.bf16.xpose.msra.mxu0 0
  %671 = vmatpush.bf16.xpose.msra.mxu0 0
  %672 = vmatpush.bf16.xpose.msra.mxu0 0
  %673 = vmatpush.bf16.xpose.msra.mxu0 %v664
  %674 = vmatmul.bf16.gmra.mxu0 %v661
  %v675 = vpop.f32.mrf.mxu0
  %v676 = vadd.f32 %v326, %v675
  %v677 = vpop.f32.mrf.mxu0
  %v678 = vadd.f32 %v327, %v677
  %679 = vdwg.mxu0
  %v682 = vunpack.c.l.b16 %v320
  %v683 = vunpack.c.l.b16 %v321
  %v684 = vpack.c.b16 %v683, %v682
  %685 = vrot.lane.b32.xlu0 %v684, 96
  %v686 = vpop.permute.xlu0 %685
  %v688 = vsel %vm335, %v684, 0
  %v691 = vsel %vm335, %v686, 0
  %693 = vmatpush.bf16.xpose.msra.mxu0 0
  %694 = vmatpush.bf16.xpose.msra.mxu0 0
  %695 = vmatpush.bf16.xpose.msra.mxu0 0
  %696 = vmatpush.bf16.xpose.msra.mxu0 0
  %697 = vmatpush.bf16.xpose.msra.mxu0 0
  %698 = vmatpush.bf16.xpose.msra.mxu0 0
  %699 = vmatpush.bf16.xpose.msra.mxu0 0
  %700 = vmatpush.bf16.xpose.msra.mxu0 %v691
  %701 = vmatmul.bf16.gmra.mxu0 %v688
  %v702 = vpop.f32.mrf.mxu0
  %v703 = vadd.f32 %v326, %v702
  %v704 = vpop.f32.mrf.mxu0
  %v705 = vadd.f32 %v327, %v704
  %706 = vdwg.mxu0
  %v709 = vunpack.c.l.b16 %v322
  %v710 = vunpack.c.l.b16 %v323
  %v711 = vpack.c.b16 %v710, %v709
  %712 = vrot.lane.b32.xlu0 %v711, 96
  %v713 = vpop.permute.xlu0 %712
  %v715 = vsel %vm335, %v711, 0
  %v718 = vsel %vm335, %v713, 0
  %720 = vmatpush.bf16.xpose.msra.mxu0 0
  %721 = vmatpush.bf16.xpose.msra.mxu0 0
  %722 = vmatpush.bf16.xpose.msra.mxu0 0
  %723 = vmatpush.bf16.xpose.msra.mxu0 0
  %724 = vmatpush.bf16.xpose.msra.mxu0 0
  %725 = vmatpush.bf16.xpose.msra.mxu0 0
  %726 = vmatpush.bf16.xpose.msra.mxu0 0
  %727 = vmatpush.bf16.xpose.msra.mxu0 %v718
  %728 = vmatmul.bf16.gmra.mxu0 %v715
  %v729 = vpop.f32.mrf.mxu0
  %v730 = vadd.f32 %v326, %v729
  %v731 = vpop.f32.mrf.mxu0
  %v732 = vadd.f32 %v327, %v731
  %733 = vdwg.mxu0
  %v736 = vunpack.c.l.b16 %v324
  %v737 = vunpack.c.l.b16 %v325
  %v738 = vpack.c.b16 %v737, %v736
  %739 = vrot.lane.b32.xlu0 %v738, 96
  %v740 = vpop.permute.xlu0 %739
  %v742 = vsel %vm335, %v738, 0
  %v745 = vsel %vm335, %v740, 0
  %747 = vmatpush.bf16.xpose.msra.mxu0 0
  %748 = vmatpush.bf16.xpose.msra.mxu0 0
  %749 = vmatpush.bf16.xpose.msra.mxu0 0
  %750 = vmatpush.bf16.xpose.msra.mxu0 0
  %751 = vmatpush.bf16.xpose.msra.mxu0 0
  %752 = vmatpush.bf16.xpose.msra.mxu0 0
  %753 = vmatpush.bf16.xpose.msra.mxu0 0
  %754 = vmatpush.bf16.xpose.msra.mxu0 %v745
  %755 = vmatmul.bf16.gmra.mxu0 %v742
  %v756 = vpop.f32.mrf.mxu0
  %v757 = vadd.f32 %v326, %v756
  %v758 = vpop.f32.mrf.mxu0
  %v759 = vadd.f32 %v327, %v758
  %760 = vdwg.mxu0
  %vm761 = vcmask 130048
  %v762 = vsel %vm761, %v352, -inf
  %763 = vmax.xlane.f32.xlu0 %v762
  %v764 = vpop.xlane.xlu0 %763
  %v765 = vsel %vm761, %v354, -inf
  %766 = vmax.xlane.f32.xlu0 %v765
  %v767 = vpop.xlane.xlu0 %766
  %v768 = vsel %vm761, %v379, -inf
  %769 = vmax.xlane.f32.xlu0 %v768
  %v770 = vpop.xlane.xlu0 %769
  %v771 = vsel %vm761, %v381, -inf
  %772 = vmax.xlane.f32.xlu0 %v771
  %v773 = vpop.xlane.xlu0 %772
  %v774 = vsel %vm761, %v406, -inf
  %775 = vmax.xlane.f32.xlu0 %v774
  %v776 = vpop.xlane.xlu0 %775
  %v777 = vsel %vm761, %v408, -inf
  %778 = vmax.xlane.f32.xlu0 %v777
  %v779 = vpop.xlane.xlu0 %778
  %v780 = vsel %vm761, %v433, -inf
  %781 = vmax.xlane.f32.xlu0 %v780
  %v782 = vpop.xlane.xlu0 %781
  %v783 = vsel %vm761, %v435, -inf
  %784 = vmax.xlane.f32.xlu0 %v783
  %v785 = vpop.xlane.xlu0 %784
  %v786 = vsel %vm761, %v460, -inf
  %787 = vmax.xlane.f32.xlu0 %v786
  %v788 = vpop.xlane.xlu0 %787
  %v789 = vsel %vm761, %v462, -inf
  %790 = vmax.xlane.f32.xlu0 %v789
  %v791 = vpop.xlane.xlu0 %790
  %v792 = vsel %vm761, %v487, -inf
  %793 = vmax.xlane.f32.xlu0 %v792
  %v794 = vpop.xlane.xlu0 %793
  %v795 = vsel %vm761, %v489, -inf
  %796 = vmax.xlane.f32.xlu0 %v795
  %v797 = vpop.xlane.xlu0 %796
  %v798 = vsel %vm761, %v514, -inf
  %799 = vmax.xlane.f32.xlu0 %v798
  %v800 = vpop.xlane.xlu0 %799
  %v801 = vsel %vm761, %v516, -inf
  %802 = vmax.xlane.f32.xlu0 %v801
  %v803 = vpop.xlane.xlu0 %802
  %v804 = vsel %vm761, %v541, -inf
  %805 = vmax.xlane.f32.xlu0 %v804
  %v806 = vpop.xlane.xlu0 %805
  %v807 = vsel %vm761, %v543, -inf
  %808 = vmax.xlane.f32.xlu0 %v807
  %v809 = vpop.xlane.xlu0 %808
  %v810 = vsel %vm761, %v568, -inf
  %811 = vmax.xlane.f32.xlu0 %v810
  %v812 = vpop.xlane.xlu0 %811
  %v813 = vsel %vm761, %v570, -inf
  %814 = vmax.xlane.f32.xlu0 %v813
  %v815 = vpop.xlane.xlu0 %814
  %v816 = vsel %vm761, %v595, -inf
  %817 = vmax.xlane.f32.xlu0 %v816
  %v818 = vpop.xlane.xlu0 %817
  %v819 = vsel %vm761, %v597, -inf
  %820 = vmax.xlane.f32.xlu0 %v819
  %v821 = vpop.xlane.xlu0 %820
  %v822 = vsel %vm761, %v622, -inf
  %823 = vmax.xlane.f32.xlu0 %v822
  %v824 = vpop.xlane.xlu0 %823
  %v825 = vsel %vm761, %v624, -inf
  %826 = vmax.xlane.f32.xlu0 %v825
  %v827 = vpop.xlane.xlu0 %826
  %v828 = vsel %vm761, %v649, -inf
  %829 = vmax.xlane.f32.xlu0 %v828
  %v830 = vpop.xlane.xlu0 %829
  %v831 = vsel %vm761, %v651, -inf
  %832 = vmax.xlane.f32.xlu0 %v831
  %v833 = vpop.xlane.xlu0 %832
  %v834 = vsel %vm761, %v676, -inf
  %835 = vmax.xlane.f32.xlu0 %v834
  %v836 = vpop.xlane.xlu0 %835
  %v837 = vsel %vm761, %v678, -inf
  %838 = vmax.xlane.f32.xlu0 %v837
  %v839 = vpop.xlane.xlu0 %838
  %v840 = vsel %vm761, %v703, -inf
  %841 = vmax.xlane.f32.xlu0 %v840
  %v842 = vpop.xlane.xlu0 %841
  %v843 = vsel %vm761, %v705, -inf
  %844 = vmax.xlane.f32.xlu0 %v843
  %v845 = vpop.xlane.xlu0 %844
  %v846 = vsel %vm761, %v730, -inf
  %847 = vmax.xlane.f32.xlu0 %v846
  %v848 = vpop.xlane.xlu0 %847
  %v849 = vsel %vm761, %v732, -inf
  %850 = vmax.xlane.f32.xlu0 %v849
  %v851 = vpop.xlane.xlu0 %850
  %v852 = vsel %vm761, %v757, -inf
  %853 = vmax.xlane.f32.xlu0 %v852
  %v854 = vpop.xlane.xlu0 %853
  %v855 = vsel %vm761, %v759, -inf
  %856 = vmax.xlane.f32.xlu0 %v855
  %v857 = vpop.xlane.xlu0 %856
  %v858 = vsub.f32 %v352, %v764
  %v859 = vsub.f32 %v354, %v767
  %v860 = vsub.f32 %v379, %v770
  %v861 = vsub.f32 %v381, %v773
  %v862 = vsub.f32 %v406, %v776
  %v863 = vsub.f32 %v408, %v779
  %v864 = vsub.f32 %v433, %v782
  %v865 = vsub.f32 %v435, %v785
  %v866 = vsub.f32 %v460, %v788
  %v867 = vsub.f32 %v462, %v791
  %v868 = vsub.f32 %v487, %v794
  %v869 = vsub.f32 %v489, %v797
  %v870 = vsub.f32 %v514, %v800
  %v871 = vsub.f32 %v516, %v803
  %v872 = vsub.f32 %v541, %v806
  %v873 = vsub.f32 %v543, %v809
  %v874 = vsub.f32 %v568, %v812
  %v875 = vsub.f32 %v570, %v815
  %v876 = vsub.f32 %v595, %v818
  %v877 = vsub.f32 %v597, %v821
  %v878 = vsub.f32 %v622, %v824
  %v879 = vsub.f32 %v624, %v827
  %v880 = vsub.f32 %v649, %v830
  %v881 = vsub.f32 %v651, %v833
  %v882 = vsub.f32 %v676, %v836
  %v883 = vsub.f32 %v678, %v839
  %v884 = vsub.f32 %v703, %v842
  %v885 = vsub.f32 %v705, %v845
  %v886 = vsub.f32 %v730, %v848
  %v887 = vsub.f32 %v732, %v851
  %v888 = vsub.f32 %v757, %v854
  %v889 = vsub.f32 %v759, %v857
  %v890 = vmul.f32 %v858, 1.442695
  %v891 = vpow.pop %v890
  %v892 = vmul.f32 %v859, 1.442695
  %v893 = vpow.pop %v892
  %v894 = vmul.f32 %v860, 1.442695
  %v895 = vpow.pop %v894
  %v896 = vmul.f32 %v861, 1.442695
  %v897 = vpow.pop %v896
  %v898 = vmul.f32 %v862, 1.442695
  %v899 = vpow.pop %v898
  %v900 = vmul.f32 %v863, 1.442695
  %v901 = vpow.pop %v900
  %v902 = vmul.f32 %v864, 1.442695
  %v903 = vpow.pop %v902
  %v904 = vmul.f32 %v865, 1.442695
  %v905 = vpow.pop %v904
  %v906 = vmul.f32 %v866, 1.442695
  %v907 = vpow.pop %v906
  %v908 = vmul.f32 %v867, 1.442695
  %v909 = vpow.pop %v908
  %v910 = vmul.f32 %v868, 1.442695
  %v911 = vpow.pop %v910
  %v912 = vmul.f32 %v869, 1.442695
  %v913 = vpow.pop %v912
  %v914 = vmul.f32 %v870, 1.442695
  %v915 = vpow.pop %v914
  %v916 = vmul.f32 %v871, 1.442695
  %v917 = vpow.pop %v916
  %v918 = vmul.f32 %v872, 1.442695
  %v919 = vpow.pop %v918
  %v920 = vmul.f32 %v873, 1.442695
  %v921 = vpow.pop %v920
  %v922 = vmul.f32 %v874, 1.442695
  %v923 = vpow.pop %v922
  %v924 = vmul.f32 %v875, 1.442695
  %v925 = vpow.pop %v924
  %v926 = vmul.f32 %v876, 1.442695
  %v927 = vpow.pop %v926
  %v928 = vmul.f32 %v877, 1.442695
  %v929 = vpow.pop %v928
  %v930 = vmul.f32 %v878, 1.442695
  %v931 = vpow.pop %v930
  %v932 = vmul.f32 %v879, 1.442695
  %v933 = vpow.pop %v932
  %v934 = vmul.f32 %v880, 1.442695
  %v935 = vpow.pop %v934
  %v936 = vmul.f32 %v881, 1.442695
  %v937 = vpow.pop %v936
  %v938 = vmul.f32 %v882, 1.442695
  %v939 = vpow.pop %v938
  %v940 = vmul.f32 %v883, 1.442695
  %v941 = vpow.pop %v940
  %v942 = vmul.f32 %v884, 1.442695
  %v943 = vpow.pop %v942
  %v944 = vmul.f32 %v885, 1.442695
  %v945 = vpow.pop %v944
  %v946 = vmul.f32 %v886, 1.442695
  %v947 = vpow.pop %v946
  %v948 = vmul.f32 %v887, 1.442695
  %v949 = vpow.pop %v948
  %v950 = vmul.f32 %v888, 1.442695
  %v951 = vpow.pop %v950
  %v952 = vmul.f32 %v889, 1.442695
  %v953 = vpow.pop %v952
  %v954 = vsel %vm761, %v891, 0.0
  %955 = vadd.xlane.f32.xlu0 %v954
  %v956 = vpop.xlane.xlu0 %955
  %v957 = vsel %vm761, %v893, 0.0
  %958 = vadd.xlane.f32.xlu0 %v957
  %v959 = vpop.xlane.xlu0 %958
  %v960 = vsel %vm761, %v895, 0.0
  %961 = vadd.xlane.f32.xlu0 %v960
  %v962 = vpop.xlane.xlu0 %961
  %v963 = vsel %vm761, %v897, 0.0
  %964 = vadd.xlane.f32.xlu0 %v963
  %v965 = vpop.xlane.xlu0 %964
  %v966 = vsel %vm761, %v899, 0.0
  %967 = vadd.xlane.f32.xlu0 %v966
  %v968 = vpop.xlane.xlu0 %967
  %v969 = vsel %vm761, %v901, 0.0
  %970 = vadd.xlane.f32.xlu0 %v969
  %v971 = vpop.xlane.xlu0 %970
  %v972 = vsel %vm761, %v903, 0.0
  %973 = vadd.xlane.f32.xlu0 %v972
  %v974 = vpop.xlane.xlu0 %973
  %v975 = vsel %vm761, %v905, 0.0
  %976 = vadd.xlane.f32.xlu0 %v975
  %v977 = vpop.xlane.xlu0 %976
  %v978 = vsel %vm761, %v907, 0.0
  %979 = vadd.xlane.f32.xlu0 %v978
  %v980 = vpop.xlane.xlu0 %979
  %v981 = vsel %vm761, %v909, 0.0
  %982 = vadd.xlane.f32.xlu0 %v981
  %v983 = vpop.xlane.xlu0 %982
  %v984 = vsel %vm761, %v911, 0.0
  %985 = vadd.xlane.f32.xlu0 %v984
  %v986 = vpop.xlane.xlu0 %985
  %v987 = vsel %vm761, %v913, 0.0
  %988 = vadd.xlane.f32.xlu0 %v987
  %v989 = vpop.xlane.xlu0 %988
  %v990 = vsel %vm761, %v915, 0.0
  %991 = vadd.xlane.f32.xlu0 %v990
  %v992 = vpop.xlane.xlu0 %991
  %v993 = vsel %vm761, %v917, 0.0
  %994 = vadd.xlane.f32.xlu0 %v993
  %v995 = vpop.xlane.xlu0 %994
  %v996 = vsel %vm761, %v919, 0.0
  %997 = vadd.xlane.f32.xlu0 %v996
  %v998 = vpop.xlane.xlu0 %997
  %v999 = vsel %vm761, %v921, 0.0
  %1000 = vadd.xlane.f32.xlu0 %v999
  %v1001 = vpop.xlane.xlu0 %1000
  %v1002 = vsel %vm761, %v923, 0.0
  %1003 = vadd.xlane.f32.xlu0 %v1002
  %v1004 = vpop.xlane.xlu0 %1003
  %v1005 = vsel %vm761, %v925, 0.0
  %1006 = vadd.xlane.f32.xlu0 %v1005
  %v1007 = vpop.xlane.xlu0 %1006
  %v1008 = vsel %vm761, %v927, 0.0
  %1009 = vadd.xlane.f32.xlu0 %v1008
  %v1010 = vpop.xlane.xlu0 %1009
  %v1011 = vsel %vm761, %v929, 0.0
  %1012 = vadd.xlane.f32.xlu0 %v1011
  %v1013 = vpop.xlane.xlu0 %1012
  %v1014 = vsel %vm761, %v931, 0.0
  %1015 = vadd.xlane.f32.xlu0 %v1014
  %v1016 = vpop.xlane.xlu0 %1015
  %v1017 = vsel %vm761, %v933, 0.0
  %1018 = vadd.xlane.f32.xlu0 %v1017
  %v1019 = vpop.xlane.xlu0 %1018
  %v1020 = vsel %vm761, %v935, 0.0
  %1021 = vadd.xlane.f32.xlu0 %v1020
  %v1022 = vpop.xlane.xlu0 %1021
  %v1023 = vsel %vm761, %v937, 0.0
  %1024 = vadd.xlane.f32.xlu0 %v1023
  %v1025 = vpop.xlane.xlu0 %1024
  %v1026 = vsel %vm761, %v939, 0.0
  %1027 = vadd.xlane.f32.xlu0 %v1026
  %v1028 = vpop.xlane.xlu0 %1027
  %v1029 = vsel %vm761, %v941, 0.0
  %1030 = vadd.xlane.f32.xlu0 %v1029
  %v1031 = vpop.xlane.xlu0 %1030
  %v1032 = vsel %vm761, %v943, 0.0
  %1033 = vadd.xlane.f32.xlu0 %v1032
  %v1034 = vpop.xlane.xlu0 %1033
  %v1035 = vsel %vm761, %v945, 0.0
  %1036 = vadd.xlane.f32.xlu0 %v1035
  %v1037 = vpop.xlane.xlu0 %1036
  %v1038 = vsel %vm761, %v947, 0.0
  %1039 = vadd.xlane.f32.xlu0 %v1038
  %v1040 = vpop.xlane.xlu0 %1039
  %v1041 = vsel %vm761, %v949, 0.0
  %1042 = vadd.xlane.f32.xlu0 %v1041
  %v1043 = vpop.xlane.xlu0 %1042
  %v1044 = vsel %vm761, %v951, 0.0
  %1045 = vadd.xlane.f32.xlu0 %v1044
  %v1046 = vpop.xlane.xlu0 %1045
  %v1047 = vsel %vm761, %v953, 0.0
  %1048 = vadd.xlane.f32.xlu0 %v1047
  %v1049 = vpop.xlane.xlu0 %1048
  %v1050 = vpack.c.bf16 %v891, %v891
  %v1051 = vpack.c.bf16 %v893, %v893
  %v1052 = vpack.c.bf16 %v895, %v895
  %v1053 = vpack.c.bf16 %v897, %v897
  %v1054 = vpack.c.bf16 %v899, %v899
  %v1055 = vpack.c.bf16 %v901, %v901
  %v1056 = vpack.c.bf16 %v903, %v903
  %v1057 = vpack.c.bf16 %v905, %v905
  %v1058 = vpack.c.bf16 %v907, %v907
  %v1059 = vpack.c.bf16 %v909, %v909
  %v1060 = vpack.c.bf16 %v911, %v911
  %v1061 = vpack.c.bf16 %v913, %v913
  %v1062 = vpack.c.bf16 %v915, %v915
  %v1063 = vpack.c.bf16 %v917, %v917
  %v1064 = vpack.c.bf16 %v919, %v919
  %v1065 = vpack.c.bf16 %v921, %v921
  %v1066 = vpack.c.bf16 %v923, %v923
  %v1067 = vpack.c.bf16 %v925, %v925
  %v1068 = vpack.c.bf16 %v927, %v927
  %v1069 = vpack.c.bf16 %v929, %v929
  %v1070 = vpack.c.bf16 %v931, %v931
  %v1071 = vpack.c.bf16 %v933, %v933
  %v1072 = vpack.c.bf16 %v935, %v935
  %v1073 = vpack.c.bf16 %v937, %v937
  %v1074 = vpack.c.bf16 %v939, %v939
  %v1075 = vpack.c.bf16 %v941, %v941
  %v1076 = vpack.c.bf16 %v943, %v943
  %v1077 = vpack.c.bf16 %v945, %v945
  %v1078 = vpack.c.bf16 %v947, %v947
  %v1079 = vpack.c.bf16 %v949, %v949
  %v1080 = vpack.c.bf16 %v951, %v951
  %v1081 = vpack.c.bf16 %v953, %v953
  %v1084 = vunpack.c.l.b16 %v1050
  %v1085 = vunpack.c.l.b16 %v1051
  %v1086 = vpack.c.b16 %v1085, %v1084
  %1087 = vrot.lane.b32.xlu0 %v332, 64
  %v1088 = vpop.permute.xlu0 %1087
  %v1091 = vsel %vm761, %v1086, 0
  %1093 = vmatpush.bf16.msra.mxu0 0
  %1094 = vmatpush.bf16.msra.mxu0 0
  %1095 = vmatpush.bf16.msra.mxu0 0
  %1096 = vmatpush.bf16.msra.mxu0 0
  %1097 = vmatpush.bf16.msra.mxu0 0
  %1098 = vmatpush.bf16.msra.mxu0 0
  %1099 = vmatpush.bf16.msra.mxu0 0
  %1100 = vmatpush.bf16.msra.mxu0 %v1088
  %1101 = vmatmul.bf16.gmra.mxu0 %v1091
  %v1102 = vpop.f32.mrf.mxu0
  %v1103 = vadd.f32 0.0, %v1102
  %v1104 = vpop.f32.mrf.mxu0
  %v1105 = vadd.f32 0.0, %v1104
  %1106 = vdwg.mxu0
  %v1109 = vunpack.c.l.b16 %v1052
  %v1110 = vunpack.c.l.b16 %v1053
  %v1111 = vpack.c.b16 %v1110, %v1109
  %1112 = vrot.lane.b32.xlu0 %v360, 64
  %v1113 = vpop.permute.xlu0 %1112
  %v1116 = vsel %vm761, %v1111, 0
  %1118 = vmatpush.bf16.msra.mxu0 0
  %1119 = vmatpush.bf16.msra.mxu0 0
  %1120 = vmatpush.bf16.msra.mxu0 0
  %1121 = vmatpush.bf16.msra.mxu0 0
  %1122 = vmatpush.bf16.msra.mxu0 0
  %1123 = vmatpush.bf16.msra.mxu0 0
  %1124 = vmatpush.bf16.msra.mxu0 0
  %1125 = vmatpush.bf16.msra.mxu0 %v1113
  %1126 = vmatmul.bf16.gmra.mxu0 %v1116
  %v1127 = vpop.f32.mrf.mxu0
  %v1128 = vadd.f32 0.0, %v1127
  %v1129 = vpop.f32.mrf.mxu0
  %v1130 = vadd.f32 0.0, %v1129
  %1131 = vdwg.mxu0
  %v1134 = vunpack.c.l.b16 %v1054
  %v1135 = vunpack.c.l.b16 %v1055
  %v1136 = vpack.c.b16 %v1135, %v1134
  %1137 = vrot.lane.b32.xlu0 %v387, 64
  %v1138 = vpop.permute.xlu0 %1137
  %v1141 = vsel %vm761, %v1136, 0
  %1143 = vmatpush.bf16.msra.mxu0 0
  %1144 = vmatpush.bf16.msra.mxu0 0
  %1145 = vmatpush.bf16.msra.mxu0 0
  %1146 = vmatpush.bf16.msra.mxu0 0
  %1147 = vmatpush.bf16.msra.mxu0 0
  %1148 = vmatpush.bf16.msra.mxu0 0
  %1149 = vmatpush.bf16.msra.mxu0 0
  %1150 = vmatpush.bf16.msra.mxu0 %v1138
  %1151 = vmatmul.bf16.gmra.mxu0 %v1141
  %v1152 = vpop.f32.mrf.mxu0
  %v1153 = vadd.f32 0.0, %v1152
  %v1154 = vpop.f32.mrf.mxu0
  %v1155 = vadd.f32 0.0, %v1154
  %1156 = vdwg.mxu0
  %v1159 = vunpack.c.l.b16 %v1056
  %v1160 = vunpack.c.l.b16 %v1057
  %v1161 = vpack.c.b16 %v1160, %v1159
  %1162 = vrot.lane.b32.xlu0 %v414, 64
  %v1163 = vpop.permute.xlu0 %1162
  %v1166 = vsel %vm761, %v1161, 0
  %1168 = vmatpush.bf16.msra.mxu0 0
  %1169 = vmatpush.bf16.msra.mxu0 0
  %1170 = vmatpush.bf16.msra.mxu0 0
  %1171 = vmatpush.bf16.msra.mxu0 0
  %1172 = vmatpush.bf16.msra.mxu0 0
  %1173 = vmatpush.bf16.msra.mxu0 0
  %1174 = vmatpush.bf16.msra.mxu0 0
  %1175 = vmatpush.bf16.msra.mxu0 %v1163
  %1176 = vmatmul.bf16.gmra.mxu0 %v1166
  %v1177 = vpop.f32.mrf.mxu0
  %v1178 = vadd.f32 0.0, %v1177
  %v1179 = vpop.f32.mrf.mxu0
  %v1180 = vadd.f32 0.0, %v1179
  %1181 = vdwg.mxu0
  %v1184 = vunpack.c.l.b16 %v1058
  %v1185 = vunpack.c.l.b16 %v1059
  %v1186 = vpack.c.b16 %v1185, %v1184
  %1187 = vrot.lane.b32.xlu0 %v441, 64
  %v1188 = vpop.permute.xlu0 %1187
  %v1191 = vsel %vm761, %v1186, 0
  %1193 = vmatpush.bf16.msra.mxu0 0
  %1194 = vmatpush.bf16.msra.mxu0 0
  %1195 = vmatpush.bf16.msra.mxu0 0
  %1196 = vmatpush.bf16.msra.mxu0 0
  %1197 = vmatpush.bf16.msra.mxu0 0
  %1198 = vmatpush.bf16.msra.mxu0 0
  %1199 = vmatpush.bf16.msra.mxu0 0
  %1200 = vmatpush.bf16.msra.mxu0 %v1188
  %1201 = vmatmul.bf16.gmra.mxu0 %v1191
  %v1202 = vpop.f32.mrf.mxu0
  %v1203 = vadd.f32 0.0, %v1202
  %v1204 = vpop.f32.mrf.mxu0
  %v1205 = vadd.f32 0.0, %v1204
  %1206 = vdwg.mxu0
  %v1209 = vunpack.c.l.b16 %v1060
  %v1210 = vunpack.c.l.b16 %v1061
  %v1211 = vpack.c.b16 %v1210, %v1209
  %1212 = vrot.lane.b32.xlu0 %v468, 64
  %v1213 = vpop.permute.xlu0 %1212
  %v1216 = vsel %vm761, %v1211, 0
  %1218 = vmatpush.bf16.msra.mxu0 0
  %1219 = vmatpush.bf16.msra.mxu0 0
  %1220 = vmatpush.bf16.msra.mxu0 0
  %1221 = vmatpush.bf16.msra.mxu0 0
  %1222 = vmatpush.bf16.msra.mxu0 0
  %1223 = vmatpush.bf16.msra.mxu0 0
  %1224 = vmatpush.bf16.msra.mxu0 0
  %1225 = vmatpush.bf16.msra.mxu0 %v1213
  %1226 = vmatmul.bf16.gmra.mxu0 %v1216
  %v1227 = vpop.f32.mrf.mxu0
  %v1228 = vadd.f32 0.0, %v1227
  %v1229 = vpop.f32.mrf.mxu0
  %v1230 = vadd.f32 0.0, %v1229
  %1231 = vdwg.mxu0
  %v1234 = vunpack.c.l.b16 %v1062
  %v1235 = vunpack.c.l.b16 %v1063
  %v1236 = vpack.c.b16 %v1235, %v1234
  %1237 = vrot.lane.b32.xlu0 %v495, 64
  %v1238 = vpop.permute.xlu0 %1237
  %v1241 = vsel %vm761, %v1236, 0
  %1243 = vmatpush.bf16.msra.mxu0 0
  %1244 = vmatpush.bf16.msra.mxu0 0
  %1245 = vmatpush.bf16.msra.mxu0 0
  %1246 = vmatpush.bf16.msra.mxu0 0
  %1247 = vmatpush.bf16.msra.mxu0 0
  %1248 = vmatpush.bf16.msra.mxu0 0
  %1249 = vmatpush.bf16.msra.mxu0 0
  %1250 = vmatpush.bf16.msra.mxu0 %v1238
  %1251 = vmatmul.bf16.gmra.mxu0 %v1241
  %v1252 = vpop.f32.mrf.mxu0
  %v1253 = vadd.f32 0.0, %v1252
  %v1254 = vpop.f32.mrf.mxu0
  %v1255 = vadd.f32 0.0, %v1254
  %1256 = vdwg.mxu0
  %v1259 = vunpack.c.l.b16 %v1064
  %v1260 = vunpack.c.l.b16 %v1065
  %v1261 = vpack.c.b16 %v1260, %v1259
  %1262 = vrot.lane.b32.xlu0 %v522, 64
  %v1263 = vpop.permute.xlu0 %1262
  %v1266 = vsel %vm761, %v1261, 0
  %1268 = vmatpush.bf16.msra.mxu0 0
  %1269 = vmatpush.bf16.msra.mxu0 0
  %1270 = vmatpush.bf16.msra.mxu0 0
  %1271 = vmatpush.bf16.msra.mxu0 0
  %1272 = vmatpush.bf16.msra.mxu0 0
  %1273 = vmatpush.bf16.msra.mxu0 0
  %1274 = vmatpush.bf16.msra.mxu0 0
  %1275 = vmatpush.bf16.msra.mxu0 %v1263
  %1276 = vmatmul.bf16.gmra.mxu0 %v1266
  %v1277 = vpop.f32.mrf.mxu0
  %v1278 = vadd.f32 0.0, %v1277
  %v1279 = vpop.f32.mrf.mxu0
  %v1280 = vadd.f32 0.0, %v1279
  %1281 = vdwg.mxu0
  %v1284 = vunpack.c.l.b16 %v1066
  %v1285 = vunpack.c.l.b16 %v1067
  %v1286 = vpack.c.b16 %v1285, %v1284
  %1287 = vrot.lane.b32.xlu0 %v549, 64
  %v1288 = vpop.permute.xlu0 %1287
  %v1291 = vsel %vm761, %v1286, 0
  %1293 = vmatpush.bf16.msra.mxu0 0
  %1294 = vmatpush.bf16.msra.mxu0 0
  %1295 = vmatpush.bf16.msra.mxu0 0
  %1296 = vmatpush.bf16.msra.mxu0 0
  %1297 = vmatpush.bf16.msra.mxu0 0
  %1298 = vmatpush.bf16.msra.mxu0 0
  %1299 = vmatpush.bf16.msra.mxu0 0
  %1300 = vmatpush.bf16.msra.mxu0 %v1288
  %1301 = vmatmul.bf16.gmra.mxu0 %v1291
  %v1302 = vpop.f32.mrf.mxu0
  %v1303 = vadd.f32 0.0, %v1302
  %v1304 = vpop.f32.mrf.mxu0
  %v1305 = vadd.f32 0.0, %v1304
  %1306 = vdwg.mxu0
  %v1309 = vunpack.c.l.b16 %v1068
  %v1310 = vunpack.c.l.b16 %v1069
  %v1311 = vpack.c.b16 %v1310, %v1309
  %1312 = vrot.lane.b32.xlu0 %v576, 64
  %v1313 = vpop.permute.xlu0 %1312
  %v1316 = vsel %vm761, %v1311, 0
  %1318 = vmatpush.bf16.msra.mxu0 0
  %1319 = vmatpush.bf16.msra.mxu0 0
  %1320 = vmatpush.bf16.msra.mxu0 0
  %1321 = vmatpush.bf16.msra.mxu0 0
  %1322 = vmatpush.bf16.msra.mxu0 0
  %1323 = vmatpush.bf16.msra.mxu0 0
  %1324 = vmatpush.bf16.msra.mxu0 0
  %1325 = vmatpush.bf16.msra.mxu0 %v1313
  %1326 = vmatmul.bf16.gmra.mxu0 %v1316
  %v1327 = vpop.f32.mrf.mxu0
  %v1328 = vadd.f32 0.0, %v1327
  %v1329 = vpop.f32.mrf.mxu0
  %v1330 = vadd.f32 0.0, %v1329
  %1331 = vdwg.mxu0
  %v1334 = vunpack.c.l.b16 %v1070
  %v1335 = vunpack.c.l.b16 %v1071
  %v1336 = vpack.c.b16 %v1335, %v1334
  %1337 = vrot.lane.b32.xlu0 %v603, 64
  %v1338 = vpop.permute.xlu0 %1337
  %v1341 = vsel %vm761, %v1336, 0
  %1343 = vmatpush.bf16.msra.mxu0 0
  %1344 = vmatpush.bf16.msra.mxu0 0
  %1345 = vmatpush.bf16.msra.mxu0 0
  %1346 = vmatpush.bf16.msra.mxu0 0
  %1347 = vmatpush.bf16.msra.mxu0 0
  %1348 = vmatpush.bf16.msra.mxu0 0
  %1349 = vmatpush.bf16.msra.mxu0 0
  %1350 = vmatpush.bf16.msra.mxu0 %v1338
  %1351 = vmatmul.bf16.gmra.mxu0 %v1341
  %v1352 = vpop.f32.mrf.mxu0
  %v1353 = vadd.f32 0.0, %v1352
  %v1354 = vpop.f32.mrf.mxu0
  %v1355 = vadd.f32 0.0, %v1354
  %1356 = vdwg.mxu0
  %v1359 = vunpack.c.l.b16 %v1072
  %v1360 = vunpack.c.l.b16 %v1073
  %v1361 = vpack.c.b16 %v1360, %v1359
  %1362 = vrot.lane.b32.xlu0 %v630, 64
  %v1363 = vpop.permute.xlu0 %1362
  %v1366 = vsel %vm761, %v1361, 0
  %1368 = vmatpush.bf16.msra.mxu0 0
  %1369 = vmatpush.bf16.msra.mxu0 0
  %1370 = vmatpush.bf16.msra.mxu0 0
  %1371 = vmatpush.bf16.msra.mxu0 0
  %1372 = vmatpush.bf16.msra.mxu0 0
  %1373 = vmatpush.bf16.msra.mxu0 0
  %1374 = vmatpush.bf16.msra.mxu0 0
  %1375 = vmatpush.bf16.msra.mxu0 %v1363
  %1376 = vmatmul.bf16.gmra.mxu0 %v1366
  %v1377 = vpop.f32.mrf.mxu0
  %v1378 = vadd.f32 0.0, %v1377
  %v1379 = vpop.f32.mrf.mxu0
  %v1380 = vadd.f32 0.0, %v1379
  %1381 = vdwg.mxu0
  %v1384 = vunpack.c.l.b16 %v1074
  %v1385 = vunpack.c.l.b16 %v1075
  %v1386 = vpack.c.b16 %v1385, %v1384
  %1387 = vrot.lane.b32.xlu0 %v657, 64
  %v1388 = vpop.permute.xlu0 %1387
  %v1391 = vsel %vm761, %v1386, 0
  %1393 = vmatpush.bf16.msra.mxu0 0
  %1394 = vmatpush.bf16.msra.mxu0 0
  %1395 = vmatpush.bf16.msra.mxu0 0
  %1396 = vmatpush.bf16.msra.mxu0 0
  %1397 = vmatpush.bf16.msra.mxu0 0
  %1398 = vmatpush.bf16.msra.mxu0 0
  %1399 = vmatpush.bf16.msra.mxu0 0
  %1400 = vmatpush.bf16.msra.mxu0 %v1388
  %1401 = vmatmul.bf16.gmra.mxu0 %v1391
  %v1402 = vpop.f32.mrf.mxu0
  %v1403 = vadd.f32 0.0, %v1402
  %v1404 = vpop.f32.mrf.mxu0
  %v1405 = vadd.f32 0.0, %v1404
  %1406 = vdwg.mxu0
  %v1409 = vunpack.c.l.b16 %v1076
  %v1410 = vunpack.c.l.b16 %v1077
  %v1411 = vpack.c.b16 %v1410, %v1409
  %1412 = vrot.lane.b32.xlu0 %v684, 64
  %v1413 = vpop.permute.xlu0 %1412
  %v1416 = vsel %vm761, %v1411, 0
  %1418 = vmatpush.bf16.msra.mxu0 0
  %1419 = vmatpush.bf16.msra.mxu0 0
  %1420 = vmatpush.bf16.msra.mxu0 0
  %1421 = vmatpush.bf16.msra.mxu0 0
  %1422 = vmatpush.bf16.msra.mxu0 0
  %1423 = vmatpush.bf16.msra.mxu0 0
  %1424 = vmatpush.bf16.msra.mxu0 0
  %1425 = vmatpush.bf16.msra.mxu0 %v1413
  %1426 = vmatmul.bf16.gmra.mxu0 %v1416
  %v1427 = vpop.f32.mrf.mxu0
  %v1428 = vadd.f32 0.0, %v1427
  %v1429 = vpop.f32.mrf.mxu0
  %v1430 = vadd.f32 0.0, %v1429
  %1431 = vdwg.mxu0
  %v1434 = vunpack.c.l.b16 %v1078
  %v1435 = vunpack.c.l.b16 %v1079
  %v1436 = vpack.c.b16 %v1435, %v1434
  %1437 = vrot.lane.b32.xlu0 %v711, 64
  %v1438 = vpop.permute.xlu0 %1437
  %v1441 = vsel %vm761, %v1436, 0
  %1443 = vmatpush.bf16.msra.mxu0 0
  %1444 = vmatpush.bf16.msra.mxu0 0
  %1445 = vmatpush.bf16.msra.mxu0 0
  %1446 = vmatpush.bf16.msra.mxu0 0
  %1447 = vmatpush.bf16.msra.mxu0 0
  %1448 = vmatpush.bf16.msra.mxu0 0
  %1449 = vmatpush.bf16.msra.mxu0 0
  %1450 = vmatpush.bf16.msra.mxu0 %v1438
  %1451 = vmatmul.bf16.gmra.mxu0 %v1441
  %v1452 = vpop.f32.mrf.mxu0
  %v1453 = vadd.f32 0.0, %v1452
  %v1454 = vpop.f32.mrf.mxu0
  %v1455 = vadd.f32 0.0, %v1454
  %1456 = vdwg.mxu0
  %v1459 = vunpack.c.l.b16 %v1080
  %v1460 = vunpack.c.l.b16 %v1081
  %v1461 = vpack.c.b16 %v1460, %v1459
  %1462 = vrot.lane.b32.xlu0 %v738, 64
  %v1463 = vpop.permute.xlu0 %1462
  %v1466 = vsel %vm761, %v1461, 0
  %1468 = vmatpush.bf16.msra.mxu0 0
  %1469 = vmatpush.bf16.msra.mxu0 0
  %1470 = vmatpush.bf16.msra.mxu0 0
  %1471 = vmatpush.bf16.msra.mxu0 0
  %1472 = vmatpush.bf16.msra.mxu0 0
  %1473 = vmatpush.bf16.msra.mxu0 0
  %1474 = vmatpush.bf16.msra.mxu0 0
  %1475 = vmatpush.bf16.msra.mxu0 %v1463
  %1476 = vmatmul.bf16.gmra.mxu0 %v1466
  %v1477 = vpop.f32.mrf.mxu0
  %v1478 = vadd.f32 0.0, %v1477
  %v1479 = vpop.f32.mrf.mxu0
  %v1480 = vadd.f32 0.0, %v1479
  %1481 = vdwg.mxu0
  %v1482 = vrcp.pop %v956
  %v1483 = vrcp.pop %v959
  %v1484 = vrcp.pop %v962
  %v1485 = vrcp.pop %v965
  %v1486 = vrcp.pop %v968
  %v1487 = vrcp.pop %v971
  %v1488 = vrcp.pop %v974
  %v1489 = vrcp.pop %v977
  %v1490 = vrcp.pop %v980
  %v1491 = vrcp.pop %v983
  %v1492 = vrcp.pop %v986
  %v1493 = vrcp.pop %v989
  %v1494 = vrcp.pop %v992
  %v1495 = vrcp.pop %v995
  %v1496 = vrcp.pop %v998
  %v1497 = vrcp.pop %v1001
  %v1498 = vrcp.pop %v1004
  %v1499 = vrcp.pop %v1007
  %v1500 = vrcp.pop %v1010
  %v1501 = vrcp.pop %v1013
  %v1502 = vrcp.pop %v1016
  %v1503 = vrcp.pop %v1019
  %v1504 = vrcp.pop %v1022
  %v1505 = vrcp.pop %v1025
  %v1506 = vrcp.pop %v1028
  %v1507 = vrcp.pop %v1031
  %v1508 = vrcp.pop %v1034
  %v1509 = vrcp.pop %v1037
  %v1510 = vrcp.pop %v1040
  %v1511 = vrcp.pop %v1043
  %v1512 = vrcp.pop %v1046
  %v1513 = vrcp.pop %v1049
  %v1514 = vmul.f32 %v1103, %v1482
  %v1515 = vmul.f32 %v1105, %v1483
  %v1516 = vmul.f32 %v1128, %v1484
  %v1517 = vmul.f32 %v1130, %v1485
  %v1518 = vmul.f32 %v1153, %v1486
  %v1519 = vmul.f32 %v1155, %v1487
  %v1520 = vmul.f32 %v1178, %v1488
  %v1521 = vmul.f32 %v1180, %v1489
  %v1522 = vmul.f32 %v1203, %v1490
  %v1523 = vmul.f32 %v1205, %v1491
  %v1524 = vmul.f32 %v1228, %v1492
  %v1525 = vmul.f32 %v1230, %v1493
  %v1526 = vmul.f32 %v1253, %v1494
  %v1527 = vmul.f32 %v1255, %v1495
  %v1528 = vmul.f32 %v1278, %v1496
  %v1529 = vmul.f32 %v1280, %v1497
  %v1530 = vmul.f32 %v1303, %v1498
  %v1531 = vmul.f32 %v1305, %v1499
  %v1532 = vmul.f32 %v1328, %v1500
  %v1533 = vmul.f32 %v1330, %v1501
  %v1534 = vmul.f32 %v1353, %v1502
  %v1535 = vmul.f32 %v1355, %v1503
  %v1536 = vmul.f32 %v1378, %v1504
  %v1537 = vmul.f32 %v1380, %v1505
  %v1538 = vmul.f32 %v1403, %v1506
  %v1539 = vmul.f32 %v1405, %v1507
  %v1540 = vmul.f32 %v1428, %v1508
  %v1541 = vmul.f32 %v1430, %v1509
  %v1542 = vmul.f32 %v1453, %v1510
  %v1543 = vmul.f32 %v1455, %v1511
  %v1544 = vmul.f32 %v1478, %v1512
  %v1545 = vmul.f32 %v1480, %v1513
  %v1546 = vpack.c.bf16 %v1514, %v1514
  %v1547 = vpack.c.bf16 %v1515, %v1515
  %v1548 = vpack.c.bf16 %v1516, %v1516
  %v1549 = vpack.c.bf16 %v1517, %v1517
  %v1550 = vpack.c.bf16 %v1518, %v1518
  %v1551 = vpack.c.bf16 %v1519, %v1519
  %v1552 = vpack.c.bf16 %v1520, %v1520
  %v1553 = vpack.c.bf16 %v1521, %v1521
  %v1554 = vpack.c.bf16 %v1522, %v1522
  %v1555 = vpack.c.bf16 %v1523, %v1523
  %v1556 = vpack.c.bf16 %v1524, %v1524
  %v1557 = vpack.c.bf16 %v1525, %v1525
  %v1558 = vpack.c.bf16 %v1526, %v1526
  %v1559 = vpack.c.bf16 %v1527, %v1527
  %v1560 = vpack.c.bf16 %v1528, %v1528
  %v1561 = vpack.c.bf16 %v1529, %v1529
  %v1562 = vpack.c.bf16 %v1530, %v1530
  %v1563 = vpack.c.bf16 %v1531, %v1531
  %v1564 = vpack.c.bf16 %v1532, %v1532
  %v1565 = vpack.c.bf16 %v1533, %v1533
  %v1566 = vpack.c.bf16 %v1534, %v1534
  %v1567 = vpack.c.bf16 %v1535, %v1535
  %v1568 = vpack.c.bf16 %v1536, %v1536
  %v1569 = vpack.c.bf16 %v1537, %v1537
  %v1570 = vpack.c.bf16 %v1538, %v1538
  %v1571 = vpack.c.bf16 %v1539, %v1539
  %v1572 = vpack.c.bf16 %v1540, %v1540
  %v1573 = vpack.c.bf16 %v1541, %v1541
  %v1574 = vpack.c.bf16 %v1542, %v1542
  %v1575 = vpack.c.bf16 %v1543, %v1543
  %v1576 = vpack.c.bf16 %v1544, %v1544
  %v1577 = vpack.c.bf16 %v1545, %v1545
  %vm1578 = vcmask 60416
  %1579 = vst.msk [vmem:[#allocation2] sm:$0xf] %vm1578, %v1546
  %1580 = vst.msk [vmem:[#allocation2 + $0x4] sm:$0xf] %vm1578, %v1547
  %1581 = vst.msk [vmem:[#allocation2 + $0x8] sm:$0xf] %vm1578, %v1548
  %1582 = vst.msk [vmem:[#allocation2 + $0xc] sm:$0xf] %vm1578, %v1549
  %1583 = vst.msk [vmem:[#allocation2 + $0x10] sm:$0xf] %vm1578, %v1550
  %1584 = vst.msk [vmem:[#allocation2 + $0x14] sm:$0xf] %vm1578, %v1551
  %1585 = vst.msk [vmem:[#allocation2 + $0x18] sm:$0xf] %vm1578, %v1552
  %1586 = vst.msk [vmem:[#allocation2 + $0x1c] sm:$0xf] %vm1578, %v1553
  %1587 = vst.msk [vmem:[#allocation2 + $0x20] sm:$0xf] %vm1578, %v1554
  %1588 = vst.msk [vmem:[#allocation2 + $0x24] sm:$0xf] %vm1578, %v1555
  %1589 = vst.msk [vmem:[#allocation2 + $0x28] sm:$0xf] %vm1578, %v1556
  %1590 = vst.msk [vmem:[#allocation2 + $0x2c] sm:$0xf] %vm1578, %v1557
  %1591 = vst.msk [vmem:[#allocation2 + $0x30] sm:$0xf] %vm1578, %v1558
  %1592 = vst.msk [vmem:[#allocation2 + $0x34] sm:$0xf] %vm1578, %v1559
  %1593 = vst.msk [vmem:[#allocation2 + $0x38] sm:$0xf] %vm1578, %v1560
  %1594 = vst.msk [vmem:[#allocation2 + $0x3c] sm:$0xf] %vm1578, %v1561
  %1595 = vst.msk [vmem:[#allocation2 + $0x40] sm:$0xf] %vm1578, %v1562
  %1596 = vst.msk [vmem:[#allocation2 + $0x44] sm:$0xf] %vm1578, %v1563
  %1597 = vst.msk [vmem:[#allocation2 + $0x48] sm:$0xf] %vm1578, %v1564
  %1598 = vst.msk [vmem:[#allocation2 + $0x4c] sm:$0xf] %vm1578, %v1565
  %1599 = vst.msk [vmem:[#allocation2 + $0x50] sm:$0xf] %vm1578, %v1566
  %1600 = vst.msk [vmem:[#allocation2 + $0x54] sm:$0xf] %vm1578, %v1567
  %1601 = vst.msk [vmem:[#allocation2 + $0x58] sm:$0xf] %vm1578, %v1568
  %1602 = vst.msk [vmem:[#allocation2 + $0x5c] sm:$0xf] %vm1578, %v1569
  %1603 = vst.msk [vmem:[#allocation2 + $0x60] sm:$0xf] %vm1578, %v1570
  %1604 = vst.msk [vmem:[#allocation2 + $0x64] sm:$0xf] %vm1578, %v1571
  %1605 = vst.msk [vmem:[#allocation2 + $0x68] sm:$0xf] %vm1578, %v1572
  %1606 = vst.msk [vmem:[#allocation2 + $0x6c] sm:$0xf] %vm1578, %v1573
  %1607 = vst.msk [vmem:[#allocation2 + $0x70] sm:$0xf] %vm1578, %v1574
  %1608 = vst.msk [vmem:[#allocation2 + $0x74] sm:$0xf] %vm1578, %v1575
  %1609 = vst.msk [vmem:[#allocation2 + $0x78] sm:$0xf] %vm1578, %v1576
  %1610 = vst.msk [vmem:[#allocation2 + $0x7c] sm:$0xf] %vm1578, %v1577
  %s1611 = scalar_lea.vmem %s5, 16
  %v1612 = vld [vmem:[%s1611] sm:$0xff]
  %v1613 = vld [vmem:[%s1611 + $0x8] sm:$0xff]
  %1614 = vrot.lane.b32.xlu0 %v332, 120
  %v1615 = vpop.permute.xlu0 %1614
  %1616 = vrot.lane.b32.xlu0 %v332, 88
  %v1617 = vpop.permute.xlu0 %1616
  %v1619 = vsel %vm335, %v1615, 0
  %v1622 = vsel %vm335, %v1617, 0
  %1624 = vmatpush.bf16.xpose.msra.mxu0 0
  %1625 = vmatpush.bf16.xpose.msra.mxu0 0
  %1626 = vmatpush.bf16.xpose.msra.mxu0 0
  %1627 = vmatpush.bf16.xpose.msra.mxu0 0
  %1628 = vmatpush.bf16.xpose.msra.mxu0 0
  %1629 = vmatpush.bf16.xpose.msra.mxu0 0
  %1630 = vmatpush.bf16.xpose.msra.mxu0 0
  %1631 = vmatpush.bf16.xpose.msra.mxu0 %v1622
  %1632 = vmatmul.bf16.gmra.mxu0 %v1619
  %v1633 = vpop.f32.mrf.mxu0
  %v1634 = vadd.f32 %v1612, %v1633
  %v1635 = vpop.f32.mrf.mxu0
  %v1636 = vadd.f32 %v1613, %v1635
  %1637 = vdwg.mxu0
  %1638 = vrot.lane.b32.xlu0 %v360, 120
  %v1639 = vpop.permute.xlu0 %1638
  %1640 = vrot.lane.b32.xlu0 %v360, 88
  %v1641 = vpop.permute.xlu0 %1640
  %v1643 = vsel %vm335, %v1639, 0
  %v1646 = vsel %vm335, %v1641, 0
  %1648 = vmatpush.bf16.xpose.msra.mxu0 0
  %1649 = vmatpush.bf16.xpose.msra.mxu0 0
  %1650 = vmatpush.bf16.xpose.msra.mxu0 0
  %1651 = vmatpush.bf16.xpose.msra.mxu0 0
  %1652 = vmatpush.bf16.xpose.msra.mxu0 0
  %1653 = vmatpush.bf16.xpose.msra.mxu0 0
  %1654 = vmatpush.bf16.xpose.msra.mxu0 0
  %1655 = vmatpush.bf16.xpose.msra.mxu0 %v1646
  %1656 = vmatmul.bf16.gmra.mxu0 %v1643
  %v1657 = vpop.f32.mrf.mxu0
  %v1658 = vadd.f32 %v1612, %v1657
  %v1659 = vpop.f32.mrf.mxu0
  %v1660 = vadd.f32 %v1613, %v1659
  %1661 = vdwg.mxu0
  %1662 = vrot.lane.b32.xlu0 %v387, 120
  %v1663 = vpop.permute.xlu0 %1662
  %1664 = vrot.lane.b32.xlu0 %v387, 88
  %v1665 = vpop.permute.xlu0 %1664
  %v1667 = vsel %vm335, %v1663, 0
  %v1670 = vsel %vm335, %v1665, 0
  %1672 = vmatpush.bf16.xpose.msra.mxu0 0
  %1673 = vmatpush.bf16.xpose.msra.mxu0 0
  %1674 = vmatpush.bf16.xpose.msra.mxu0 0
  %1675 = vmatpush.bf16.xpose.msra.mxu0 0
  %1676 = vmatpush.bf16.xpose.msra.mxu0 0
  %1677 = vmatpush.bf16.xpose.msra.mxu0 0
  %1678 = vmatpush.bf16.xpose.msra.mxu0 0
  %1679 = vmatpush.bf16.xpose.msra.mxu0 %v1670
  %1680 = vmatmul.bf16.gmra.mxu0 %v1667
  %v1681 = vpop.f32.mrf.mxu0
  %v1682 = vadd.f32 %v1612, %v1681
  %v1683 = vpop.f32.mrf.mxu0
  %v1684 = vadd.f32 %v1613, %v1683
  %1685 = vdwg.mxu0
  %1686 = vrot.lane.b32.xlu0 %v414, 120
  %v1687 = vpop.permute.xlu0 %1686
  %1688 = vrot.lane.b32.xlu0 %v414, 88
  %v1689 = vpop.permute.xlu0 %1688
  %v1691 = vsel %vm335, %v1687, 0
  %v1694 = vsel %vm335, %v1689, 0
  %1696 = vmatpush.bf16.xpose.msra.mxu0 0
  %1697 = vmatpush.bf16.xpose.msra.mxu0 0
  %1698 = vmatpush.bf16.xpose.msra.mxu0 0
  %1699 = vmatpush.bf16.xpose.msra.mxu0 0
  %1700 = vmatpush.bf16.xpose.msra.mxu0 0
  %1701 = vmatpush.bf16.xpose.msra.mxu0 0
  %1702 = vmatpush.bf16.xpose.msra.mxu0 0
  %1703 = vmatpush.bf16.xpose.msra.mxu0 %v1694
  %1704 = vmatmul.bf16.gmra.mxu0 %v1691
  %v1705 = vpop.f32.mrf.mxu0
  %v1706 = vadd.f32 %v1612, %v1705
  %v1707 = vpop.f32.mrf.mxu0
  %v1708 = vadd.f32 %v1613, %v1707
  %1709 = vdwg.mxu0
  %1710 = vrot.lane.b32.xlu0 %v441, 120
  %v1711 = vpop.permute.xlu0 %1710
  %1712 = vrot.lane.b32.xlu0 %v441, 88
  %v1713 = vpop.permute.xlu0 %1712
  %v1715 = vsel %vm335, %v1711, 0
  %v1718 = vsel %vm335, %v1713, 0
  %1720 = vmatpush.bf16.xpose.msra.mxu0 0
  %1721 = vmatpush.bf16.xpose.msra.mxu0 0
  %1722 = vmatpush.bf16.xpose.msra.mxu0 0
  %1723 = vmatpush.bf16.xpose.msra.mxu0 0
  %1724 = vmatpush.bf16.xpose.msra.mxu0 0
  %1725 = vmatpush.bf16.xpose.msra.mxu0 0
  %1726 = vmatpush.bf16.xpose.msra.mxu0 0
  %1727 = vmatpush.bf16.xpose.msra.mxu0 %v1718
  %1728 = vmatmul.bf16.gmra.mxu0 %v1715
  %v1729 = vpop.f32.mrf.mxu0
  %v1730 = vadd.f32 %v1612, %v1729
  %v1731 = vpop.f32.mrf.mxu0
  %v1732 = vadd.f32 %v1613, %v1731
  %1733 = vdwg.mxu0
  %1734 = vrot.lane.b32.xlu0 %v468, 120
  %v1735 = vpop.permute.xlu0 %1734
  %1736 = vrot.lane.b32.xlu0 %v468, 88
  %v1737 = vpop.permute.xlu0 %1736
  %v1739 = vsel %vm335, %v1735, 0
  %v1742 = vsel %vm335, %v1737, 0
  %1744 = vmatpush.bf16.xpose.msra.mxu0 0
  %1745 = vmatpush.bf16.xpose.msra.mxu0 0
  %1746 = vmatpush.bf16.xpose.msra.mxu0 0
  %1747 = vmatpush.bf16.xpose.msra.mxu0 0
  %1748 = vmatpush.bf16.xpose.msra.mxu0 0
  %1749 = vmatpush.bf16.xpose.msra.mxu0 0
  %1750 = vmatpush.bf16.xpose.msra.mxu0 0
  %1751 = vmatpush.bf16.xpose.msra.mxu0 %v1742
  %1752 = vmatmul.bf16.gmra.mxu0 %v1739
  %v1753 = vpop.f32.mrf.mxu0
  %v1754 = vadd.f32 %v1612, %v1753
  %v1755 = vpop.f32.mrf.mxu0
  %v1756 = vadd.f32 %v1613, %v1755
  %1757 = vdwg.mxu0
  %1758 = vrot.lane.b32.xlu0 %v495, 120
  %v1759 = vpop.permute.xlu0 %1758
  %1760 = vrot.lane.b32.xlu0 %v495, 88
  %v1761 = vpop.permute.xlu0 %1760
  %v1763 = vsel %vm335, %v1759, 0
  %v1766 = vsel %vm335, %v1761, 0
  %1768 = vmatpush.bf16.xpose.msra.mxu0 0
  %1769 = vmatpush.bf16.xpose.msra.mxu0 0
  %1770 = vmatpush.bf16.xpose.msra.mxu0 0
  %1771 = vmatpush.bf16.xpose.msra.mxu0 0
  %1772 = vmatpush.bf16.xpose.msra.mxu0 0
  %1773 = vmatpush.bf16.xpose.msra.mxu0 0
  %1774 = vmatpush.bf16.xpose.msra.mxu0 0
  %1775 = vmatpush.bf16.xpose.msra.mxu0 %v1766
  %1776 = vmatmul.bf16.gmra.mxu0 %v1763
  %v1777 = vpop.f32.mrf.mxu0
  %v1778 = vadd.f32 %v1612, %v1777
  %v1779 = vpop.f32.mrf.mxu0
  %v1780 = vadd.f32 %v1613, %v1779
  %1781 = vdwg.mxu0
  %1782 = vrot.lane.b32.xlu0 %v522, 120
  %v1783 = vpop.permute.xlu0 %1782
  %1784 = vrot.lane.b32.xlu0 %v522, 88
  %v1785 = vpop.permute.xlu0 %1784
  %v1787 = vsel %vm335, %v1783, 0
  %v1790 = vsel %vm335, %v1785, 0
  %1792 = vmatpush.bf16.xpose.msra.mxu0 0
  %1793 = vmatpush.bf16.xpose.msra.mxu0 0
  %1794 = vmatpush.bf16.xpose.msra.mxu0 0
  %1795 = vmatpush.bf16.xpose.msra.mxu0 0
  %1796 = vmatpush.bf16.xpose.msra.mxu0 0
  %1797 = vmatpush.bf16.xpose.msra.mxu0 0
  %1798 = vmatpush.bf16.xpose.msra.mxu0 0
  %1799 = vmatpush.bf16.xpose.msra.mxu0 %v1790
  %1800 = vmatmul.bf16.gmra.mxu0 %v1787
  %v1801 = vpop.f32.mrf.mxu0
  %v1802 = vadd.f32 %v1612, %v1801
  %v1803 = vpop.f32.mrf.mxu0
  %v1804 = vadd.f32 %v1613, %v1803
  %1805 = vdwg.mxu0
  %1806 = vrot.lane.b32.xlu0 %v549, 120
  %v1807 = vpop.permute.xlu0 %1806
  %1808 = vrot.lane.b32.xlu0 %v549, 88
  %v1809 = vpop.permute.xlu0 %1808
  %v1811 = vsel %vm335, %v1807, 0
  %v1814 = vsel %vm335, %v1809, 0
  %1816 = vmatpush.bf16.xpose.msra.mxu0 0
  %1817 = vmatpush.bf16.xpose.msra.mxu0 0
  %1818 = vmatpush.bf16.xpose.msra.mxu0 0
  %1819 = vmatpush.bf16.xpose.msra.mxu0 0
  %1820 = vmatpush.bf16.xpose.msra.mxu0 0
  %1821 = vmatpush.bf16.xpose.msra.mxu0 0
  %1822 = vmatpush.bf16.xpose.msra.mxu0 0
  %1823 = vmatpush.bf16.xpose.msra.mxu0 %v1814
  %1824 = vmatmul.bf16.gmra.mxu0 %v1811
  %v1825 = vpop.f32.mrf.mxu0
  %v1826 = vadd.f32 %v1612, %v1825
  %v1827 = vpop.f32.mrf.mxu0
  %v1828 = vadd.f32 %v1613, %v1827
  %1829 = vdwg.mxu0
  %1830 = vrot.lane.b32.xlu0 %v576, 120
  %v1831 = vpop.permute.xlu0 %1830
  %1832 = vrot.lane.b32.xlu0 %v576, 88
  %v1833 = vpop.permute.xlu0 %1832
  %v1835 = vsel %vm335, %v1831, 0
  %v1838 = vsel %vm335, %v1833, 0
  %1840 = vmatpush.bf16.xpose.msra.mxu0 0
  %1841 = vmatpush.bf16.xpose.msra.mxu0 0
  %1842 = vmatpush.bf16.xpose.msra.mxu0 0
  %1843 = vmatpush.bf16.xpose.msra.mxu0 0
  %1844 = vmatpush.bf16.xpose.msra.mxu0 0
  %1845 = vmatpush.bf16.xpose.msra.mxu0 0
  %1846 = vmatpush.bf16.xpose.msra.mxu0 0
  %1847 = vmatpush.bf16.xpose.msra.mxu0 %v1838
  %1848 = vmatmul.bf16.gmra.mxu0 %v1835
  %v1849 = vpop.f32.mrf.mxu0
  %v1850 = vadd.f32 %v1612, %v1849
  %v1851 = vpop.f32.mrf.mxu0
  %v1852 = vadd.f32 %v1613, %v1851
  %1853 = vdwg.mxu0
  %1854 = vrot.lane.b32.xlu0 %v603, 120
  %v1855 = vpop.permute.xlu0 %1854
  %1856 = vrot.lane.b32.xlu0 %v603, 88
  %v1857 = vpop.permute.xlu0 %1856
  %v1859 = vsel %vm335, %v1855, 0
  %v1862 = vsel %vm335, %v1857, 0
  %1864 = vmatpush.bf16.xpose.msra.mxu0 0
  %1865 = vmatpush.bf16.xpose.msra.mxu0 0
  %1866 = vmatpush.bf16.xpose.msra.mxu0 0
  %1867 = vmatpush.bf16.xpose.msra.mxu0 0
  %1868 = vmatpush.bf16.xpose.msra.mxu0 0
  %1869 = vmatpush.bf16.xpose.msra.mxu0 0
  %1870 = vmatpush.bf16.xpose.msra.mxu0 0
  %1871 = vmatpush.bf16.xpose.msra.mxu0 %v1862
  %1872 = vmatmul.bf16.gmra.mxu0 %v1859
  %v1873 = vpop.f32.mrf.mxu0
  %v1874 = vadd.f32 %v1612, %v1873
  %v1875 = vpop.f32.mrf.mxu0
  %v1876 = vadd.f32 %v1613, %v1875
  %1877 = vdwg.mxu0
  %1878 = vrot.lane.b32.xlu0 %v630, 120
  %v1879 = vpop.permute.xlu0 %1878
  %1880 = vrot.lane.b32.xlu0 %v630, 88
  %v1881 = vpop.permute.xlu0 %1880
  %v1883 = vsel %vm335, %v1879, 0
  %v1886 = vsel %vm335, %v1881, 0
  %1888 = vmatpush.bf16.xpose.msra.mxu0 0
  %1889 = vmatpush.bf16.xpose.msra.mxu0 0
  %1890 = vmatpush.bf16.xpose.msra.mxu0 0
  %1891 = vmatpush.bf16.xpose.msra.mxu0 0
  %1892 = vmatpush.bf16.xpose.msra.mxu0 0
  %1893 = vmatpush.bf16.xpose.msra.mxu0 0
  %1894 = vmatpush.bf16.xpose.msra.mxu0 0
  %1895 = vmatpush.bf16.xpose.msra.mxu0 %v1886
  %1896 = vmatmul.bf16.gmra.mxu0 %v1883
  %v1897 = vpop.f32.mrf.mxu0
  %v1898 = vadd.f32 %v1612, %v1897
  %v1899 = vpop.f32.mrf.mxu0
  %v1900 = vadd.f32 %v1613, %v1899
  %1901 = vdwg.mxu0
  %1902 = vrot.lane.b32.xlu0 %v657, 120
  %v1903 = vpop.permute.xlu0 %1902
  %1904 = vrot.lane.b32.xlu0 %v657, 88
  %v1905 = vpop.permute.xlu0 %1904
  %v1907 = vsel %vm335, %v1903, 0
  %v1910 = vsel %vm335, %v1905, 0
  %1912 = vmatpush.bf16.xpose.msra.mxu0 0
  %1913 = vmatpush.bf16.xpose.msra.mxu0 0
  %1914 = vmatpush.bf16.xpose.msra.mxu0 0
  %1915 = vmatpush.bf16.xpose.msra.mxu0 0
  %1916 = vmatpush.bf16.xpose.msra.mxu0 0
  %1917 = vmatpush.bf16.xpose.msra.mxu0 0
  %1918 = vmatpush.bf16.xpose.msra.mxu0 0
  %1919 = vmatpush.bf16.xpose.msra.mxu0 %v1910
  %1920 = vmatmul.bf16.gmra.mxu0 %v1907
  %v1921 = vpop.f32.mrf.mxu0
  %v1922 = vadd.f32 %v1612, %v1921
  %v1923 = vpop.f32.mrf.mxu0
  %v1924 = vadd.f32 %v1613, %v1923
  %1925 = vdwg.mxu0
  %1926 = vrot.lane.b32.xlu0 %v684, 120
  %v1927 = vpop.permute.xlu0 %1926
  %1928 = vrot.lane.b32.xlu0 %v684, 88
  %v1929 = vpop.permute.xlu0 %1928
  %v1931 = vsel %vm335, %v1927, 0
  %v1934 = vsel %vm335, %v1929, 0
  %1936 = vmatpush.bf16.xpose.msra.mxu0 0
  %1937 = vmatpush.bf16.xpose.msra.mxu0 0
  %1938 = vmatpush.bf16.xpose.msra.mxu0 0
  %1939 = vmatpush.bf16.xpose.msra.mxu0 0
  %1940 = vmatpush.bf16.xpose.msra.mxu0 0
  %1941 = vmatpush.bf16.xpose.msra.mxu0 0
  %1942 = vmatpush.bf16.xpose.msra.mxu0 0
  %1943 = vmatpush.bf16.xpose.msra.mxu0 %v1934
  %1944 = vmatmul.bf16.gmra.mxu0 %v1931
  %v1945 = vpop.f32.mrf.mxu0
  %v1946 = vadd.f32 %v1612, %v1945
  %v1947 = vpop.f32.mrf.mxu0
  %v1948 = vadd.f32 %v1613, %v1947
  %1949 = vdwg.mxu0
  %1950 = vrot.lane.b32.xlu0 %v711, 120
  %v1951 = vpop.permute.xlu0 %1950
  %1952 = vrot.lane.b32.xlu0 %v711, 88
  %v1953 = vpop.permute.xlu0 %1952
  %v1955 = vsel %vm335, %v1951, 0
  %v1958 = vsel %vm335, %v1953, 0
  %1960 = vmatpush.bf16.xpose.msra.mxu0 0
  %1961 = vmatpush.bf16.xpose.msra.mxu0 0
  %1962 = vmatpush.bf16.xpose.msra.mxu0 0
  %1963 = vmatpush.bf16.xpose.msra.mxu0 0
  %1964 = vmatpush.bf16.xpose.msra.mxu0 0
  %1965 = vmatpush.bf16.xpose.msra.mxu0 0
  %1966 = vmatpush.bf16.xpose.msra.mxu0 0
  %1967 = vmatpush.bf16.xpose.msra.mxu0 %v1958
  %1968 = vmatmul.bf16.gmra.mxu0 %v1955
  %v1969 = vpop.f32.mrf.mxu0
  %v1970 = vadd.f32 %v1612, %v1969
  %v1971 = vpop.f32.mrf.mxu0
  %v1972 = vadd.f32 %v1613, %v1971
  %1973 = vdwg.mxu0
  %1974 = vrot.lane.b32.xlu0 %v738, 120
  %v1975 = vpop.permute.xlu0 %1974
  %1976 = vrot.lane.b32.xlu0 %v738, 88
  %v1977 = vpop.permute.xlu0 %1976
  %v1979 = vsel %vm335, %v1975, 0
  %v1982 = vsel %vm335, %v1977, 0
  %1984 = vmatpush.bf16.xpose.msra.mxu0 0
  %1985 = vmatpush.bf16.xpose.msra.mxu0 0
  %1986 = vmatpush.bf16.xpose.msra.mxu0 0
  %1987 = vmatpush.bf16.xpose.msra.mxu0 0
  %1988 = vmatpush.bf16.xpose.msra.mxu0 0
  %1989 = vmatpush.bf16.xpose.msra.mxu0 0
  %1990 = vmatpush.bf16.xpose.msra.mxu0 0
  %1991 = vmatpush.bf16.xpose.msra.mxu0 %v1982
  %1992 = vmatmul.bf16.gmra.mxu0 %v1979
  %v1993 = vpop.f32.mrf.mxu0
  %v1994 = vadd.f32 %v1612, %v1993
  %v1995 = vpop.f32.mrf.mxu0
  %v1996 = vadd.f32 %v1613, %v1995
  %1997 = vdwg.mxu0
  %v1998 = vsel %vm761, %v1634, -inf
  %1999 = vmax.xlane.f32.xlu0 %v1998
  %v2000 = vpop.xlane.xlu0 %1999
  %v2001 = vsel %vm761, %v1636, -inf
  %2002 = vmax.xlane.f32.xlu0 %v2001
  %v2003 = vpop.xlane.xlu0 %2002
  %v2004 = vsel %vm761, %v1658, -inf
  %2005 = vmax.xlane.f32.xlu0 %v2004
  %v2006 = vpop.xlane.xlu0 %2005
  %v2007 = vsel %vm761, %v1660, -inf
  %2008 = vmax.xlane.f32.xlu0 %v2007
  %v2009 = vpop.xlane.xlu0 %2008
  %v2010 = vsel %vm761, %v1682, -inf
  %2011 = vmax.xlane.f32.xlu0 %v2010
  %v2012 = vpop.xlane.xlu0 %2011
  %v2013 = vsel %vm761, %v1684, -inf
  %2014 = vmax.xlane.f32.xlu0 %v2013
  %v2015 = vpop.xlane.xlu0 %2014
  %v2016 = vsel %vm761, %v1706, -inf
  %2017 = vmax.xlane.f32.xlu0 %v2016
  %v2018 = vpop.xlane.xlu0 %2017
  %v2019 = vsel %vm761, %v1708, -inf
  %2020 = vmax.xlane.f32.xlu0 %v2019
  %v2021 = vpop.xlane.xlu0 %2020
  %v2022 = vsel %vm761, %v1730, -inf
  %2023 = vmax.xlane.f32.xlu0 %v2022
  %v2024 = vpop.xlane.xlu0 %2023
  %v2025 = vsel %vm761, %v1732, -inf
  %2026 = vmax.xlane.f32.xlu0 %v2025
  %v2027 = vpop.xlane.xlu0 %2026
  %v2028 = vsel %vm761, %v1754, -inf
  %2029 = vmax.xlane.f32.xlu0 %v2028
  %v2030 = vpop.xlane.xlu0 %2029
  %v2031 = vsel %vm761, %v1756, -inf
  %2032 = vmax.xlane.f32.xlu0 %v2031
  %v2033 = vpop.xlane.xlu0 %2032
  %v2034 = vsel %vm761, %v1778, -inf
  %2035 = vmax.xlane.f32.xlu0 %v2034
  %v2036 = vpop.xlane.xlu0 %2035
  %v2037 = vsel %vm761, %v1780, -inf
  %2038 = vmax.xlane.f32.xlu0 %v2037
  %v2039 = vpop.xlane.xlu0 %2038
  %v2040 = vsel %vm761, %v1802, -inf
  %2041 = vmax.xlane.f32.xlu0 %v2040
  %v2042 = vpop.xlane.xlu0 %2041
  %v2043 = vsel %vm761, %v1804, -inf
  %2044 = vmax.xlane.f32.xlu0 %v2043
  %v2045 = vpop.xlane.xlu0 %2044
  %v2046 = vsel %vm761, %v1826, -inf
  %2047 = vmax.xlane.f32.xlu0 %v2046
  %v2048 = vpop.xlane.xlu0 %2047
  %v2049 = vsel %vm761, %v1828, -inf
  %2050 = vmax.xlane.f32.xlu0 %v2049
  %v2051 = vpop.xlane.xlu0 %2050
  %v2052 = vsel %vm761, %v1850, -inf
  %2053 = vmax.xlane.f32.xlu0 %v2052
  %v2054 = vpop.xlane.xlu0 %2053
  %v2055 = vsel %vm761, %v1852, -inf
  %2056 = vmax.xlane.f32.xlu0 %v2055
  %v2057 = vpop.xlane.xlu0 %2056
  %v2058 = vsel %vm761, %v1874, -inf
  %2059 = vmax.xlane.f32.xlu0 %v2058
  %v2060 = vpop.xlane.xlu0 %2059
  %v2061 = vsel %vm761, %v1876, -inf
  %2062 = vmax.xlane.f32.xlu0 %v2061
  %v2063 = vpop.xlane.xlu0 %2062
  %v2064 = vsel %vm761, %v1898, -inf
  %2065 = vmax.xlane.f32.xlu0 %v2064
  %v2066 = vpop.xlane.xlu0 %2065
  %v2067 = vsel %vm761, %v1900, -inf
  %2068 = vmax.xlane.f32.xlu0 %v2067
  %v2069 = vpop.xlane.xlu0 %2068
  %v2070 = vsel %vm761, %v1922, -inf
  %2071 = vmax.xlane.f32.xlu0 %v2070
  %v2072 = vpop.xlane.xlu0 %2071
  %v2073 = vsel %vm761, %v1924, -inf
  %2074 = vmax.xlane.f32.xlu0 %v2073
  %v2075 = vpop.xlane.xlu0 %2074
  %v2076 = vsel %vm761, %v1946, -inf
  %2077 = vmax.xlane.f32.xlu0 %v2076
  %v2078 = vpop.xlane.xlu0 %2077
  %v2079 = vsel %vm761, %v1948, -inf
  %2080 = vmax.xlane.f32.xlu0 %v2079
  %v2081 = vpop.xlane.xlu0 %2080
  %v2082 = vsel %vm761, %v1970, -inf
  %2083 = vmax.xlane.f32.xlu0 %v2082
  %v2084 = vpop.xlane.xlu0 %2083
  %v2085 = vsel %vm761, %v1972, -inf
  %2086 = vmax.xlane.f32.xlu0 %v2085
  %v2087 = vpop.xlane.xlu0 %2086
  %v2088 = vsel %vm761, %v1994, -inf
  %2089 = vmax.xlane.f32.xlu0 %v2088
  %v2090 = vpop.xlane.xlu0 %2089
  %v2091 = vsel %vm761, %v1996, -inf
  %2092 = vmax.xlane.f32.xlu0 %v2091
  %v2093 = vpop.xlane.xlu0 %2092
  %v2094 = vsub.f32 %v1634, %v2000
  %v2095 = vsub.f32 %v1636, %v2003
  %v2096 = vsub.f32 %v1658, %v2006
  %v2097 = vsub.f32 %v1660, %v2009
  %v2098 = vsub.f32 %v1682, %v2012
  %v2099 = vsub.f32 %v1684, %v2015
  %v2100 = vsub.f32 %v1706, %v2018
  %v2101 = vsub.f32 %v1708, %v2021
  %v2102 = vsub.f32 %v1730, %v2024
  %v2103 = vsub.f32 %v1732, %v2027
  %v2104 = vsub.f32 %v1754, %v2030
  %v2105 = vsub.f32 %v1756, %v2033
  %v2106 = vsub.f32 %v1778, %v2036
  %v2107 = vsub.f32 %v1780, %v2039
  %v2108 = vsub.f32 %v1802, %v2042
  %v2109 = vsub.f32 %v1804, %v2045
  %v2110 = vsub.f32 %v1826, %v2048
  %v2111 = vsub.f32 %v1828, %v2051
  %v2112 = vsub.f32 %v1850, %v2054
  %v2113 = vsub.f32 %v1852, %v2057
  %v2114 = vsub.f32 %v1874, %v2060
  %v2115 = vsub.f32 %v1876, %v2063
  %v2116 = vsub.f32 %v1898, %v2066
  %v2117 = vsub.f32 %v1900, %v2069
  %v2118 = vsub.f32 %v1922, %v2072
  %v2119 = vsub.f32 %v1924, %v2075
  %v2120 = vsub.f32 %v1946, %v2078
  %v2121 = vsub.f32 %v1948, %v2081
  %v2122 = vsub.f32 %v1970, %v2084
  %v2123 = vsub.f32 %v1972, %v2087
  %v2124 = vsub.f32 %v1994, %v2090
  %v2125 = vsub.f32 %v1996, %v2093
  %v2126 = vmul.f32 %v2094, 1.442695
  %v2127 = vpow.pop %v2126
  %v2128 = vmul.f32 %v2095, 1.442695
  %v2129 = vpow.pop %v2128
  %v2130 = vmul.f32 %v2096, 1.442695
  %v2131 = vpow.pop %v2130
  %v2132 = vmul.f32 %v2097, 1.442695
  %v2133 = vpow.pop %v2132
  %v2134 = vmul.f32 %v2098, 1.442695
  %v2135 = vpow.pop %v2134
  %v2136 = vmul.f32 %v2099, 1.442695
  %v2137 = vpow.pop %v2136
  %v2138 = vmul.f32 %v2100, 1.442695
  %v2139 = vpow.pop %v2138
  %v2140 = vmul.f32 %v2101, 1.442695
  %v2141 = vpow.pop %v2140
  %v2142 = vmul.f32 %v2102, 1.442695
  %v2143 = vpow.pop %v2142
  %v2144 = vmul.f32 %v2103, 1.442695
  %v2145 = vpow.pop %v2144
  %v2146 = vmul.f32 %v2104, 1.442695
  %v2147 = vpow.pop %v2146
  %v2148 = vmul.f32 %v2105, 1.442695
  %v2149 = vpow.pop %v2148
  %v2150 = vmul.f32 %v2106, 1.442695
  %v2151 = vpow.pop %v2150
  %v2152 = vmul.f32 %v2107, 1.442695
  %v2153 = vpow.pop %v2152
  %v2154 = vmul.f32 %v2108, 1.442695
  %v2155 = vpow.pop %v2154
  %v2156 = vmul.f32 %v2109, 1.442695
  %v2157 = vpow.pop %v2156
  %v2158 = vmul.f32 %v2110, 1.442695
  %v2159 = vpow.pop %v2158
  %v2160 = vmul.f32 %v2111, 1.442695
  %v2161 = vpow.pop %v2160
  %v2162 = vmul.f32 %v2112, 1.442695
  %v2163 = vpow.pop %v2162
  %v2164 = vmul.f32 %v2113, 1.442695
  %v2165 = vpow.pop %v2164
  %v2166 = vmul.f32 %v2114, 1.442695
  %v2167 = vpow.pop %v2166
  %v2168 = vmul.f32 %v2115, 1.442695
  %v2169 = vpow.pop %v2168
  %v2170 = vmul.f32 %v2116, 1.442695
  %v2171 = vpow.pop %v2170
  %v2172 = vmul.f32 %v2117, 1.442695
  %v2173 = vpow.pop %v2172
  %v2174 = vmul.f32 %v2118, 1.442695
  %v2175 = vpow.pop %v2174
  %v2176 = vmul.f32 %v2119, 1.442695
  %v2177 = vpow.pop %v2176
  %v2178 = vmul.f32 %v2120, 1.442695
  %v2179 = vpow.pop %v2178
  %v2180 = vmul.f32 %v2121, 1.442695
  %v2181 = vpow.pop %v2180
  %v2182 = vmul.f32 %v2122, 1.442695
  %v2183 = vpow.pop %v2182
  %v2184 = vmul.f32 %v2123, 1.442695
  %v2185 = vpow.pop %v2184
  %v2186 = vmul.f32 %v2124, 1.442695
  %v2187 = vpow.pop %v2186
  %v2188 = vmul.f32 %v2125, 1.442695
  %v2189 = vpow.pop %v2188
  %v2190 = vsel %vm761, %v2127, 0.0
  %2191 = vadd.xlane.f32.xlu0 %v2190
  %v2192 = vpop.xlane.xlu0 %2191
  %v2193 = vsel %vm761, %v2129, 0.0
  %2194 = vadd.xlane.f32.xlu0 %v2193
  %v2195 = vpop.xlane.xlu0 %2194
  %v2196 = vsel %vm761, %v2131, 0.0
  %2197 = vadd.xlane.f32.xlu0 %v2196
  %v2198 = vpop.xlane.xlu0 %2197
  %v2199 = vsel %vm761, %v2133, 0.0
  %2200 = vadd.xlane.f32.xlu0 %v2199
  %v2201 = vpop.xlane.xlu0 %2200
  %v2202 = vsel %vm761, %v2135, 0.0
  %2203 = vadd.xlane.f32.xlu0 %v2202
  %v2204 = vpop.xlane.xlu0 %2203
  %v2205 = vsel %vm761, %v2137, 0.0
  %2206 = vadd.xlane.f32.xlu0 %v2205
  %v2207 = vpop.xlane.xlu0 %2206
  %v2208 = vsel %vm761, %v2139, 0.0
  %2209 = vadd.xlane.f32.xlu0 %v2208
  %v2210 = vpop.xlane.xlu0 %2209
  %v2211 = vsel %vm761, %v2141, 0.0
  %2212 = vadd.xlane.f32.xlu0 %v2211
  %v2213 = vpop.xlane.xlu0 %2212
  %v2214 = vsel %vm761, %v2143, 0.0
  %2215 = vadd.xlane.f32.xlu0 %v2214
  %v2216 = vpop.xlane.xlu0 %2215
  %v2217 = vsel %vm761, %v2145, 0.0
  %2218 = vadd.xlane.f32.xlu0 %v2217
  %v2219 = vpop.xlane.xlu0 %2218
  %v2220 = vsel %vm761, %v2147, 0.0
  %2221 = vadd.xlane.f32.xlu0 %v2220
  %v2222 = vpop.xlane.xlu0 %2221
  %v2223 = vsel %vm761, %v2149, 0.0
  %2224 = vadd.xlane.f32.xlu0 %v2223
  %v2225 = vpop.xlane.xlu0 %2224
  %v2226 = vsel %vm761, %v2151, 0.0
  %2227 = vadd.xlane.f32.xlu0 %v2226
  %v2228 = vpop.xlane.xlu0 %2227
  %v2229 = vsel %vm761, %v2153, 0.0
  %2230 = vadd.xlane.f32.xlu0 %v2229
  %v2231 = vpop.xlane.xlu0 %2230
  %v2232 = vsel %vm761, %v2155, 0.0
  %2233 = vadd.xlane.f32.xlu0 %v2232
  %v2234 = vpop.xlane.xlu0 %2233
  %v2235 = vsel %vm761, %v2157, 0.0
  %2236 = vadd.xlane.f32.xlu0 %v2235
  %v2237 = vpop.xlane.xlu0 %2236
  %v2238 = vsel %vm761, %v2159, 0.0
  %2239 = vadd.xlane.f32.xlu0 %v2238
  %v2240 = vpop.xlane.xlu0 %2239
  %v2241 = vsel %vm761, %v2161, 0.0
  %2242 = vadd.xlane.f32.xlu0 %v2241
  %v2243 = vpop.xlane.xlu0 %2242
  %v2244 = vsel %vm761, %v2163, 0.0
  %2245 = vadd.xlane.f32.xlu0 %v2244
  %v2246 = vpop.xlane.xlu0 %2245
  %v2247 = vsel %vm761, %v2165, 0.0
  %2248 = vadd.xlane.f32.xlu0 %v2247
  %v2249 = vpop.xlane.xlu0 %2248
  %v2250 = vsel %vm761, %v2167, 0.0
  %2251 = vadd.xlane.f32.xlu0 %v2250
  %v2252 = vpop.xlane.xlu0 %2251
  %v2253 = vsel %vm761, %v2169, 0.0
  %2254 = vadd.xlane.f32.xlu0 %v2253
  %v2255 = vpop.xlane.xlu0 %2254
  %v2256 = vsel %vm761, %v2171, 0.0
  %2257 = vadd.xlane.f32.xlu0 %v2256
  %v2258 = vpop.xlane.xlu0 %2257
  %v2259 = vsel %vm761, %v2173, 0.0
  %2260 = vadd.xlane.f32.xlu0 %v2259
  %v2261 = vpop.xlane.xlu0 %2260
  %v2262 = vsel %vm761, %v2175, 0.0
  %2263 = vadd.xlane.f32.xlu0 %v2262
  %v2264 = vpop.xlane.xlu0 %2263
  %v2265 = vsel %vm761, %v2177, 0.0
  %2266 = vadd.xlane.f32.xlu0 %v2265
  %v2267 = vpop.xlane.xlu0 %2266
  %v2268 = vsel %vm761, %v2179, 0.0
  %2269 = vadd.xlane.f32.xlu0 %v2268
  %v2270 = vpop.xlane.xlu0 %2269
  %v2271 = vsel %vm761, %v2181, 0.0
  %2272 = vadd.xlane.f32.xlu0 %v2271
  %v2273 = vpop.xlane.xlu0 %2272
  %v2274 = vsel %vm761, %v2183, 0.0
  %2275 = vadd.xlane.f32.xlu0 %v2274
  %v2276 = vpop.xlane.xlu0 %2275
  %v2277 = vsel %vm761, %v2185, 0.0
  %2278 = vadd.xlane.f32.xlu0 %v2277
  %v2279 = vpop.xlane.xlu0 %2278
  %v2280 = vsel %vm761, %v2187, 0.0
  %2281 = vadd.xlane.f32.xlu0 %v2280
  %v2282 = vpop.xlane.xlu0 %2281
  %v2283 = vsel %vm761, %v2189, 0.0
  %2284 = vadd.xlane.f32.xlu0 %v2283
  %v2285 = vpop.xlane.xlu0 %2284
  %v2286 = vpack.c.bf16 %v2127, %v2127
  %v2287 = vpack.c.bf16 %v2129, %v2129
  %v2288 = vpack.c.bf16 %v2131, %v2131
  %v2289 = vpack.c.bf16 %v2133, %v2133
  %v2290 = vpack.c.bf16 %v2135, %v2135
  %v2291 = vpack.c.bf16 %v2137, %v2137
  %v2292 = vpack.c.bf16 %v2139, %v2139
  %v2293 = vpack.c.bf16 %v2141, %v2141
  %v2294 = vpack.c.bf16 %v2143, %v2143
  %v2295 = vpack.c.bf16 %v2145, %v2145
  %v2296 = vpack.c.bf16 %v2147, %v2147
  %v2297 = vpack.c.bf16 %v2149, %v2149
  %v2298 = vpack.c.bf16 %v2151, %v2151
  %v2299 = vpack.c.bf16 %v2153, %v2153
  %v2300 = vpack.c.bf16 %v2155, %v2155
  %v2301 = vpack.c.bf16 %v2157, %v2157
  %v2302 = vpack.c.bf16 %v2159, %v2159
  %v2303 = vpack.c.bf16 %v2161, %v2161
  %v2304 = vpack.c.bf16 %v2163, %v2163
  %v2305 = vpack.c.bf16 %v2165, %v2165
  %v2306 = vpack.c.bf16 %v2167, %v2167
  %v2307 = vpack.c.bf16 %v2169, %v2169
  %v2308 = vpack.c.bf16 %v2171, %v2171
  %v2309 = vpack.c.bf16 %v2173, %v2173
  %v2310 = vpack.c.bf16 %v2175, %v2175
  %v2311 = vpack.c.bf16 %v2177, %v2177
  %v2312 = vpack.c.bf16 %v2179, %v2179
  %v2313 = vpack.c.bf16 %v2181, %v2181
  %v2314 = vpack.c.bf16 %v2183, %v2183
  %v2315 = vpack.c.bf16 %v2185, %v2185
  %v2316 = vpack.c.bf16 %v2187, %v2187
  %v2317 = vpack.c.bf16 %v2189, %v2189
  %v2320 = vunpack.c.l.b16 %v2286
  %v2321 = vunpack.c.l.b16 %v2287
  %v2322 = vpack.c.b16 %v2321, %v2320
  %2323 = vrot.lane.b32.xlu0 %v332, 56
  %v2324 = vpop.permute.xlu0 %2323
  %v2327 = vsel %vm761, %v2322, 0
  %2329 = vmatpush.bf16.msra.mxu0 0
  %2330 = vmatpush.bf16.msra.mxu0 0
  %2331 = vmatpush.bf16.msra.mxu0 0
  %2332 = vmatpush.bf16.msra.mxu0 0
  %2333 = vmatpush.bf16.msra.mxu0 0
  %2334 = vmatpush.bf16.msra.mxu0 0
  %2335 = vmatpush.bf16.msra.mxu0 0
  %2336 = vmatpush.bf16.msra.mxu0 %v2324
  %2337 = vmatmul.bf16.gmra.mxu0 %v2327
  %v2338 = vpop.f32.mrf.mxu0
  %v2339 = vadd.f32 0.0, %v2338
  %v2340 = vpop.f32.mrf.mxu0
  %v2341 = vadd.f32 0.0, %v2340
  %2342 = vdwg.mxu0
  %v2345 = vunpack.c.l.b16 %v2288
  %v2346 = vunpack.c.l.b16 %v2289
  %v2347 = vpack.c.b16 %v2346, %v2345
  %2348 = vrot.lane.b32.xlu0 %v360, 56
  %v2349 = vpop.permute.xlu0 %2348
  %v2352 = vsel %vm761, %v2347, 0
  %2354 = vmatpush.bf16.msra.mxu0 0
  %2355 = vmatpush.bf16.msra.mxu0 0
  %2356 = vmatpush.bf16.msra.mxu0 0
  %2357 = vmatpush.bf16.msra.mxu0 0
  %2358 = vmatpush.bf16.msra.mxu0 0
  %2359 = vmatpush.bf16.msra.mxu0 0
  %2360 = vmatpush.bf16.msra.mxu0 0
  %2361 = vmatpush.bf16.msra.mxu0 %v2349
  %2362 = vmatmul.bf16.gmra.mxu0 %v2352
  %v2363 = vpop.f32.mrf.mxu0
  %v2364 = vadd.f32 0.0, %v2363
  %v2365 = vpop.f32.mrf.mxu0
  %v2366 = vadd.f32 0.0, %v2365
  %2367 = vdwg.mxu0
  %v2370 = vunpack.c.l.b16 %v2290
  %v2371 = vunpack.c.l.b16 %v2291
  %v2372 = vpack.c.b16 %v2371, %v2370
  %2373 = vrot.lane.b32.xlu0 %v387, 56
  %v2374 = vpop.permute.xlu0 %2373
  %v2377 = vsel %vm761, %v2372, 0
  %2379 = vmatpush.bf16.msra.mxu0 0
  %2380 = vmatpush.bf16.msra.mxu0 0
  %2381 = vmatpush.bf16.msra.mxu0 0
  %2382 = vmatpush.bf16.msra.mxu0 0
  %2383 = vmatpush.bf16.msra.mxu0 0
  %2384 = vmatpush.bf16.msra.mxu0 0
  %2385 = vmatpush.bf16.msra.mxu0 0
  %2386 = vmatpush.bf16.msra.mxu0 %v2374
  %2387 = vmatmul.bf16.gmra.mxu0 %v2377
  %v2388 = vpop.f32.mrf.mxu0
  %v2389 = vadd.f32 0.0, %v2388
  %v2390 = vpop.f32.mrf.mxu0
  %v2391 = vadd.f32 0.0, %v2390
  %2392 = vdwg.mxu0
  %v2395 = vunpack.c.l.b16 %v2292
  %v2396 = vunpack.c.l.b16 %v2293
  %v2397 = vpack.c.b16 %v2396, %v2395
  %2398 = vrot.lane.b32.xlu0 %v414, 56
  %v2399 = vpop.permute.xlu0 %2398
  %v2402 = vsel %vm761, %v2397, 0
  %2404 = vmatpush.bf16.msra.mxu0 0
  %2405 = vmatpush.bf16.msra.mxu0 0
  %2406 = vmatpush.bf16.msra.mxu0 0
  %2407 = vmatpush.bf16.msra.mxu0 0
  %2408 = vmatpush.bf16.msra.mxu0 0
  %2409 = vmatpush.bf16.msra.mxu0 0
  %2410 = vmatpush.bf16.msra.mxu0 0
  %2411 = vmatpush.bf16.msra.mxu0 %v2399
  %2412 = vmatmul.bf16.gmra.mxu0 %v2402
  %v2413 = vpop.f32.mrf.mxu0
  %v2414 = vadd.f32 0.0, %v2413
  %v2415 = vpop.f32.mrf.mxu0
  %v2416 = vadd.f32 0.0, %v2415
  %2417 = vdwg.mxu0
  %v2420 = vunpack.c.l.b16 %v2294
  %v2421 = vunpack.c.l.b16 %v2295
  %v2422 = vpack.c.b16 %v2421, %v2420
  %2423 = vrot.lane.b32.xlu0 %v441, 56
  %v2424 = vpop.permute.xlu0 %2423
  %v2427 = vsel %vm761, %v2422, 0
  %2429 = vmatpush.bf16.msra.mxu0 0
  %2430 = vmatpush.bf16.msra.mxu0 0
  %2431 = vmatpush.bf16.msra.mxu0 0
  %2432 = vmatpush.bf16.msra.mxu0 0
  %2433 = vmatpush.bf16.msra.mxu0 0
  %2434 = vmatpush.bf16.msra.mxu0 0
  %2435 = vmatpush.bf16.msra.mxu0 0
  %2436 = vmatpush.bf16.msra.mxu0 %v2424
  %2437 = vmatmul.bf16.gmra.mxu0 %v2427
  %v2438 = vpop.f32.mrf.mxu0
  %v2439 = vadd.f32 0.0, %v2438
  %v2440 = vpop.f32.mrf.mxu0
  %v2441 = vadd.f32 0.0, %v2440
  %2442 = vdwg.mxu0
  %v2445 = vunpack.c.l.b16 %v2296
  %v2446 = vunpack.c.l.b16 %v2297
  %v2447 = vpack.c.b16 %v2446, %v2445
  %2448 = vrot.lane.b32.xlu0 %v468, 56
  %v2449 = vpop.permute.xlu0 %2448
  %v2452 = vsel %vm761, %v2447, 0
  %2454 = vmatpush.bf16.msra.mxu0 0
  %2455 = vmatpush.bf16.msra.mxu0 0
  %2456 = vmatpush.bf16.msra.mxu0 0
  %2457 = vmatpush.bf16.msra.mxu0 0
  %2458 = vmatpush.bf16.msra.mxu0 0
  %2459 = vmatpush.bf16.msra.mxu0 0
  %2460 = vmatpush.bf16.msra.mxu0 0
  %2461 = vmatpush.bf16.msra.mxu0 %v2449
  %2462 = vmatmul.bf16.gmra.mxu0 %v2452
  %v2463 = vpop.f32.mrf.mxu0
  %v2464 = vadd.f32 0.0, %v2463
  %v2465 = vpop.f32.mrf.mxu0
  %v2466 = vadd.f32 0.0, %v2465
  %2467 = vdwg.mxu0
  %v2470 = vunpack.c.l.b16 %v2298
  %v2471 = vunpack.c.l.b16 %v2299
  %v2472 = vpack.c.b16 %v2471, %v2470
  %2473 = vrot.lane.b32.xlu0 %v495, 56
  %v2474 = vpop.permute.xlu0 %2473
  %v2477 = vsel %vm761, %v2472, 0
  %2479 = vmatpush.bf16.msra.mxu0 0
  %2480 = vmatpush.bf16.msra.mxu0 0
  %2481 = vmatpush.bf16.msra.mxu0 0
  %2482 = vmatpush.bf16.msra.mxu0 0
  %2483 = vmatpush.bf16.msra.mxu0 0
  %2484 = vmatpush.bf16.msra.mxu0 0
  %2485 = vmatpush.bf16.msra.mxu0 0
  %2486 = vmatpush.bf16.msra.mxu0 %v2474
  %2487 = vmatmul.bf16.gmra.mxu0 %v2477
  %v2488 = vpop.f32.mrf.mxu0
  %v2489 = vadd.f32 0.0, %v2488
  %v2490 = vpop.f32.mrf.mxu0
  %v2491 = vadd.f32 0.0, %v2490
  %2492 = vdwg.mxu0
  %v2495 = vunpack.c.l.b16 %v2300
  %v2496 = vunpack.c.l.b16 %v2301
  %v2497 = vpack.c.b16 %v2496, %v2495
  %2498 = vrot.lane.b32.xlu0 %v522, 56
  %v2499 = vpop.permute.xlu0 %2498
  %v2502 = vsel %vm761, %v2497, 0
  %2504 = vmatpush.bf16.msra.mxu0 0
  %2505 = vmatpush.bf16.msra.mxu0 0
  %2506 = vmatpush.bf16.msra.mxu0 0
  %2507 = vmatpush.bf16.msra.mxu0 0
  %2508 = vmatpush.bf16.msra.mxu0 0
  %2509 = vmatpush.bf16.msra.mxu0 0
  %2510 = vmatpush.bf16.msra.mxu0 0
  %2511 = vmatpush.bf16.msra.mxu0 %v2499
  %2512 = vmatmul.bf16.gmra.mxu0 %v2502
  %v2513 = vpop.f32.mrf.mxu0
  %v2514 = vadd.f32 0.0, %v2513
  %v2515 = vpop.f32.mrf.mxu0
  %v2516 = vadd.f32 0.0, %v2515
  %2517 = vdwg.mxu0
  %v2520 = vunpack.c.l.b16 %v2302
  %v2521 = vunpack.c.l.b16 %v2303
  %v2522 = vpack.c.b16 %v2521, %v2520
  %2523 = vrot.lane.b32.xlu0 %v549, 56
  %v2524 = vpop.permute.xlu0 %2523
  %v2527 = vsel %vm761, %v2522, 0
  %2529 = vmatpush.bf16.msra.mxu0 0
  %2530 = vmatpush.bf16.msra.mxu0 0
  %2531 = vmatpush.bf16.msra.mxu0 0
  %2532 = vmatpush.bf16.msra.mxu0 0
  %2533 = vmatpush.bf16.msra.mxu0 0
  %2534 = vmatpush.bf16.msra.mxu0 0
  %2535 = vmatpush.bf16.msra.mxu0 0
  %2536 = vmatpush.bf16.msra.mxu0 %v2524
  %2537 = vmatmul.bf16.gmra.mxu0 %v2527
  %v2538 = vpop.f32.mrf.mxu0
  %v2539 = vadd.f32 0.0, %v2538
  %v2540 = vpop.f32.mrf.mxu0
  %v2541 = vadd.f32 0.0, %v2540
  %2542 = vdwg.mxu0
  %v2545 = vunpack.c.l.b16 %v2304
  %v2546 = vunpack.c.l.b16 %v2305
  %v2547 = vpack.c.b16 %v2546, %v2545
  %2548 = vrot.lane.b32.xlu0 %v576, 56
  %v2549 = vpop.permute.xlu0 %2548
  %v2552 = vsel %vm761, %v2547, 0
  %2554 = vmatpush.bf16.msra.mxu0 0
  %2555 = vmatpush.bf16.msra.mxu0 0
  %2556 = vmatpush.bf16.msra.mxu0 0
  %2557 = vmatpush.bf16.msra.mxu0 0
  %2558 = vmatpush.bf16.msra.mxu0 0
  %2559 = vmatpush.bf16.msra.mxu0 0
  %2560 = vmatpush.bf16.msra.mxu0 0
  %2561 = vmatpush.bf16.msra.mxu0 %v2549
  %2562 = vmatmul.bf16.gmra.mxu0 %v2552
  %v2563 = vpop.f32.mrf.mxu0
  %v2564 = vadd.f32 0.0, %v2563
  %v2565 = vpop.f32.mrf.mxu0
  %v2566 = vadd.f32 0.0, %v2565
  %2567 = vdwg.mxu0
  %v2570 = vunpack.c.l.b16 %v2306
  %v2571 = vunpack.c.l.b16 %v2307
  %v2572 = vpack.c.b16 %v2571, %v2570
  %2573 = vrot.lane.b32.xlu0 %v603, 56
  %v2574 = vpop.permute.xlu0 %2573
  %v2577 = vsel %vm761, %v2572, 0
  %2579 = vmatpush.bf16.msra.mxu0 0
  %2580 = vmatpush.bf16.msra.mxu0 0
  %2581 = vmatpush.bf16.msra.mxu0 0
  %2582 = vmatpush.bf16.msra.mxu0 0
  %2583 = vmatpush.bf16.msra.mxu0 0
  %2584 = vmatpush.bf16.msra.mxu0 0
  %2585 = vmatpush.bf16.msra.mxu0 0
  %2586 = vmatpush.bf16.msra.mxu0 %v2574
  %2587 = vmatmul.bf16.gmra.mxu0 %v2577
  %v2588 = vpop.f32.mrf.mxu0
  %v2589 = vadd.f32 0.0, %v2588
  %v2590 = vpop.f32.mrf.mxu0
  %v2591 = vadd.f32 0.0, %v2590
  %2592 = vdwg.mxu0
  %v2595 = vunpack.c.l.b16 %v2308
  %v2596 = vunpack.c.l.b16 %v2309
  %v2597 = vpack.c.b16 %v2596, %v2595
  %2598 = vrot.lane.b32.xlu0 %v630, 56
  %v2599 = vpop.permute.xlu0 %2598
  %v2602 = vsel %vm761, %v2597, 0
  %2604 = vmatpush.bf16.msra.mxu0 0
  %2605 = vmatpush.bf16.msra.mxu0 0
  %2606 = vmatpush.bf16.msra.mxu0 0
  %2607 = vmatpush.bf16.msra.mxu0 0
  %2608 = vmatpush.bf16.msra.mxu0 0
  %2609 = vmatpush.bf16.msra.mxu0 0
  %2610 = vmatpush.bf16.msra.mxu0 0
  %2611 = vmatpush.bf16.msra.mxu0 %v2599
  %2612 = vmatmul.bf16.gmra.mxu0 %v2602
  %v2613 = vpop.f32.mrf.mxu0
  %v2614 = vadd.f32 0.0, %v2613
  %v2615 = vpop.f32.mrf.mxu0
  %v2616 = vadd.f32 0.0, %v2615
  %2617 = vdwg.mxu0
  %v2620 = vunpack.c.l.b16 %v2310
  %v2621 = vunpack.c.l.b16 %v2311
  %v2622 = vpack.c.b16 %v2621, %v2620
  %2623 = vrot.lane.b32.xlu0 %v657, 56
  %v2624 = vpop.permute.xlu0 %2623
  %v2627 = vsel %vm761, %v2622, 0
  %2629 = vmatpush.bf16.msra.mxu0 0
  %2630 = vmatpush.bf16.msra.mxu0 0
  %2631 = vmatpush.bf16.msra.mxu0 0
  %2632 = vmatpush.bf16.msra.mxu0 0
  %2633 = vmatpush.bf16.msra.mxu0 0
  %2634 = vmatpush.bf16.msra.mxu0 0
  %2635 = vmatpush.bf16.msra.mxu0 0
  %2636 = vmatpush.bf16.msra.mxu0 %v2624
  %2637 = vmatmul.bf16.gmra.mxu0 %v2627
  %v2638 = vpop.f32.mrf.mxu0
  %v2639 = vadd.f32 0.0, %v2638
  %v2640 = vpop.f32.mrf.mxu0
  %v2641 = vadd.f32 0.0, %v2640
  %2642 = vdwg.mxu0
  %v2645 = vunpack.c.l.b16 %v2312
  %v2646 = vunpack.c.l.b16 %v2313
  %v2647 = vpack.c.b16 %v2646, %v2645
  %2648 = vrot.lane.b32.xlu0 %v684, 56
  %v2649 = vpop.permute.xlu0 %2648
  %v2652 = vsel %vm761, %v2647, 0
  %2654 = vmatpush.bf16.msra.mxu0 0
  %2655 = vmatpush.bf16.msra.mxu0 0
  %2656 = vmatpush.bf16.msra.mxu0 0
  %2657 = vmatpush.bf16.msra.mxu0 0
  %2658 = vmatpush.bf16.msra.mxu0 0
  %2659 = vmatpush.bf16.msra.mxu0 0
  %2660 = vmatpush.bf16.msra.mxu0 0
  %2661 = vmatpush.bf16.msra.mxu0 %v2649
  %2662 = vmatmul.bf16.gmra.mxu0 %v2652
  %v2663 = vpop.f32.mrf.mxu0
  %v2664 = vadd.f32 0.0, %v2663
  %v2665 = vpop.f32.mrf.mxu0
  %v2666 = vadd.f32 0.0, %v2665
  %2667 = vdwg.mxu0
  %v2670 = vunpack.c.l.b16 %v2314
  %v2671 = vunpack.c.l.b16 %v2315
  %v2672 = vpack.c.b16 %v2671, %v2670
  %2673 = vrot.lane.b32.xlu0 %v711, 56
  %v2674 = vpop.permute.xlu0 %2673
  %v2677 = vsel %vm761, %v2672, 0
  %2679 = vmatpush.bf16.msra.mxu0 0
  %2680 = vmatpush.bf16.msra.mxu0 0
  %2681 = vmatpush.bf16.msra.mxu0 0
  %2682 = vmatpush.bf16.msra.mxu0 0
  %2683 = vmatpush.bf16.msra.mxu0 0
  %2684 = vmatpush.bf16.msra.mxu0 0
  %2685 = vmatpush.bf16.msra.mxu0 0
  %2686 = vmatpush.bf16.msra.mxu0 %v2674
  %2687 = vmatmul.bf16.gmra.mxu0 %v2677
  %v2688 = vpop.f32.mrf.mxu0
  %v2689 = vadd.f32 0.0, %v2688
  %v2690 = vpop.f32.mrf.mxu0
  %v2691 = vadd.f32 0.0, %v2690
  %2692 = vdwg.mxu0
  %v2695 = vunpack.c.l.b16 %v2316
  %v2696 = vunpack.c.l.b16 %v2317
  %v2697 = vpack.c.b16 %v2696, %v2695
  %2698 = vrot.lane.b32.xlu0 %v738, 56
  %v2699 = vpop.permute.xlu0 %2698
  %v2702 = vsel %vm761, %v2697, 0
  %2704 = vmatpush.bf16.msra.mxu0 0
  %2705 = vmatpush.bf16.msra.mxu0 0
  %2706 = vmatpush.bf16.msra.mxu0 0
  %2707 = vmatpush.bf16.msra.mxu0 0
  %2708 = vmatpush.bf16.msra.mxu0 0
  %2709 = vmatpush.bf16.msra.mxu0 0
  %2710 = vmatpush.bf16.msra.mxu0 0
  %2711 = vmatpush.bf16.msra.mxu0 %v2699
  %2712 = vmatmul.bf16.gmra.mxu0 %v2702
  %v2713 = vpop.f32.mrf.mxu0
  %v2714 = vadd.f32 0.0, %v2713
  %v2715 = vpop.f32.mrf.mxu0
  %v2716 = vadd.f32 0.0, %v2715
  %2717 = vdwg.mxu0
  %v2718 = vrcp.pop %v2192
  %v2719 = vrcp.pop %v2195
  %v2720 = vrcp.pop %v2198
  %v2721 = vrcp.pop %v2201
  %v2722 = vrcp.pop %v2204
  %v2723 = vrcp.pop %v2207
  %v2724 = vrcp.pop %v2210
  %v2725 = vrcp.pop %v2213
  %v2726 = vrcp.pop %v2216
  %v2727 = vrcp.pop %v2219
  %v2728 = vrcp.pop %v2222
  %v2729 = vrcp.pop %v2225
  %v2730 = vrcp.pop %v2228
  %v2731 = vrcp.pop %v2231
  %v2732 = vrcp.pop %v2234
  %v2733 = vrcp.pop %v2237
  %v2734 = vrcp.pop %v2240
  %v2735 = vrcp.pop %v2243
  %v2736 = vrcp.pop %v2246
  %v2737 = vrcp.pop %v2249
  %v2738 = vrcp.pop %v2252
  %v2739 = vrcp.pop %v2255
  %v2740 = vrcp.pop %v2258
  %v2741 = vrcp.pop %v2261
  %v2742 = vrcp.pop %v2264
  %v2743 = vrcp.pop %v2267
  %v2744 = vrcp.pop %v2270
  %v2745 = vrcp.pop %v2273
  %v2746 = vrcp.pop %v2276
  %v2747 = vrcp.pop %v2279
  %v2748 = vrcp.pop %v2282
  %v2749 = vrcp.pop %v2285
  %v2750 = vmul.f32 %v2339, %v2718
  %v2751 = vmul.f32 %v2341, %v2719
  %v2752 = vmul.f32 %v2364, %v2720
  %v2753 = vmul.f32 %v2366, %v2721
  %v2754 = vmul.f32 %v2389, %v2722
  %v2755 = vmul.f32 %v2391, %v2723
  %v2756 = vmul.f32 %v2414, %v2724
  %v2757 = vmul.f32 %v2416, %v2725
  %v2758 = vmul.f32 %v2439, %v2726
  %v2759 = vmul.f32 %v2441, %v2727
  %v2760 = vmul.f32 %v2464, %v2728
  %v2761 = vmul.f32 %v2466, %v2729
  %v2762 = vmul.f32 %v2489, %v2730
  %v2763 = vmul.f32 %v2491, %v2731
  %v2764 = vmul.f32 %v2514, %v2732
  %v2765 = vmul.f32 %v2516, %v2733
  %v2766 = vmul.f32 %v2539, %v2734
  %v2767 = vmul.f32 %v2541, %v2735
  %v2768 = vmul.f32 %v2564, %v2736
  %v2769 = vmul.f32 %v2566, %v2737
  %v2770 = vmul.f32 %v2589, %v2738
  %v2771 = vmul.f32 %v2591, %v2739
  %v2772 = vmul.f32 %v2614, %v2740
  %v2773 = vmul.f32 %v2616, %v2741
  %v2774 = vmul.f32 %v2639, %v2742
  %v2775 = vmul.f32 %v2641, %v2743
  %v2776 = vmul.f32 %v2664, %v2744
  %v2777 = vmul.f32 %v2666, %v2745
  %v2778 = vmul.f32 %v2689, %v2746
  %v2779 = vmul.f32 %v2691, %v2747
  %v2780 = vmul.f32 %v2714, %v2748
  %v2781 = vmul.f32 %v2716, %v2749
  %v2782 = vpack.c.bf16 %v2750, %v2750
  %v2783 = vpack.c.bf16 %v2751, %v2751
  %v2784 = vpack.c.bf16 %v2752, %v2752
  %v2785 = vpack.c.bf16 %v2753, %v2753
  %v2786 = vpack.c.bf16 %v2754, %v2754
  %v2787 = vpack.c.bf16 %v2755, %v2755
  %v2788 = vpack.c.bf16 %v2756, %v2756
  %v2789 = vpack.c.bf16 %v2757, %v2757
  %v2790 = vpack.c.bf16 %v2758, %v2758
  %v2791 = vpack.c.bf16 %v2759, %v2759
  %v2792 = vpack.c.bf16 %v2760, %v2760
  %v2793 = vpack.c.bf16 %v2761, %v2761
  %v2794 = vpack.c.bf16 %v2762, %v2762
  %v2795 = vpack.c.bf16 %v2763, %v2763
  %v2796 = vpack.c.bf16 %v2764, %v2764
  %v2797 = vpack.c.bf16 %v2765, %v2765
  %v2798 = vpack.c.bf16 %v2766, %v2766
  %v2799 = vpack.c.bf16 %v2767, %v2767
  %v2800 = vpack.c.bf16 %v2768, %v2768
  %v2801 = vpack.c.bf16 %v2769, %v2769
  %v2802 = vpack.c.bf16 %v2770, %v2770
  %v2803 = vpack.c.bf16 %v2771, %v2771
  %v2804 = vpack.c.bf16 %v2772, %v2772
  %v2805 = vpack.c.bf16 %v2773, %v2773
  %v2806 = vpack.c.bf16 %v2774, %v2774
  %v2807 = vpack.c.bf16 %v2775, %v2775
  %v2808 = vpack.c.bf16 %v2776, %v2776
  %v2809 = vpack.c.bf16 %v2777, %v2777
  %v2810 = vpack.c.bf16 %v2778, %v2778
  %v2811 = vpack.c.bf16 %v2779, %v2779
  %v2812 = vpack.c.bf16 %v2780, %v2780
  %v2813 = vpack.c.bf16 %v2781, %v2781
  %2846 = vrot.lane.b32.xlu0 %v2782, 8
  %v2847 = vpop.permute.xlu0 %2846
  %2848 = vrot.lane.b32.xlu0 %v2783, 8
  %v2849 = vpop.permute.xlu0 %2848
  %2850 = vrot.lane.b32.xlu0 %v2784, 8
  %v2851 = vpop.permute.xlu0 %2850
  %2852 = vrot.lane.b32.xlu0 %v2785, 8
  %v2853 = vpop.permute.xlu0 %2852
  %2854 = vrot.lane.b32.xlu0 %v2786, 8
  %v2855 = vpop.permute.xlu0 %2854
  %2856 = vrot.lane.b32.xlu0 %v2787, 8
  %v2857 = vpop.permute.xlu0 %2856
  %2858 = vrot.lane.b32.xlu0 %v2788, 8
  %v2859 = vpop.permute.xlu0 %2858
  %2860 = vrot.lane.b32.xlu0 %v2789, 8
  %v2861 = vpop.permute.xlu0 %2860
  %2862 = vrot.lane.b32.xlu0 %v2790, 8
  %v2863 = vpop.permute.xlu0 %2862
  %2864 = vrot.lane.b32.xlu0 %v2791, 8
  %v2865 = vpop.permute.xlu0 %2864
  %2866 = vrot.lane.b32.xlu0 %v2792, 8
  %v2867 = vpop.permute.xlu0 %2866
  %2868 = vrot.lane.b32.xlu0 %v2793, 8
  %v2869 = vpop.permute.xlu0 %2868
  %2870 = vrot.lane.b32.xlu0 %v2794, 8
  %v2871 = vpop.permute.xlu0 %2870
  %2872 = vrot.lane.b32.xlu0 %v2795, 8
  %v2873 = vpop.permute.xlu0 %2872
  %2874 = vrot.lane.b32.xlu0 %v2796, 8
  %v2875 = vpop.permute.xlu0 %2874
  %2876 = vrot.lane.b32.xlu0 %v2797, 8
  %v2877 = vpop.permute.xlu0 %2876
  %2878 = vrot.lane.b32.xlu0 %v2798, 8
  %v2879 = vpop.permute.xlu0 %2878
  %2880 = vrot.lane.b32.xlu0 %v2799, 8
  %v2881 = vpop.permute.xlu0 %2880
  %2882 = vrot.lane.b32.xlu0 %v2800, 8
  %v2883 = vpop.permute.xlu0 %2882
  %2884 = vrot.lane.b32.xlu0 %v2801, 8
  %v2885 = vpop.permute.xlu0 %2884
  %2886 = vrot.lane.b32.xlu0 %v2802, 8
  %v2887 = vpop.permute.xlu0 %2886
  %2888 = vrot.lane.b32.xlu0 %v2803, 8
  %v2889 = vpop.permute.xlu0 %2888
  %2890 = vrot.lane.b32.xlu0 %v2804, 8
  %v2891 = vpop.permute.xlu0 %2890
  %2892 = vrot.lane.b32.xlu0 %v2805, 8
  %v2893 = vpop.permute.xlu0 %2892
  %2894 = vrot.lane.b32.xlu0 %v2806, 8
  %v2895 = vpop.permute.xlu0 %2894
  %2896 = vrot.lane.b32.xlu0 %v2807, 8
  %v2897 = vpop.permute.xlu0 %2896
  %2898 = vrot.lane.b32.xlu0 %v2808, 8
  %v2899 = vpop.permute.xlu0 %2898
  %2900 = vrot.lane.b32.xlu0 %v2809, 8
  %v2901 = vpop.permute.xlu0 %2900
  %2902 = vrot.lane.b32.xlu0 %v2810, 8
  %v2903 = vpop.permute.xlu0 %2902
  %2904 = vrot.lane.b32.xlu0 %v2811, 8
  %v2905 = vpop.permute.xlu0 %2904
  %2906 = vrot.lane.b32.xlu0 %v2812, 8
  %v2907 = vpop.permute.xlu0 %2906
  %2908 = vrot.lane.b32.xlu0 %v2813, 8
  %v2909 = vpop.permute.xlu0 %2908
  %vm2942 = vcmask 126016
  %2943 = vst.msk [vmem:[#allocation2] sm:$0xf] %vm2942, %v2847
  %2944 = vst.msk [vmem:[#allocation2 + $0x4] sm:$0xf] %vm2942, %v2849
  %2945 = vst.msk [vmem:[#allocation2 + $0x8] sm:$0xf] %vm2942, %v2851
  %2946 = vst.msk [vmem:[#allocation2 + $0xc] sm:$0xf] %vm2942, %v2853
  %2947 = vst.msk [vmem:[#allocation2 + $0x10] sm:$0xf] %vm2942, %v2855
  %2948 = vst.msk [vmem:[#allocation2 + $0x14] sm:$0xf] %vm2942, %v2857
  %2949 = vst.msk [vmem:[#allocation2 + $0x18] sm:$0xf] %vm2942, %v2859
  %2950 = vst.msk [vmem:[#allocation2 + $0x1c] sm:$0xf] %vm2942, %v2861
  %2951 = vst.msk [vmem:[#allocation2 + $0x20] sm:$0xf] %vm2942, %v2863
  %2952 = vst.msk [vmem:[#allocation2 + $0x24] sm:$0xf] %vm2942, %v2865
  %2953 = vst.msk [vmem:[#allocation2 + $0x28] sm:$0xf] %vm2942, %v2867
  %2954 = vst.msk [vmem:[#allocation2 + $0x2c] sm:$0xf] %vm2942, %v2869
  %2955 = vst.msk [vmem:[#allocation2 + $0x30] sm:$0xf] %vm2942, %v2871
  %2956 = vst.msk [vmem:[#allocation2 + $0x34] sm:$0xf] %vm2942, %v2873
  %2957 = vst.msk [vmem:[#allocation2 + $0x38] sm:$0xf] %vm2942, %v2875
  %2958 = vst.msk [vmem:[#allocation2 + $0x3c] sm:$0xf] %vm2942, %v2877
  %2959 = vst.msk [vmem:[#allocation2 + $0x40] sm:$0xf] %vm2942, %v2879
  %2960 = vst.msk [vmem:[#allocation2 + $0x44] sm:$0xf] %vm2942, %v2881
  %2961 = vst.msk [vmem:[#allocation2 + $0x48] sm:$0xf] %vm2942, %v2883
  %2962 = vst.msk [vmem:[#allocation2 + $0x4c] sm:$0xf] %vm2942, %v2885
  %2963 = vst.msk [vmem:[#allocation2 + $0x50] sm:$0xf] %vm2942, %v2887
  %2964 = vst.msk [vmem:[#allocation2 + $0x54] sm:$0xf] %vm2942, %v2889
  %2965 = vst.msk [vmem:[#allocation2 + $0x58] sm:$0xf] %vm2942, %v2891
  %2966 = vst.msk [vmem:[#allocation2 + $0x5c] sm:$0xf] %vm2942, %v2893
  %2967 = vst.msk [vmem:[#allocation2 + $0x60] sm:$0xf] %vm2942, %v2895
  %2968 = vst.msk [vmem:[#allocation2 + $0x64] sm:$0xf] %vm2942, %v2897
  %2969 = vst.msk [vmem:[#allocation2 + $0x68] sm:$0xf] %vm2942, %v2899
  %2970 = vst.msk [vmem:[#allocation2 + $0x6c] sm:$0xf] %vm2942, %v2901
  %2971 = vst.msk [vmem:[#allocation2 + $0x70] sm:$0xf] %vm2942, %v2903
  %2972 = vst.msk [vmem:[#allocation2 + $0x74] sm:$0xf] %vm2942, %v2905
  %2973 = vst.msk [vmem:[#allocation2 + $0x78] sm:$0xf] %vm2942, %v2907
  %2974 = vst.msk [vmem:[#allocation2 + $0x7c] sm:$0xf] %vm2942, %v2909
  %s2975 = scalar_lea.vmem %s5, 32
  %v2976 = vld [vmem:[%s2975] sm:$0xff]
  %v2977 = vld [vmem:[%s2975 + $0x8] sm:$0xff]
  %2978 = vrot.lane.b32.xlu0 %v332, 112
  %v2979 = vpop.permute.xlu0 %2978
  %2980 = vrot.lane.b32.xlu0 %v332, 80
  %v2981 = vpop.permute.xlu0 %2980
  %v2983 = vsel %vm335, %v2979, 0
  %v2986 = vsel %vm335, %v2981, 0
  %2988 = vmatpush.bf16.xpose.msra.mxu0 0
  %2989 = vmatpush.bf16.xpose.msra.mxu0 0
  %2990 = vmatpush.bf16.xpose.msra.mxu0 0
  %2991 = vmatpush.bf16.xpose.msra.mxu0 0
  %2992 = vmatpush.bf16.xpose.msra.mxu0 0
  %2993 = vmatpush.bf16.xpose.msra.mxu0 0
  %2994 = vmatpush.bf16.xpose.msra.mxu0 0
  %2995 = vmatpush.bf16.xpose.msra.mxu0 %v2986
  %2996 = vmatmul.bf16.gmra.mxu0 %v2983
  %v2997 = vpop.f32.mrf.mxu0
  %v2998 = vadd.f32 %v2976, %v2997
  %v2999 = vpop.f32.mrf.mxu0
  %v3000 = vadd.f32 %v2977, %v2999
  %3001 = vdwg.mxu0
  %3002 = vrot.lane.b32.xlu0 %v360, 112
  %v3003 = vpop.permute.xlu0 %3002
  %3004 = vrot.lane.b32.xlu0 %v360, 80
  %v3005 = vpop.permute.xlu0 %3004
  %v3007 = vsel %vm335, %v3003, 0
  %v3010 = vsel %vm335, %v3005, 0
  %3012 = vmatpush.bf16.xpose.msra.mxu0 0
  %3013 = vmatpush.bf16.xpose.msra.mxu0 0
  %3014 = vmatpush.bf16.xpose.msra.mxu0 0
  %3015 = vmatpush.bf16.xpose.msra.mxu0 0
  %3016 = vmatpush.bf16.xpose.msra.mxu0 0
  %3017 = vmatpush.bf16.xpose.msra.mxu0 0
  %3018 = vmatpush.bf16.xpose.msra.mxu0 0
  %3019 = vmatpush.bf16.xpose.msra.mxu0 %v3010
  %3020 = vmatmul.bf16.gmra.mxu0 %v3007
  %v3021 = vpop.f32.mrf.mxu0
  %v3022 = vadd.f32 %v2976, %v3021
  %v3023 = vpop.f32.mrf.mxu0
  %v3024 = vadd.f32 %v2977, %v3023
  %3025 = vdwg.mxu0
  %3026 = vrot.lane.b32.xlu0 %v387, 112
  %v3027 = vpop.permute.xlu0 %3026
  %3028 = vrot.lane.b32.xlu0 %v387, 80
  %v3029 = vpop.permute.xlu0 %3028
  %v3031 = vsel %vm335, %v3027, 0
  %v3034 = vsel %vm335, %v3029, 0
  %3036 = vmatpush.bf16.xpose.msra.mxu0 0
  %3037 = vmatpush.bf16.xpose.msra.mxu0 0
  %3038 = vmatpush.bf16.xpose.msra.mxu0 0
  %3039 = vmatpush.bf16.xpose.msra.mxu0 0
  %3040 = vmatpush.bf16.xpose.msra.mxu0 0
  %3041 = vmatpush.bf16.xpose.msra.mxu0 0
  %3042 = vmatpush.bf16.xpose.msra.mxu0 0
  %3043 = vmatpush.bf16.xpose.msra.mxu0 %v3034
  %3044 = vmatmul.bf16.gmra.mxu0 %v3031
  %v3045 = vpop.f32.mrf.mxu0
  %v3046 = vadd.f32 %v2976, %v3045
  %v3047 = vpop.f32.mrf.mxu0
  %v3048 = vadd.f32 %v2977, %v3047
  %3049 = vdwg.mxu0
  %3050 = vrot.lane.b32.xlu0 %v414, 112
  %v3051 = vpop.permute.xlu0 %3050
  %3052 = vrot.lane.b32.xlu0 %v414, 80
  %v3053 = vpop.permute.xlu0 %3052
  %v3055 = vsel %vm335, %v3051, 0
  %v3058 = vsel %vm335, %v3053, 0
  %3060 = vmatpush.bf16.xpose.msra.mxu0 0
  %3061 = vmatpush.bf16.xpose.msra.mxu0 0
  %3062 = vmatpush.bf16.xpose.msra.mxu0 0
  %3063 = vmatpush.bf16.xpose.msra.mxu0 0
  %3064 = vmatpush.bf16.xpose.msra.mxu0 0
  %3065 = vmatpush.bf16.xpose.msra.mxu0 0
  %3066 = vmatpush.bf16.xpose.msra.mxu0 0
  %3067 = vmatpush.bf16.xpose.msra.mxu0 %v3058
  %3068 = vmatmul.bf16.gmra.mxu0 %v3055
  %v3069 = vpop.f32.mrf.mxu0
  %v3070 = vadd.f32 %v2976, %v3069
  %v3071 = vpop.f32.mrf.mxu0
  %v3072 = vadd.f32 %v2977, %v3071
  %3073 = vdwg.mxu0
  %3074 = vrot.lane.b32.xlu0 %v441, 112
  %v3075 = vpop.permute.xlu0 %3074
  %3076 = vrot.lane.b32.xlu0 %v441, 80
  %v3077 = vpop.permute.xlu0 %3076
  %v3079 = vsel %vm335, %v3075, 0
  %v3082 = vsel %vm335, %v3077, 0
  %3084 = vmatpush.bf16.xpose.msra.mxu0 0
  %3085 = vmatpush.bf16.xpose.msra.mxu0 0
  %3086 = vmatpush.bf16.xpose.msra.mxu0 0
  %3087 = vmatpush.bf16.xpose.msra.mxu0 0
  %3088 = vmatpush.bf16.xpose.msra.mxu0 0
  %3089 = vmatpush.bf16.xpose.msra.mxu0 0
  %3090 = vmatpush.bf16.xpose.msra.mxu0 0
  %3091 = vmatpush.bf16.xpose.msra.mxu0 %v3082
  %3092 = vmatmul.bf16.gmra.mxu0 %v3079
  %v3093 = vpop.f32.mrf.mxu0
  %v3094 = vadd.f32 %v2976, %v3093
  %v3095 = vpop.f32.mrf.mxu0
  %v3096 = vadd.f32 %v2977, %v3095
  %3097 = vdwg.mxu0
  %3098 = vrot.lane.b32.xlu0 %v468, 112
  %v3099 = vpop.permute.xlu0 %3098
  %3100 = vrot.lane.b32.xlu0 %v468, 80
  %v3101 = vpop.permute.xlu0 %3100
  %v3103 = vsel %vm335, %v3099, 0
  %v3106 = vsel %vm335, %v3101, 0
  %3108 = vmatpush.bf16.xpose.msra.mxu0 0
  %3109 = vmatpush.bf16.xpose.msra.mxu0 0
  %3110 = vmatpush.bf16.xpose.msra.mxu0 0
  %3111 = vmatpush.bf16.xpose.msra.mxu0 0
  %3112 = vmatpush.bf16.xpose.msra.mxu0 0
  %3113 = vmatpush.bf16.xpose.msra.mxu0 0
  %3114 = vmatpush.bf16.xpose.msra.mxu0 0
  %3115 = vmatpush.bf16.xpose.msra.mxu0 %v3106
  %3116 = vmatmul.bf16.gmra.mxu0 %v3103
  %v3117 = vpop.f32.mrf.mxu0
  %v3118 = vadd.f32 %v2976, %v3117
  %v3119 = vpop.f32.mrf.mxu0
  %v3120 = vadd.f32 %v2977, %v3119
  %3121 = vdwg.mxu0
  %3122 = vrot.lane.b32.xlu0 %v495, 112
  %v3123 = vpop.permute.xlu0 %3122
  %3124 = vrot.lane.b32.xlu0 %v495, 80
  %v3125 = vpop.permute.xlu0 %3124
  %v3127 = vsel %vm335, %v3123, 0
  %v3130 = vsel %vm335, %v3125, 0
  %3132 = vmatpush.bf16.xpose.msra.mxu0 0
  %3133 = vmatpush.bf16.xpose.msra.mxu0 0
  %3134 = vmatpush.bf16.xpose.msra.mxu0 0
  %3135 = vmatpush.bf16.xpose.msra.mxu0 0
  %3136 = vmatpush.bf16.xpose.msra.mxu0 0
  %3137 = vmatpush.bf16.xpose.msra.mxu0 0
  %3138 = vmatpush.bf16.xpose.msra.mxu0 0
  %3139 = vmatpush.bf16.xpose.msra.mxu0 %v3130
  %3140 = vmatmul.bf16.gmra.mxu0 %v3127
  %v3141 = vpop.f32.mrf.mxu0
  %v3142 = vadd.f32 %v2976, %v3141
  %v3143 = vpop.f32.mrf.mxu0
  %v3144 = vadd.f32 %v2977, %v3143
  %3145 = vdwg.mxu0
  %3146 = vrot.lane.b32.xlu0 %v522, 112
  %v3147 = vpop.permute.xlu0 %3146
  %3148 = vrot.lane.b32.xlu0 %v522, 80
  %v3149 = vpop.permute.xlu0 %3148
  %v3151 = vsel %vm335, %v3147, 0
  %v3154 = vsel %vm335, %v3149, 0
  %3156 = vmatpush.bf16.xpose.msra.mxu0 0
  %3157 = vmatpush.bf16.xpose.msra.mxu0 0
  %3158 = vmatpush.bf16.xpose.msra.mxu0 0
  %3159 = vmatpush.bf16.xpose.msra.mxu0 0
  %3160 = vmatpush.bf16.xpose.msra.mxu0 0
  %3161 = vmatpush.bf16.xpose.msra.mxu0 0
  %3162 = vmatpush.bf16.xpose.msra.mxu0 0
  %3163 = vmatpush.bf16.xpose.msra.mxu0 %v3154
  %3164 = vmatmul.bf16.gmra.mxu0 %v3151
  %v3165 = vpop.f32.mrf.mxu0
  %v3166 = vadd.f32 %v2976, %v3165
  %v3167 = vpop.f32.mrf.mxu0
  %v3168 = vadd.f32 %v2977, %v3167
  %3169 = vdwg.mxu0
  %3170 = vrot.lane.b32.xlu0 %v549, 112
  %v3171 = vpop.permute.xlu0 %3170
  %3172 = vrot.lane.b32.xlu0 %v549, 80
  %v3173 = vpop.permute.xlu0 %3172
  %v3175 = vsel %vm335, %v3171, 0
  %v3178 = vsel %vm335, %v3173, 0
  %3180 = vmatpush.bf16.xpose.msra.mxu0 0
  %3181 = vmatpush.bf16.xpose.msra.mxu0 0
  %3182 = vmatpush.bf16.xpose.msra.mxu0 0
  %3183 = vmatpush.bf16.xpose.msra.mxu0 0
  %3184 = vmatpush.bf16.xpose.msra.mxu0 0
  %3185 = vmatpush.bf16.xpose.msra.mxu0 0
  %3186 = vmatpush.bf16.xpose.msra.mxu0 0
  %3187 = vmatpush.bf16.xpose.msra.mxu0 %v3178
  %3188 = vmatmul.bf16.gmra.mxu0 %v3175
  %v3189 = vpop.f32.mrf.mxu0
  %v3190 = vadd.f32 %v2976, %v3189
  %v3191 = vpop.f32.mrf.mxu0
  %v3192 = vadd.f32 %v2977, %v3191
  %3193 = vdwg.mxu0
  %3194 = vrot.lane.b32.xlu0 %v576, 112
  %v3195 = vpop.permute.xlu0 %3194
  %3196 = vrot.lane.b32.xlu0 %v576, 80
  %v3197 = vpop.permute.xlu0 %3196
  %v3199 = vsel %vm335, %v3195, 0
  %v3202 = vsel %vm335, %v3197, 0
  %3204 = vmatpush.bf16.xpose.msra.mxu0 0
  %3205 = vmatpush.bf16.xpose.msra.mxu0 0
  %3206 = vmatpush.bf16.xpose.msra.mxu0 0
  %3207 = vmatpush.bf16.xpose.msra.mxu0 0
  %3208 = vmatpush.bf16.xpose.msra.mxu0 0
  %3209 = vmatpush.bf16.xpose.msra.mxu0 0
  %3210 = vmatpush.bf16.xpose.msra.mxu0 0
  %3211 = vmatpush.bf16.xpose.msra.mxu0 %v3202
  %3212 = vmatmul.bf16.gmra.mxu0 %v3199
  %v3213 = vpop.f32.mrf.mxu0
  %v3214 = vadd.f32 %v2976, %v3213
  %v3215 = vpop.f32.mrf.mxu0
  %v3216 = vadd.f32 %v2977, %v3215
  %3217 = vdwg.mxu0
  %3218 = vrot.lane.b32.xlu0 %v603, 112
  %v3219 = vpop.permute.xlu0 %3218
  %3220 = vrot.lane.b32.xlu0 %v603, 80
  %v3221 = vpop.permute.xlu0 %3220
  %v3223 = vsel %vm335, %v3219, 0
  %v3226 = vsel %vm335, %v3221, 0
  %3228 = vmatpush.bf16.xpose.msra.mxu0 0
  %3229 = vmatpush.bf16.xpose.msra.mxu0 0
  %3230 = vmatpush.bf16.xpose.msra.mxu0 0
  %3231 = vmatpush.bf16.xpose.msra.mxu0 0
  %3232 = vmatpush.bf16.xpose.msra.mxu0 0
  %3233 = vmatpush.bf16.xpose.msra.mxu0 0
  %3234 = vmatpush.bf16.xpose.msra.mxu0 0
  %3235 = vmatpush.bf16.xpose.msra.mxu0 %v3226
  %3236 = vmatmul.bf16.gmra.mxu0 %v3223
  %v3237 = vpop.f32.mrf.mxu0
  %v3238 = vadd.f32 %v2976, %v3237
  %v3239 = vpop.f32.mrf.mxu0
  %v3240 = vadd.f32 %v2977, %v3239
  %3241 = vdwg.mxu0
  %3242 = vrot.lane.b32.xlu0 %v630, 112
  %v3243 = vpop.permute.xlu0 %3242
  %3244 = vrot.lane.b32.xlu0 %v630, 80
  %v3245 = vpop.permute.xlu0 %3244
  %v3247 = vsel %vm335, %v3243, 0
  %v3250 = vsel %vm335, %v3245, 0
  %3252 = vmatpush.bf16.xpose.msra.mxu0 0
  %3253 = vmatpush.bf16.xpose.msra.mxu0 0
  %3254 = vmatpush.bf16.xpose.msra.mxu0 0
  %3255 = vmatpush.bf16.xpose.msra.mxu0 0
  %3256 = vmatpush.bf16.xpose.msra.mxu0 0
  %3257 = vmatpush.bf16.xpose.msra.mxu0 0
  %3258 = vmatpush.bf16.xpose.msra.mxu0 0
  %3259 = vmatpush.bf16.xpose.msra.mxu0 %v3250
  %3260 = vmatmul.bf16.gmra.mxu0 %v3247
  %v3261 = vpop.f32.mrf.mxu0
  %v3262 = vadd.f32 %v2976, %v3261
  %v3263 = vpop.f32.mrf.mxu0
  %v3264 = vadd.f32 %v2977, %v3263
  %3265 = vdwg.mxu0
  %3266 = vrot.lane.b32.xlu0 %v657, 112
  %v3267 = vpop.permute.xlu0 %3266
  %3268 = vrot.lane.b32.xlu0 %v657, 80
  %v3269 = vpop.permute.xlu0 %3268
  %v3271 = vsel %vm335, %v3267, 0
  %v3274 = vsel %vm335, %v3269, 0
  %3276 = vmatpush.bf16.xpose.msra.mxu0 0
  %3277 = vmatpush.bf16.xpose.msra.mxu0 0
  %3278 = vmatpush.bf16.xpose.msra.mxu0 0
  %3279 = vmatpush.bf16.xpose.msra.mxu0 0
  %3280 = vmatpush.bf16.xpose.msra.mxu0 0
  %3281 = vmatpush.bf16.xpose.msra.mxu0 0
  %3282 = vmatpush.bf16.xpose.msra.mxu0 0
  %3283 = vmatpush.bf16.xpose.msra.mxu0 %v3274
  %3284 = vmatmul.bf16.gmra.mxu0 %v3271
  %v3285 = vpop.f32.mrf.mxu0
  %v3286 = vadd.f32 %v2976, %v3285
  %v3287 = vpop.f32.mrf.mxu0
  %v3288 = vadd.f32 %v2977, %v3287
  %3289 = vdwg.mxu0
  %3290 = vrot.lane.b32.xlu0 %v684, 112
  %v3291 = vpop.permute.xlu0 %3290
  %3292 = vrot.lane.b32.xlu0 %v684, 80
  %v3293 = vpop.permute.xlu0 %3292
  %v3295 = vsel %vm335, %v3291, 0
  %v3298 = vsel %vm335, %v3293, 0
  %3300 = vmatpush.bf16.xpose.msra.mxu0 0
  %3301 = vmatpush.bf16.xpose.msra.mxu0 0
  %3302 = vmatpush.bf16.xpose.msra.mxu0 0
  %3303 = vmatpush.bf16.xpose.msra.mxu0 0
  %3304 = vmatpush.bf16.xpose.msra.mxu0 0
  %3305 = vmatpush.bf16.xpose.msra.mxu0 0
  %3306 = vmatpush.bf16.xpose.msra.mxu0 0
  %3307 = vmatpush.bf16.xpose.msra.mxu0 %v3298
  %3308 = vmatmul.bf16.gmra.mxu0 %v3295
  %v3309 = vpop.f32.mrf.mxu0
  %v3310 = vadd.f32 %v2976, %v3309
  %v3311 = vpop.f32.mrf.mxu0
  %v3312 = vadd.f32 %v2977, %v3311
  %3313 = vdwg.mxu0
  %3314 = vrot.lane.b32.xlu0 %v711, 112
  %v3315 = vpop.permute.xlu0 %3314
  %3316 = vrot.lane.b32.xlu0 %v711, 80
  %v3317 = vpop.permute.xlu0 %3316
  %v3319 = vsel %vm335, %v3315, 0
  %v3322 = vsel %vm335, %v3317, 0
  %3324 = vmatpush.bf16.xpose.msra.mxu0 0
  %3325 = vmatpush.bf16.xpose.msra.mxu0 0
  %3326 = vmatpush.bf16.xpose.msra.mxu0 0
  %3327 = vmatpush.bf16.xpose.msra.mxu0 0
  %3328 = vmatpush.bf16.xpose.msra.mxu0 0
  %3329 = vmatpush.bf16.xpose.msra.mxu0 0
  %3330 = vmatpush.bf16.xpose.msra.mxu0 0
  %3331 = vmatpush.bf16.xpose.msra.mxu0 %v3322
  %3332 = vmatmul.bf16.gmra.mxu0 %v3319
  %v3333 = vpop.f32.mrf.mxu0
  %v3334 = vadd.f32 %v2976, %v3333
  %v3335 = vpop.f32.mrf.mxu0
  %v3336 = vadd.f32 %v2977, %v3335
  %3337 = vdwg.mxu0
  %3338 = vrot.lane.b32.xlu0 %v738, 112
  %v3339 = vpop.permute.xlu0 %3338
  %3340 = vrot.lane.b32.xlu0 %v738, 80
  %v3341 = vpop.permute.xlu0 %3340
  %v3343 = vsel %vm335, %v3339, 0
  %v3346 = vsel %vm335, %v3341, 0
  %3348 = vmatpush.bf16.xpose.msra.mxu0 0
  %3349 = vmatpush.bf16.xpose.msra.mxu0 0
  %3350 = vmatpush.bf16.xpose.msra.mxu0 0
  %3351 = vmatpush.bf16.xpose.msra.mxu0 0
  %3352 = vmatpush.bf16.xpose.msra.mxu0 0
  %3353 = vmatpush.bf16.xpose.msra.mxu0 0
  %3354 = vmatpush.bf16.xpose.msra.mxu0 0
  %3355 = vmatpush.bf16.xpose.msra.mxu0 %v3346
  %3356 = vmatmul.bf16.gmra.mxu0 %v3343
  %v3357 = vpop.f32.mrf.mxu0
  %v3358 = vadd.f32 %v2976, %v3357
  %v3359 = vpop.f32.mrf.mxu0
  %v3360 = vadd.f32 %v2977, %v3359
  %3361 = vdwg.mxu0
  %v3362 = vsel %vm761, %v2998, -inf
  %3363 = vmax.xlane.f32.xlu0 %v3362
  %v3364 = vpop.xlane.xlu0 %3363
  %v3365 = vsel %vm761, %v3000, -inf
  %3366 = vmax.xlane.f32.xlu0 %v3365
  %v3367 = vpop.xlane.xlu0 %3366
  %v3368 = vsel %vm761, %v3022, -inf
  %3369 = vmax.xlane.f32.xlu0 %v3368
  %v3370 = vpop.xlane.xlu0 %3369
  %v3371 = vsel %vm761, %v3024, -inf
  %3372 = vmax.xlane.f32.xlu0 %v3371
  %v3373 = vpop.xlane.xlu0 %3372
  %v3374 = vsel %vm761, %v3046, -inf
  %3375 = vmax.xlane.f32.xlu0 %v3374
  %v3376 = vpop.xlane.xlu0 %3375
  %v3377 = vsel %vm761, %v3048, -inf
  %3378 = vmax.xlane.f32.xlu0 %v3377
  %v3379 = vpop.xlane.xlu0 %3378
  %v3380 = vsel %vm761, %v3070, -inf
  %3381 = vmax.xlane.f32.xlu0 %v3380
  %v3382 = vpop.xlane.xlu0 %3381
  %v3383 = vsel %vm761, %v3072, -inf
  %3384 = vmax.xlane.f32.xlu0 %v3383
  %v3385 = vpop.xlane.xlu0 %3384
  %v3386 = vsel %vm761, %v3094, -inf
  %3387 = vmax.xlane.f32.xlu0 %v3386
  %v3388 = vpop.xlane.xlu0 %3387
  %v3389 = vsel %vm761, %v3096, -inf
  %3390 = vmax.xlane.f32.xlu0 %v3389
  %v3391 = vpop.xlane.xlu0 %3390
  %v3392 = vsel %vm761, %v3118, -inf
  %3393 = vmax.xlane.f32.xlu0 %v3392
  %v3394 = vpop.xlane.xlu0 %3393
  %v3395 = vsel %vm761, %v3120, -inf
  %3396 = vmax.xlane.f32.xlu0 %v3395
  %v3397 = vpop.xlane.xlu0 %3396
  %v3398 = vsel %vm761, %v3142, -inf
  %3399 = vmax.xlane.f32.xlu0 %v3398
  %v3400 = vpop.xlane.xlu0 %3399
  %v3401 = vsel %vm761, %v3144, -inf
  %3402 = vmax.xlane.f32.xlu0 %v3401
  %v3403 = vpop.xlane.xlu0 %3402
  %v3404 = vsel %vm761, %v3166, -inf
  %3405 = vmax.xlane.f32.xlu0 %v3404
  %v3406 = vpop.xlane.xlu0 %3405
  %v3407 = vsel %vm761, %v3168, -inf
  %3408 = vmax.xlane.f32.xlu0 %v3407
  %v3409 = vpop.xlane.xlu0 %3408
  %v3410 = vsel %vm761, %v3190, -inf
  %3411 = vmax.xlane.f32.xlu0 %v3410
  %v3412 = vpop.xlane.xlu0 %3411
  %v3413 = vsel %vm761, %v3192, -inf
  %3414 = vmax.xlane.f32.xlu0 %v3413
  %v3415 = vpop.xlane.xlu0 %3414
  %v3416 = vsel %vm761, %v3214, -inf
  %3417 = vmax.xlane.f32.xlu0 %v3416
  %v3418 = vpop.xlane.xlu0 %3417
  %v3419 = vsel %vm761, %v3216, -inf
  %3420 = vmax.xlane.f32.xlu0 %v3419
  %v3421 = vpop.xlane.xlu0 %3420
  %v3422 = vsel %vm761, %v3238, -inf
  %3423 = vmax.xlane.f32.xlu0 %v3422
  %v3424 = vpop.xlane.xlu0 %3423
  %v3425 = vsel %vm761, %v3240, -inf
  %3426 = vmax.xlane.f32.xlu0 %v3425
  %v3427 = vpop.xlane.xlu0 %3426
  %v3428 = vsel %vm761, %v3262, -inf
  %3429 = vmax.xlane.f32.xlu0 %v3428
  %v3430 = vpop.xlane.xlu0 %3429
  %v3431 = vsel %vm761, %v3264, -inf
  %3432 = vmax.xlane.f32.xlu0 %v3431
  %v3433 = vpop.xlane.xlu0 %3432
  %v3434 = vsel %vm761, %v3286, -inf
  %3435 = vmax.xlane.f32.xlu0 %v3434
  %v3436 = vpop.xlane.xlu0 %3435
  %v3437 = vsel %vm761, %v3288, -inf
  %3438 = vmax.xlane.f32.xlu0 %v3437
  %v3439 = vpop.xlane.xlu0 %3438
  %v3440 = vsel %vm761, %v3310, -inf
  %3441 = vmax.xlane.f32.xlu0 %v3440
  %v3442 = vpop.xlane.xlu0 %3441
  %v3443 = vsel %vm761, %v3312, -inf
  %3444 = vmax.xlane.f32.xlu0 %v3443
  %v3445 = vpop.xlane.xlu0 %3444
  %v3446 = vsel %vm761, %v3334, -inf
  %3447 = vmax.xlane.f32.xlu0 %v3446
  %v3448 = vpop.xlane.xlu0 %3447
  %v3449 = vsel %vm761, %v3336, -inf
  %3450 = vmax.xlane.f32.xlu0 %v3449
  %v3451 = vpop.xlane.xlu0 %3450
  %v3452 = vsel %vm761, %v3358, -inf
  %3453 = vmax.xlane.f32.xlu0 %v3452
  %v3454 = vpop.xlane.xlu0 %3453
  %v3455 = vsel %vm761, %v3360, -inf
  %3456 = vmax.xlane.f32.xlu0 %v3455
  %v3457 = vpop.xlane.xlu0 %3456
  %v3458 = vsub.f32 %v2998, %v3364
  %v3459 = vsub.f32 %v3000, %v3367
  %v3460 = vsub.f32 %v3022, %v3370
  %v3461 = vsub.f32 %v3024, %v3373
  %v3462 = vsub.f32 %v3046, %v3376
  %v3463 = vsub.f32 %v3048, %v3379
  %v3464 = vsub.f32 %v3070, %v3382
  %v3465 = vsub.f32 %v3072, %v3385
  %v3466 = vsub.f32 %v3094, %v3388
  %v3467 = vsub.f32 %v3096, %v3391
  %v3468 = vsub.f32 %v3118, %v3394
  %v3469 = vsub.f32 %v3120, %v3397
  %v3470 = vsub.f32 %v3142, %v3400
  %v3471 = vsub.f32 %v3144, %v3403
  %v3472 = vsub.f32 %v3166, %v3406
  %v3473 = vsub.f32 %v3168, %v3409
  %v3474 = vsub.f32 %v3190, %v3412
  %v3475 = vsub.f32 %v3192, %v3415
  %v3476 = vsub.f32 %v3214, %v3418
  %v3477 = vsub.f32 %v3216, %v3421
  %v3478 = vsub.f32 %v3238, %v3424
  %v3479 = vsub.f32 %v3240, %v3427
  %v3480 = vsub.f32 %v3262, %v3430
  %v3481 = vsub.f32 %v3264, %v3433
  %v3482 = vsub.f32 %v3286, %v3436
  %v3483 = vsub.f32 %v3288, %v3439
  %v3484 = vsub.f32 %v3310, %v3442
  %v3485 = vsub.f32 %v3312, %v3445
  %v3486 = vsub.f32 %v3334, %v3448
  %v3487 = vsub.f32 %v3336, %v3451
  %v3488 = vsub.f32 %v3358, %v3454
  %v3489 = vsub.f32 %v3360, %v3457
  %v3490 = vmul.f32 %v3458, 1.442695
  %v3491 = vpow.pop %v3490
  %v3492 = vmul.f32 %v3459, 1.442695
  %v3493 = vpow.pop %v3492
  %v3494 = vmul.f32 %v3460, 1.442695
  %v3495 = vpow.pop %v3494
  %v3496 = vmul.f32 %v3461, 1.442695
  %v3497 = vpow.pop %v3496
  %v3498 = vmul.f32 %v3462, 1.442695
  %v3499 = vpow.pop %v3498
  %v3500 = vmul.f32 %v3463, 1.442695
  %v3501 = vpow.pop %v3500
  %v3502 = vmul.f32 %v3464, 1.442695
  %v3503 = vpow.pop %v3502
  %v3504 = vmul.f32 %v3465, 1.442695
  %v3505 = vpow.pop %v3504
  %v3506 = vmul.f32 %v3466, 1.442695
  %v3507 = vpow.pop %v3506
  %v3508 = vmul.f32 %v3467, 1.442695
  %v3509 = vpow.pop %v3508
  %v3510 = vmul.f32 %v3468, 1.442695
  %v3511 = vpow.pop %v3510
  %v3512 = vmul.f32 %v3469, 1.442695
  %v3513 = vpow.pop %v3512
  %v3514 = vmul.f32 %v3470, 1.442695
  %v3515 = vpow.pop %v3514
  %v3516 = vmul.f32 %v3471, 1.442695
  %v3517 = vpow.pop %v3516
  %v3518 = vmul.f32 %v3472, 1.442695
  %v3519 = vpow.pop %v3518
  %v3520 = vmul.f32 %v3473, 1.442695
  %v3521 = vpow.pop %v3520
  %v3522 = vmul.f32 %v3474, 1.442695
  %v3523 = vpow.pop %v3522
  %v3524 = vmul.f32 %v3475, 1.442695
  %v3525 = vpow.pop %v3524
  %v3526 = vmul.f32 %v3476, 1.442695
  %v3527 = vpow.pop %v3526
  %v3528 = vmul.f32 %v3477, 1.442695
  %v3529 = vpow.pop %v3528
  %v3530 = vmul.f32 %v3478, 1.442695
  %v3531 = vpow.pop %v3530
  %v3532 = vmul.f32 %v3479, 1.442695
  %v3533 = vpow.pop %v3532
  %v3534 = vmul.f32 %v3480, 1.442695
  %v3535 = vpow.pop %v3534
  %v3536 = vmul.f32 %v3481, 1.442695
  %v3537 = vpow.pop %v3536
  %v3538 = vmul.f32 %v3482, 1.442695
  %v3539 = vpow.pop %v3538
  %v3540 = vmul.f32 %v3483, 1.442695
  %v3541 = vpow.pop %v3540
  %v3542 = vmul.f32 %v3484, 1.442695
  %v3543 = vpow.pop %v3542
  %v3544 = vmul.f32 %v3485, 1.442695
  %v3545 = vpow.pop %v3544
  %v3546 = vmul.f32 %v3486, 1.442695
  %v3547 = vpow.pop %v3546
  %v3548 = vmul.f32 %v3487, 1.442695
  %v3549 = vpow.pop %v3548
  %v3550 = vmul.f32 %v3488, 1.442695
  %v3551 = vpow.pop %v3550
  %v3552 = vmul.f32 %v3489, 1.442695
  %v3553 = vpow.pop %v3552
  %v3554 = vsel %vm761, %v3491, 0.0
  %3555 = vadd.xlane.f32.xlu0 %v3554
  %v3556 = vpop.xlane.xlu0 %3555
  %v3557 = vsel %vm761, %v3493, 0.0
  %3558 = vadd.xlane.f32.xlu0 %v3557
  %v3559 = vpop.xlane.xlu0 %3558
  %v3560 = vsel %vm761, %v3495, 0.0
  %3561 = vadd.xlane.f32.xlu0 %v3560
  %v3562 = vpop.xlane.xlu0 %3561
  %v3563 = vsel %vm761, %v3497, 0.0
  %3564 = vadd.xlane.f32.xlu0 %v3563
  %v3565 = vpop.xlane.xlu0 %3564
  %v3566 = vsel %vm761, %v3499, 0.0
  %3567 = vadd.xlane.f32.xlu0 %v3566
  %v3568 = vpop.xlane.xlu0 %3567
  %v3569 = vsel %vm761, %v3501, 0.0
  %3570 = vadd.xlane.f32.xlu0 %v3569
  %v3571 = vpop.xlane.xlu0 %3570
  %v3572 = vsel %vm761, %v3503, 0.0
  %3573 = vadd.xlane.f32.xlu0 %v3572
  %v3574 = vpop.xlane.xlu0 %3573
  %v3575 = vsel %vm761, %v3505, 0.0
  %3576 = vadd.xlane.f32.xlu0 %v3575
  %v3577 = vpop.xlane.xlu0 %3576
  %v3578 = vsel %vm761, %v3507, 0.0
  %3579 = vadd.xlane.f32.xlu0 %v3578
  %v3580 = vpop.xlane.xlu0 %3579
  %v3581 = vsel %vm761, %v3509, 0.0
  %3582 = vadd.xlane.f32.xlu0 %v3581
  %v3583 = vpop.xlane.xlu0 %3582
  %v3584 = vsel %vm761, %v3511, 0.0
  %3585 = vadd.xlane.f32.xlu0 %v3584
  %v3586 = vpop.xlane.xlu0 %3585
  %v3587 = vsel %vm761, %v3513, 0.0
  %3588 = vadd.xlane.f32.xlu0 %v3587
  %v3589 = vpop.xlane.xlu0 %3588
  %v3590 = vsel %vm761, %v3515, 0.0
  %3591 = vadd.xlane.f32.xlu0 %v3590
  %v3592 = vpop.xlane.xlu0 %3591
  %v3593 = vsel %vm761, %v3517, 0.0
  %3594 = vadd.xlane.f32.xlu0 %v3593
  %v3595 = vpop.xlane.xlu0 %3594
  %v3596 = vsel %vm761, %v3519, 0.0
  %3597 = vadd.xlane.f32.xlu0 %v3596
  %v3598 = vpop.xlane.xlu0 %3597
  %v3599 = vsel %vm761, %v3521, 0.0
  %3600 = vadd.xlane.f32.xlu0 %v3599
  %v3601 = vpop.xlane.xlu0 %3600
  %v3602 = vsel %vm761, %v3523, 0.0
  %3603 = vadd.xlane.f32.xlu0 %v3602
  %v3604 = vpop.xlane.xlu0 %3603
  %v3605 = vsel %vm761, %v3525, 0.0
  %3606 = vadd.xlane.f32.xlu0 %v3605
  %v3607 = vpop.xlane.xlu0 %3606
  %v3608 = vsel %vm761, %v3527, 0.0
  %3609 = vadd.xlane.f32.xlu0 %v3608
  %v3610 = vpop.xlane.xlu0 %3609
  %v3611 = vsel %vm761, %v3529, 0.0
  %3612 = vadd.xlane.f32.xlu0 %v3611
  %v3613 = vpop.xlane.xlu0 %3612
  %v3614 = vsel %vm761, %v3531, 0.0
  %3615 = vadd.xlane.f32.xlu0 %v3614
  %v3616 = vpop.xlane.xlu0 %3615
  %v3617 = vsel %vm761, %v3533, 0.0
  %3618 = vadd.xlane.f32.xlu0 %v3617
  %v3619 = vpop.xlane.xlu0 %3618
  %v3620 = vsel %vm761, %v3535, 0.0
  %3621 = vadd.xlane.f32.xlu0 %v3620
  %v3622 = vpop.xlane.xlu0 %3621
  %v3623 = vsel %vm761, %v3537, 0.0
  %3624 = vadd.xlane.f32.xlu0 %v3623
  %v3625 = vpop.xlane.xlu0 %3624
  %v3626 = vsel %vm761, %v3539, 0.0
  %3627 = vadd.xlane.f32.xlu0 %v3626
  %v3628 = vpop.xlane.xlu0 %3627
  %v3629 = vsel %vm761, %v3541, 0.0
  %3630 = vadd.xlane.f32.xlu0 %v3629
  %v3631 = vpop.xlane.xlu0 %3630
  %v3632 = vsel %vm761, %v3543, 0.0
  %3633 = vadd.xlane.f32.xlu0 %v3632
  %v3634 = vpop.xlane.xlu0 %3633
  %v3635 = vsel %vm761, %v3545, 0.0
  %3636 = vadd.xlane.f32.xlu0 %v3635
  %v3637 = vpop.xlane.xlu0 %3636
  %v3638 = vsel %vm761, %v3547, 0.0
  %3639 = vadd.xlane.f32.xlu0 %v3638
  %v3640 = vpop.xlane.xlu0 %3639
  %v3641 = vsel %vm761, %v3549, 0.0
  %3642 = vadd.xlane.f32.xlu0 %v3641
  %v3643 = vpop.xlane.xlu0 %3642
  %v3644 = vsel %vm761, %v3551, 0.0
  %3645 = vadd.xlane.f32.xlu0 %v3644
  %v3646 = vpop.xlane.xlu0 %3645
  %v3647 = vsel %vm761, %v3553, 0.0
  %3648 = vadd.xlane.f32.xlu0 %v3647
  %v3649 = vpop.xlane.xlu0 %3648
  %v3650 = vpack.c.bf16 %v3491, %v3491
  %v3651 = vpack.c.bf16 %v3493, %v3493
  %v3652 = vpack.c.bf16 %v3495, %v3495
  %v3653 = vpack.c.bf16 %v3497, %v3497
  %v3654 = vpack.c.bf16 %v3499, %v3499
  %v3655 = vpack.c.bf16 %v3501, %v3501
  %v3656 = vpack.c.bf16 %v3503, %v3503
  %v3657 = vpack.c.bf16 %v3505, %v3505
  %v3658 = vpack.c.bf16 %v3507, %v3507
  %v3659 = vpack.c.bf16 %v3509, %v3509
  %v3660 = vpack.c.bf16 %v3511, %v3511
  %v3661 = vpack.c.bf16 %v3513, %v3513
  %v3662 = vpack.c.bf16 %v3515, %v3515
  %v3663 = vpack.c.bf16 %v3517, %v3517
  %v3664 = vpack.c.bf16 %v3519, %v3519
  %v3665 = vpack.c.bf16 %v3521, %v3521
  %v3666 = vpack.c.bf16 %v3523, %v3523
  %v3667 = vpack.c.bf16 %v3525, %v3525
  %v3668 = vpack.c.bf16 %v3527, %v3527
  %v3669 = vpack.c.bf16 %v3529, %v3529
  %v3670 = vpack.c.bf16 %v3531, %v3531
  %v3671 = vpack.c.bf16 %v3533, %v3533
  %v3672 = vpack.c.bf16 %v3535, %v3535
  %v3673 = vpack.c.bf16 %v3537, %v3537
  %v3674 = vpack.c.bf16 %v3539, %v3539
  %v3675 = vpack.c.bf16 %v3541, %v3541
  %v3676 = vpack.c.bf16 %v3543, %v3543
  %v3677 = vpack.c.bf16 %v3545, %v3545
  %v3678 = vpack.c.bf16 %v3547, %v3547
  %v3679 = vpack.c.bf16 %v3549, %v3549
  %v3680 = vpack.c.bf16 %v3551, %v3551
  %v3681 = vpack.c.bf16 %v3553, %v3553
  %v3684 = vunpack.c.l.b16 %v3650
  %v3685 = vunpack.c.l.b16 %v3651
  %v3686 = vpack.c.b16 %v3685, %v3684
  %3687 = vrot.lane.b32.xlu0 %v332, 48
  %v3688 = vpop.permute.xlu0 %3687
  %v3691 = vsel %vm761, %v3686, 0
  %3693 = vmatpush.bf16.msra.mxu0 0
  %3694 = vmatpush.bf16.msra.mxu0 0
  %3695 = vmatpush.bf16.msra.mxu0 0
  %3696 = vmatpush.bf16.msra.mxu0 0
  %3697 = vmatpush.bf16.msra.mxu0 0
  %3698 = vmatpush.bf16.msra.mxu0 0
  %3699 = vmatpush.bf16.msra.mxu0 0
  %3700 = vmatpush.bf16.msra.mxu0 %v3688
  %3701 = vmatmul.bf16.gmra.mxu0 %v3691
  %v3702 = vpop.f32.mrf.mxu0
  %v3703 = vadd.f32 0.0, %v3702
  %v3704 = vpop.f32.mrf.mxu0
  %v3705 = vadd.f32 0.0, %v3704
  %3706 = vdwg.mxu0
  %v3709 = vunpack.c.l.b16 %v3652
  %v3710 = vunpack.c.l.b16 %v3653
  %v3711 = vpack.c.b16 %v3710, %v3709
  %3712 = vrot.lane.b32.xlu0 %v360, 48
  %v3713 = vpop.permute.xlu0 %3712
  %v3716 = vsel %vm761, %v3711, 0
  %3718 = vmatpush.bf16.msra.mxu0 0
  %3719 = vmatpush.bf16.msra.mxu0 0
  %3720 = vmatpush.bf16.msra.mxu0 0
  %3721 = vmatpush.bf16.msra.mxu0 0
  %3722 = vmatpush.bf16.msra.mxu0 0
  %3723 = vmatpush.bf16.msra.mxu0 0
  %3724 = vmatpush.bf16.msra.mxu0 0
  %3725 = vmatpush.bf16.msra.mxu0 %v3713
  %3726 = vmatmul.bf16.gmra.mxu0 %v3716
  %v3727 = vpop.f32.mrf.mxu0
  %v3728 = vadd.f32 0.0, %v3727
  %v3729 = vpop.f32.mrf.mxu0
  %v3730 = vadd.f32 0.0, %v3729
  %3731 = vdwg.mxu0
  %v3734 = vunpack.c.l.b16 %v3654
  %v3735 = vunpack.c.l.b16 %v3655
  %v3736 = vpack.c.b16 %v3735, %v3734
  %3737 = vrot.lane.b32.xlu0 %v387, 48
  %v3738 = vpop.permute.xlu0 %3737
  %v3741 = vsel %vm761, %v3736, 0
  %3743 = vmatpush.bf16.msra.mxu0 0
  %3744 = vmatpush.bf16.msra.mxu0 0
  %3745 = vmatpush.bf16.msra.mxu0 0
  %3746 = vmatpush.bf16.msra.mxu0 0
  %3747 = vmatpush.bf16.msra.mxu0 0
  %3748 = vmatpush.bf16.msra.mxu0 0
  %3749 = vmatpush.bf16.msra.mxu0 0
  %3750 = vmatpush.bf16.msra.mxu0 %v3738
  %3751 = vmatmul.bf16.gmra.mxu0 %v3741
  %v3752 = vpop.f32.mrf.mxu0
  %v3753 = vadd.f32 0.0, %v3752
  %v3754 = vpop.f32.mrf.mxu0
  %v3755 = vadd.f32 0.0, %v3754
  %3756 = vdwg.mxu0
  %v3759 = vunpack.c.l.b16 %v3656
  %v3760 = vunpack.c.l.b16 %v3657
  %v3761 = vpack.c.b16 %v3760, %v3759
  %3762 = vrot.lane.b32.xlu0 %v414, 48
  %v3763 = vpop.permute.xlu0 %3762
  %v3766 = vsel %vm761, %v3761, 0
  %3768 = vmatpush.bf16.msra.mxu0 0
  %3769 = vmatpush.bf16.msra.mxu0 0
  %3770 = vmatpush.bf16.msra.mxu0 0
  %3771 = vmatpush.bf16.msra.mxu0 0
  %3772 = vmatpush.bf16.msra.mxu0 0
  %3773 = vmatpush.bf16.msra.mxu0 0
  %3774 = vmatpush.bf16.msra.mxu0 0
  %3775 = vmatpush.bf16.msra.mxu0 %v3763
  %3776 = vmatmul.bf16.gmra.mxu0 %v3766
  %v3777 = vpop.f32.mrf.mxu0
  %v3778 = vadd.f32 0.0, %v3777
  %v3779 = vpop.f32.mrf.mxu0
  %v3780 = vadd.f32 0.0, %v3779
  %3781 = vdwg.mxu0
  %v3784 = vunpack.c.l.b16 %v3658
  %v3785 = vunpack.c.l.b16 %v3659
  %v3786 = vpack.c.b16 %v3785, %v3784
  %3787 = vrot.lane.b32.xlu0 %v441, 48
  %v3788 = vpop.permute.xlu0 %3787
  %v3791 = vsel %vm761, %v3786, 0
  %3793 = vmatpush.bf16.msra.mxu0 0
  %3794 = vmatpush.bf16.msra.mxu0 0
  %3795 = vmatpush.bf16.msra.mxu0 0
  %3796 = vmatpush.bf16.msra.mxu0 0
  %3797 = vmatpush.bf16.msra.mxu0 0
  %3798 = vmatpush.bf16.msra.mxu0 0
  %3799 = vmatpush.bf16.msra.mxu0 0
  %3800 = vmatpush.bf16.msra.mxu0 %v3788
  %3801 = vmatmul.bf16.gmra.mxu0 %v3791
  %v3802 = vpop.f32.mrf.mxu0
  %v3803 = vadd.f32 0.0, %v3802
  %v3804 = vpop.f32.mrf.mxu0
  %v3805 = vadd.f32 0.0, %v3804
  %3806 = vdwg.mxu0
  %v3809 = vunpack.c.l.b16 %v3660
  %v3810 = vunpack.c.l.b16 %v3661
  %v3811 = vpack.c.b16 %v3810, %v3809
  %3812 = vrot.lane.b32.xlu0 %v468, 48
  %v3813 = vpop.permute.xlu0 %3812
  %v3816 = vsel %vm761, %v3811, 0
  %3818 = vmatpush.bf16.msra.mxu0 0
  %3819 = vmatpush.bf16.msra.mxu0 0
  %3820 = vmatpush.bf16.msra.mxu0 0
  %3821 = vmatpush.bf16.msra.mxu0 0
  %3822 = vmatpush.bf16.msra.mxu0 0
  %3823 = vmatpush.bf16.msra.mxu0 0
  %3824 = vmatpush.bf16.msra.mxu0 0
  %3825 = vmatpush.bf16.msra.mxu0 %v3813
  %3826 = vmatmul.bf16.gmra.mxu0 %v3816
  %v3827 = vpop.f32.mrf.mxu0
  %v3828 = vadd.f32 0.0, %v3827
  %v3829 = vpop.f32.mrf.mxu0
  %v3830 = vadd.f32 0.0, %v3829
  %3831 = vdwg.mxu0
  %v3834 = vunpack.c.l.b16 %v3662
  %v3835 = vunpack.c.l.b16 %v3663
  %v3836 = vpack.c.b16 %v3835, %v3834
  %3837 = vrot.lane.b32.xlu0 %v495, 48
  %v3838 = vpop.permute.xlu0 %3837
  %v3841 = vsel %vm761, %v3836, 0
  %3843 = vmatpush.bf16.msra.mxu0 0
  %3844 = vmatpush.bf16.msra.mxu0 0
  %3845 = vmatpush.bf16.msra.mxu0 0
  %3846 = vmatpush.bf16.msra.mxu0 0
  %3847 = vmatpush.bf16.msra.mxu0 0
  %3848 = vmatpush.bf16.msra.mxu0 0
  %3849 = vmatpush.bf16.msra.mxu0 0
  %3850 = vmatpush.bf16.msra.mxu0 %v3838
  %3851 = vmatmul.bf16.gmra.mxu0 %v3841
  %v3852 = vpop.f32.mrf.mxu0
  %v3853 = vadd.f32 0.0, %v3852
  %v3854 = vpop.f32.mrf.mxu0
  %v3855 = vadd.f32 0.0, %v3854
  %3856 = vdwg.mxu0
  %v3859 = vunpack.c.l.b16 %v3664
  %v3860 = vunpack.c.l.b16 %v3665
  %v3861 = vpack.c.b16 %v3860, %v3859
  %3862 = vrot.lane.b32.xlu0 %v522, 48
  %v3863 = vpop.permute.xlu0 %3862
  %v3866 = vsel %vm761, %v3861, 0
  %3868 = vmatpush.bf16.msra.mxu0 0
  %3869 = vmatpush.bf16.msra.mxu0 0
  %3870 = vmatpush.bf16.msra.mxu0 0
  %3871 = vmatpush.bf16.msra.mxu0 0
  %3872 = vmatpush.bf16.msra.mxu0 0
  %3873 = vmatpush.bf16.msra.mxu0 0
  %3874 = vmatpush.bf16.msra.mxu0 0
  %3875 = vmatpush.bf16.msra.mxu0 %v3863
  %3876 = vmatmul.bf16.gmra.mxu0 %v3866
  %v3877 = vpop.f32.mrf.mxu0
  %v3878 = vadd.f32 0.0, %v3877
  %v3879 = vpop.f32.mrf.mxu0
  %v3880 = vadd.f32 0.0, %v3879
  %3881 = vdwg.mxu0
  %v3884 = vunpack.c.l.b16 %v3666
  %v3885 = vunpack.c.l.b16 %v3667
  %v3886 = vpack.c.b16 %v3885, %v3884
  %3887 = vrot.lane.b32.xlu0 %v549, 48
  %v3888 = vpop.permute.xlu0 %3887
  %v3891 = vsel %vm761, %v3886, 0
  %3893 = vmatpush.bf16.msra.mxu0 0
  %3894 = vmatpush.bf16.msra.mxu0 0
  %3895 = vmatpush.bf16.msra.mxu0 0
  %3896 = vmatpush.bf16.msra.mxu0 0
  %3897 = vmatpush.bf16.msra.mxu0 0
  %3898 = vmatpush.bf16.msra.mxu0 0
  %3899 = vmatpush.bf16.msra.mxu0 0
  %3900 = vmatpush.bf16.msra.mxu0 %v3888
  %3901 = vmatmul.bf16.gmra.mxu0 %v3891
  %v3902 = vpop.f32.mrf.mxu0
  %v3903 = vadd.f32 0.0, %v3902
  %v3904 = vpop.f32.mrf.mxu0
  %v3905 = vadd.f32 0.0, %v3904
  %3906 = vdwg.mxu0
  %v3909 = vunpack.c.l.b16 %v3668
  %v3910 = vunpack.c.l.b16 %v3669
  %v3911 = vpack.c.b16 %v3910, %v3909
  %3912 = vrot.lane.b32.xlu0 %v576, 48
  %v3913 = vpop.permute.xlu0 %3912
  %v3916 = vsel %vm761, %v3911, 0
  %3918 = vmatpush.bf16.msra.mxu0 0
  %3919 = vmatpush.bf16.msra.mxu0 0
  %3920 = vmatpush.bf16.msra.mxu0 0
  %3921 = vmatpush.bf16.msra.mxu0 0
  %3922 = vmatpush.bf16.msra.mxu0 0
  %3923 = vmatpush.bf16.msra.mxu0 0
  %3924 = vmatpush.bf16.msra.mxu0 0
  %3925 = vmatpush.bf16.msra.mxu0 %v3913
  %3926 = vmatmul.bf16.gmra.mxu0 %v3916
  %v3927 = vpop.f32.mrf.mxu0
  %v3928 = vadd.f32 0.0, %v3927
  %v3929 = vpop.f32.mrf.mxu0
  %v3930 = vadd.f32 0.0, %v3929
  %3931 = vdwg.mxu0
  %v3934 = vunpack.c.l.b16 %v3670
  %v3935 = vunpack.c.l.b16 %v3671
  %v3936 = vpack.c.b16 %v3935, %v3934
  %3937 = vrot.lane.b32.xlu0 %v603, 48
  %v3938 = vpop.permute.xlu0 %3937
  %v3941 = vsel %vm761, %v3936, 0
  %3943 = vmatpush.bf16.msra.mxu0 0
  %3944 = vmatpush.bf16.msra.mxu0 0
  %3945 = vmatpush.bf16.msra.mxu0 0
  %3946 = vmatpush.bf16.msra.mxu0 0
  %3947 = vmatpush.bf16.msra.mxu0 0
  %3948 = vmatpush.bf16.msra.mxu0 0
  %3949 = vmatpush.bf16.msra.mxu0 0
  %3950 = vmatpush.bf16.msra.mxu0 %v3938
  %3951 = vmatmul.bf16.gmra.mxu0 %v3941
  %v3952 = vpop.f32.mrf.mxu0
  %v3953 = vadd.f32 0.0, %v3952
  %v3954 = vpop.f32.mrf.mxu0
  %v3955 = vadd.f32 0.0, %v3954
  %3956 = vdwg.mxu0
  %v3959 = vunpack.c.l.b16 %v3672
  %v3960 = vunpack.c.l.b16 %v3673
  %v3961 = vpack.c.b16 %v3960, %v3959
  %3962 = vrot.lane.b32.xlu0 %v630, 48
  %v3963 = vpop.permute.xlu0 %3962
  %v3966 = vsel %vm761, %v3961, 0
  %3968 = vmatpush.bf16.msra.mxu0 0
  %3969 = vmatpush.bf16.msra.mxu0 0
  %3970 = vmatpush.bf16.msra.mxu0 0
  %3971 = vmatpush.bf16.msra.mxu0 0
  %3972 = vmatpush.bf16.msra.mxu0 0
  %3973 = vmatpush.bf16.msra.mxu0 0
  %3974 = vmatpush.bf16.msra.mxu0 0
  %3975 = vmatpush.bf16.msra.mxu0 %v3963
  %3976 = vmatmul.bf16.gmra.mxu0 %v3966
  %v3977 = vpop.f32.mrf.mxu0
  %v3978 = vadd.f32 0.0, %v3977
  %v3979 = vpop.f32.mrf.mxu0
  %v3980 = vadd.f32 0.0, %v3979
  %3981 = vdwg.mxu0
  %v3984 = vunpack.c.l.b16 %v3674
  %v3985 = vunpack.c.l.b16 %v3675
  %v3986 = vpack.c.b16 %v3985, %v3984
  %3987 = vrot.lane.b32.xlu0 %v657, 48
  %v3988 = vpop.permute.xlu0 %3987
  %v3991 = vsel %vm761, %v3986, 0
  %3993 = vmatpush.bf16.msra.mxu0 0
  %3994 = vmatpush.bf16.msra.mxu0 0
  %3995 = vmatpush.bf16.msra.mxu0 0
  %3996 = vmatpush.bf16.msra.mxu0 0
  %3997 = vmatpush.bf16.msra.mxu0 0
  %3998 = vmatpush.bf16.msra.mxu0 0
  %3999 = vmatpush.bf16.msra.mxu0 0
  %4000 = vmatpush.bf16.msra.mxu0 %v3988
  %4001 = vmatmul.bf16.gmra.mxu0 %v3991
  %v4002 = vpop.f32.mrf.mxu0
  %v4003 = vadd.f32 0.0, %v4002
  %v4004 = vpop.f32.mrf.mxu0
  %v4005 = vadd.f32 0.0, %v4004
  %4006 = vdwg.mxu0
  %v4009 = vunpack.c.l.b16 %v3676
  %v4010 = vunpack.c.l.b16 %v3677
  %v4011 = vpack.c.b16 %v4010, %v4009
  %4012 = vrot.lane.b32.xlu0 %v684, 48
  %v4013 = vpop.permute.xlu0 %4012
  %v4016 = vsel %vm761, %v4011, 0
  %4018 = vmatpush.bf16.msra.mxu0 0
  %4019 = vmatpush.bf16.msra.mxu0 0
  %4020 = vmatpush.bf16.msra.mxu0 0
  %4021 = vmatpush.bf16.msra.mxu0 0
  %4022 = vmatpush.bf16.msra.mxu0 0
  %4023 = vmatpush.bf16.msra.mxu0 0
  %4024 = vmatpush.bf16.msra.mxu0 0
  %4025 = vmatpush.bf16.msra.mxu0 %v4013
  %4026 = vmatmul.bf16.gmra.mxu0 %v4016
  %v4027 = vpop.f32.mrf.mxu0
  %v4028 = vadd.f32 0.0, %v4027
  %v4029 = vpop.f32.mrf.mxu0
  %v4030 = vadd.f32 0.0, %v4029
  %4031 = vdwg.mxu0
  %v4034 = vunpack.c.l.b16 %v3678
  %v4035 = vunpack.c.l.b16 %v3679
  %v4036 = vpack.c.b16 %v4035, %v4034
  %4037 = vrot.lane.b32.xlu0 %v711, 48
  %v4038 = vpop.permute.xlu0 %4037
  %v4041 = vsel %vm761, %v4036, 0
  %4043 = vmatpush.bf16.msra.mxu0 0
  %4044 = vmatpush.bf16.msra.mxu0 0
  %4045 = vmatpush.bf16.msra.mxu0 0
  %4046 = vmatpush.bf16.msra.mxu0 0
  %4047 = vmatpush.bf16.msra.mxu0 0
  %4048 = vmatpush.bf16.msra.mxu0 0
  %4049 = vmatpush.bf16.msra.mxu0 0
  %4050 = vmatpush.bf16.msra.mxu0 %v4038
  %4051 = vmatmul.bf16.gmra.mxu0 %v4041
  %v4052 = vpop.f32.mrf.mxu0
  %v4053 = vadd.f32 0.0, %v4052
  %v4054 = vpop.f32.mrf.mxu0
  %v4055 = vadd.f32 0.0, %v4054
  %4056 = vdwg.mxu0
  %v4059 = vunpack.c.l.b16 %v3680
  %v4060 = vunpack.c.l.b16 %v3681
  %v4061 = vpack.c.b16 %v4060, %v4059
  %4062 = vrot.lane.b32.xlu0 %v738, 48
  %v4063 = vpop.permute.xlu0 %4062
  %v4066 = vsel %vm761, %v4061, 0
  %4068 = vmatpush.bf16.msra.mxu0 0
  %4069 = vmatpush.bf16.msra.mxu0 0
  %4070 = vmatpush.bf16.msra.mxu0 0
  %4071 = vmatpush.bf16.msra.mxu0 0
  %4072 = vmatpush.bf16.msra.mxu0 0
  %4073 = vmatpush.bf16.msra.mxu0 0
  %4074 = vmatpush.bf16.msra.mxu0 0
  %4075 = vmatpush.bf16.msra.mxu0 %v4063
  %4076 = vmatmul.bf16.gmra.mxu0 %v4066
  %v4077 = vpop.f32.mrf.mxu0
  %v4078 = vadd.f32 0.0, %v4077
  %v4079 = vpop.f32.mrf.mxu0
  %v4080 = vadd.f32 0.0, %v4079
  %4081 = vdwg.mxu0
  %v4082 = vrcp.pop %v3556
  %v4083 = vrcp.pop %v3559
  %v4084 = vrcp.pop %v3562
  %v4085 = vrcp.pop %v3565
  %v4086 = vrcp.pop %v3568
  %v4087 = vrcp.pop %v3571
  %v4088 = vrcp.pop %v3574
  %v4089 = vrcp.pop %v3577
  %v4090 = vrcp.pop %v3580
  %v4091 = vrcp.pop %v3583
  %v4092 = vrcp.pop %v3586
  %v4093 = vrcp.pop %v3589
  %v4094 = vrcp.pop %v3592
  %v4095 = vrcp.pop %v3595
  %v4096 = vrcp.pop %v3598
  %v4097 = vrcp.pop %v3601
  %v4098 = vrcp.pop %v3604
  %v4099 = vrcp.pop %v3607
  %v4100 = vrcp.pop %v3610
  %v4101 = vrcp.pop %v3613
  %v4102 = vrcp.pop %v3616
  %v4103 = vrcp.pop %v3619
  %v4104 = vrcp.pop %v3622
  %v4105 = vrcp.pop %v3625
  %v4106 = vrcp.pop %v3628
  %v4107 = vrcp.pop %v3631
  %v4108 = vrcp.pop %v3634
  %v4109 = vrcp.pop %v3637
  %v4110 = vrcp.pop %v3640
  %v4111 = vrcp.pop %v3643
  %v4112 = vrcp.pop %v3646
  %v4113 = vrcp.pop %v3649
  %v4114 = vmul.f32 %v3703, %v4082
  %v4115 = vmul.f32 %v3705, %v4083
  %v4116 = vmul.f32 %v3728, %v4084
  %v4117 = vmul.f32 %v3730, %v4085
  %v4118 = vmul.f32 %v3753, %v4086
  %v4119 = vmul.f32 %v3755, %v4087
  %v4120 = vmul.f32 %v3778, %v4088
  %v4121 = vmul.f32 %v3780, %v4089
  %v4122 = vmul.f32 %v3803, %v4090
  %v4123 = vmul.f32 %v3805, %v4091
  %v4124 = vmul.f32 %v3828, %v4092
  %v4125 = vmul.f32 %v3830, %v4093
  %v4126 = vmul.f32 %v3853, %v4094
  %v4127 = vmul.f32 %v3855, %v4095
  %v4128 = vmul.f32 %v3878, %v4096
  %v4129 = vmul.f32 %v3880, %v4097
  %v4130 = vmul.f32 %v3903, %v4098
  %v4131 = vmul.f32 %v3905, %v4099
  %v4132 = vmul.f32 %v3928, %v4100
  %v4133 = vmul.f32 %v3930, %v4101
  %v4134 = vmul.f32 %v3953, %v4102
  %v4135 = vmul.f32 %v3955, %v4103
  %v4136 = vmul.f32 %v3978, %v4104
  %v4137 = vmul.f32 %v3980, %v4105
  %v4138 = vmul.f32 %v4003, %v4106
  %v4139 = vmul.f32 %v4005, %v4107
  %v4140 = vmul.f32 %v4028, %v4108
  %v4141 = vmul.f32 %v4030, %v4109
  %v4142 = vmul.f32 %v4053, %v4110
  %v4143 = vmul.f32 %v4055, %v4111
  %v4144 = vmul.f32 %v4078, %v4112
  %v4145 = vmul.f32 %v4080, %v4113
  %v4146 = vpack.c.bf16 %v4114, %v4114
  %v4147 = vpack.c.bf16 %v4115, %v4115
  %v4148 = vpack.c.bf16 %v4116, %v4116
  %v4149 = vpack.c.bf16 %v4117, %v4117
  %v4150 = vpack.c.bf16 %v4118, %v4118
  %v4151 = vpack.c.bf16 %v4119, %v4119
  %v4152 = vpack.c.bf16 %v4120, %v4120
  %v4153 = vpack.c.bf16 %v4121, %v4121
  %v4154 = vpack.c.bf16 %v4122, %v4122
  %v4155 = vpack.c.bf16 %v4123, %v4123
  %v4156 = vpack.c.bf16 %v4124, %v4124
  %v4157 = vpack.c.bf16 %v4125, %v4125
  %v4158 = vpack.c.bf16 %v4126, %v4126
  %v4159 = vpack.c.bf16 %v4127, %v4127
  %v4160 = vpack.c.bf16 %v4128, %v4128
  %v4161 = vpack.c.bf16 %v4129, %v4129
  %v4162 = vpack.c.bf16 %v4130, %v4130
  %v4163 = vpack.c.bf16 %v4131, %v4131
  %v4164 = vpack.c.bf16 %v4132, %v4132
  %v4165 = vpack.c.bf16 %v4133, %v4133
  %v4166 = vpack.c.bf16 %v4134, %v4134
  %v4167 = vpack.c.bf16 %v4135, %v4135
  %v4168 = vpack.c.bf16 %v4136, %v4136
  %v4169 = vpack.c.bf16 %v4137, %v4137
  %v4170 = vpack.c.bf16 %v4138, %v4138
  %v4171 = vpack.c.bf16 %v4139, %v4139
  %v4172 = vpack.c.bf16 %v4140, %v4140
  %v4173 = vpack.c.bf16 %v4141, %v4141
  %v4174 = vpack.c.bf16 %v4142, %v4142
  %v4175 = vpack.c.bf16 %v4143, %v4143
  %v4176 = vpack.c.bf16 %v4144, %v4144
  %v4177 = vpack.c.bf16 %v4145, %v4145
  %4210 = vrot.lane.b32.xlu0 %v4146, 16
  %v4211 = vpop.permute.xlu0 %4210
  %4212 = vrot.lane.b32.xlu0 %v4147, 16
  %v4213 = vpop.permute.xlu0 %4212
  %4214 = vrot.lane.b32.xlu0 %v4148, 16
  %v4215 = vpop.permute.xlu0 %4214
  %4216 = vrot.lane.b32.xlu0 %v4149, 16
  %v4217 = vpop.permute.xlu0 %4216
  %4218 = vrot.lane.b32.xlu0 %v4150, 16
  %v4219 = vpop.permute.xlu0 %4218
  %4220 = vrot.lane.b32.xlu0 %v4151, 16
  %v4221 = vpop.permute.xlu0 %4220
  %4222 = vrot.lane.b32.xlu0 %v4152, 16
  %v4223 = vpop.permute.xlu0 %4222
  %4224 = vrot.lane.b32.xlu0 %v4153, 16
  %v4225 = vpop.permute.xlu0 %4224
  %4226 = vrot.lane.b32.xlu0 %v4154, 16
  %v4227 = vpop.permute.xlu0 %4226
  %4228 = vrot.lane.b32.xlu0 %v4155, 16
  %v4229 = vpop.permute.xlu0 %4228
  %4230 = vrot.lane.b32.xlu0 %v4156, 16
  %v4231 = vpop.permute.xlu0 %4230
  %4232 = vrot.lane.b32.xlu0 %v4157, 16
  %v4233 = vpop.permute.xlu0 %4232
  %4234 = vrot.lane.b32.xlu0 %v4158, 16
  %v4235 = vpop.permute.xlu0 %4234
  %4236 = vrot.lane.b32.xlu0 %v4159, 16
  %v4237 = vpop.permute.xlu0 %4236
  %4238 = vrot.lane.b32.xlu0 %v4160, 16
  %v4239 = vpop.permute.xlu0 %4238
  %4240 = vrot.lane.b32.xlu0 %v4161, 16
  %v4241 = vpop.permute.xlu0 %4240
  %4242 = vrot.lane.b32.xlu0 %v4162, 16
  %v4243 = vpop.permute.xlu0 %4242
  %4244 = vrot.lane.b32.xlu0 %v4163, 16
  %v4245 = vpop.permute.xlu0 %4244
  %4246 = vrot.lane.b32.xlu0 %v4164, 16
  %v4247 = vpop.permute.xlu0 %4246
  %4248 = vrot.lane.b32.xlu0 %v4165, 16
  %v4249 = vpop.permute.xlu0 %4248
  %4250 = vrot.lane.b32.xlu0 %v4166, 16
  %v4251 = vpop.permute.xlu0 %4250
  %4252 = vrot.lane.b32.xlu0 %v4167, 16
  %v4253 = vpop.permute.xlu0 %4252
  %4254 = vrot.lane.b32.xlu0 %v4168, 16
  %v4255 = vpop.permute.xlu0 %4254
  %4256 = vrot.lane.b32.xlu0 %v4169, 16
  %v4257 = vpop.permute.xlu0 %4256
  %4258 = vrot.lane.b32.xlu0 %v4170, 16
  %v4259 = vpop.permute.xlu0 %4258
  %4260 = vrot.lane.b32.xlu0 %v4171, 16
  %v4261 = vpop.permute.xlu0 %4260
  %4262 = vrot.lane.b32.xlu0 %v4172, 16
  %v4263 = vpop.permute.xlu0 %4262
  %4264 = vrot.lane.b32.xlu0 %v4173, 16
  %v4265 = vpop.permute.xlu0 %4264
  %4266 = vrot.lane.b32.xlu0 %v4174, 16
  %v4267 = vpop.permute.xlu0 %4266
  %4268 = vrot.lane.b32.xlu0 %v4175, 16
  %v4269 = vpop.permute.xlu0 %4268
  %4270 = vrot.lane.b32.xlu0 %v4176, 16
  %v4271 = vpop.permute.xlu0 %4270
  %4272 = vrot.lane.b32.xlu0 %v4177, 16
  %v4273 = vpop.permute.xlu0 %4272
  %vm4306 = vcmask 191616
  %4307 = vst.msk [vmem:[#allocation2] sm:$0xf] %vm4306, %v4211
  %4308 = vst.msk [vmem:[#allocation2 + $0x4] sm:$0xf] %vm4306, %v4213
  %4309 = vst.msk [vmem:[#allocation2 + $0x8] sm:$0xf] %vm4306, %v4215
  %4310 = vst.msk [vmem:[#allocation2 + $0xc] sm:$0xf] %vm4306, %v4217
  %4311 = vst.msk [vmem:[#allocation2 + $0x10] sm:$0xf] %vm4306, %v4219
  %4312 = vst.msk [vmem:[#allocation2 + $0x14] sm:$0xf] %vm4306, %v4221
  %4313 = vst.msk [vmem:[#allocation2 + $0x18] sm:$0xf] %vm4306, %v4223
  %4314 = vst.msk [vmem:[#allocation2 + $0x1c] sm:$0xf] %vm4306, %v4225
  %4315 = vst.msk [vmem:[#allocation2 + $0x20] sm:$0xf] %vm4306, %v4227
  %4316 = vst.msk [vmem:[#allocation2 + $0x24] sm:$0xf] %vm4306, %v4229
  %4317 = vst.msk [vmem:[#allocation2 + $0x28] sm:$0xf] %vm4306, %v4231
  %4318 = vst.msk [vmem:[#allocation2 + $0x2c] sm:$0xf] %vm4306, %v4233
  %4319 = vst.msk [vmem:[#allocation2 + $0x30] sm:$0xf] %vm4306, %v4235
  %4320 = vst.msk [vmem:[#allocation2 + $0x34] sm:$0xf] %vm4306, %v4237
  %4321 = vst.msk [vmem:[#allocation2 + $0x38] sm:$0xf] %vm4306, %v4239
  %4322 = vst.msk [vmem:[#allocation2 + $0x3c] sm:$0xf] %vm4306, %v4241
  %4323 = vst.msk [vmem:[#allocation2 + $0x40] sm:$0xf] %vm4306, %v4243
  %4324 = vst.msk [vmem:[#allocation2 + $0x44] sm:$0xf] %vm4306, %v4245
  %4325 = vst.msk [vmem:[#allocation2 + $0x48] sm:$0xf] %vm4306, %v4247
  %4326 = vst.msk [vmem:[#allocation2 + $0x4c] sm:$0xf] %vm4306, %v4249
  %4327 = vst.msk [vmem:[#allocation2 + $0x50] sm:$0xf] %vm4306, %v4251
  %4328 = vst.msk [vmem:[#allocation2 + $0x54] sm:$0xf] %vm4306, %v4253
  %4329 = vst.msk [vmem:[#allocation2 + $0x58] sm:$0xf] %vm4306, %v4255
  %4330 = vst.msk [vmem:[#allocation2 + $0x5c] sm:$0xf] %vm4306, %v4257
  %4331 = vst.msk [vmem:[#allocation2 + $0x60] sm:$0xf] %vm4306, %v4259
  %4332 = vst.msk [vmem:[#allocation2 + $0x64] sm:$0xf] %vm4306, %v4261
  %4333 = vst.msk [vmem:[#allocation2 + $0x68] sm:$0xf] %vm4306, %v4263
  %4334 = vst.msk [vmem:[#allocation2 + $0x6c] sm:$0xf] %vm4306, %v4265
  %4335 = vst.msk [vmem:[#allocation2 + $0x70] sm:$0xf] %vm4306, %v4267
  %4336 = vst.msk [vmem:[#allocation2 + $0x74] sm:$0xf] %vm4306, %v4269
  %4337 = vst.msk [vmem:[#allocation2 + $0x78] sm:$0xf] %vm4306, %v4271
  %4338 = vst.msk [vmem:[#allocation2 + $0x7c] sm:$0xf] %vm4306, %v4273
  %s4339 = scalar_lea.vmem %s5, 48
  %v4340 = vld [vmem:[%s4339] sm:$0xff]
  %v4341 = vld [vmem:[%s4339 + $0x8] sm:$0xff]
  %4342 = vrot.lane.b32.xlu0 %v332, 104
  %v4343 = vpop.permute.xlu0 %4342
  %4344 = vrot.lane.b32.xlu0 %v332, 72
  %v4345 = vpop.permute.xlu0 %4344
  %v4347 = vsel %vm335, %v4343, 0
  %v4350 = vsel %vm335, %v4345, 0
  %4352 = vmatpush.bf16.xpose.msra.mxu0 0
  %4353 = vmatpush.bf16.xpose.msra.mxu0 0
  %4354 = vmatpush.bf16.xpose.msra.mxu0 0
  %4355 = vmatpush.bf16.xpose.msra.mxu0 0
  %4356 = vmatpush.bf16.xpose.msra.mxu0 0
  %4357 = vmatpush.bf16.xpose.msra.mxu0 0
  %4358 = vmatpush.bf16.xpose.msra.mxu0 0
  %4359 = vmatpush.bf16.xpose.msra.mxu0 %v4350
  %4360 = vmatmul.bf16.gmra.mxu0 %v4347
  %v4361 = vpop.f32.mrf.mxu0
  %v4362 = vadd.f32 %v4340, %v4361
  %v4363 = vpop.f32.mrf.mxu0
  %v4364 = vadd.f32 %v4341, %v4363
  %4365 = vdwg.mxu0
  %4366 = vrot.lane.b32.xlu0 %v360, 104
  %v4367 = vpop.permute.xlu0 %4366
  %4368 = vrot.lane.b32.xlu0 %v360, 72
  %v4369 = vpop.permute.xlu0 %4368
  %v4371 = vsel %vm335, %v4367, 0
  %v4374 = vsel %vm335, %v4369, 0
  %4376 = vmatpush.bf16.xpose.msra.mxu0 0
  %4377 = vmatpush.bf16.xpose.msra.mxu0 0
  %4378 = vmatpush.bf16.xpose.msra.mxu0 0
  %4379 = vmatpush.bf16.xpose.msra.mxu0 0
  %4380 = vmatpush.bf16.xpose.msra.mxu0 0
  %4381 = vmatpush.bf16.xpose.msra.mxu0 0
  %4382 = vmatpush.bf16.xpose.msra.mxu0 0
  %4383 = vmatpush.bf16.xpose.msra.mxu0 %v4374
  %4384 = vmatmul.bf16.gmra.mxu0 %v4371
  %v4385 = vpop.f32.mrf.mxu0
  %v4386 = vadd.f32 %v4340, %v4385
  %v4387 = vpop.f32.mrf.mxu0
  %v4388 = vadd.f32 %v4341, %v4387
  %4389 = vdwg.mxu0
  %4390 = vrot.lane.b32.xlu0 %v387, 104
  %v4391 = vpop.permute.xlu0 %4390
  %4392 = vrot.lane.b32.xlu0 %v387, 72
  %v4393 = vpop.permute.xlu0 %4392
  %v4395 = vsel %vm335, %v4391, 0
  %v4398 = vsel %vm335, %v4393, 0
  %4400 = vmatpush.bf16.xpose.msra.mxu0 0
  %4401 = vmatpush.bf16.xpose.msra.mxu0 0
  %4402 = vmatpush.bf16.xpose.msra.mxu0 0
  %4403 = vmatpush.bf16.xpose.msra.mxu0 0
  %4404 = vmatpush.bf16.xpose.msra.mxu0 0
  %4405 = vmatpush.bf16.xpose.msra.mxu0 0
  %4406 = vmatpush.bf16.xpose.msra.mxu0 0
  %4407 = vmatpush.bf16.xpose.msra.mxu0 %v4398
  %4408 = vmatmul.bf16.gmra.mxu0 %v4395
  %v4409 = vpop.f32.mrf.mxu0
  %v4410 = vadd.f32 %v4340, %v4409
  %v4411 = vpop.f32.mrf.mxu0
  %v4412 = vadd.f32 %v4341, %v4411
  %4413 = vdwg.mxu0
  %4414 = vrot.lane.b32.xlu0 %v414, 104
  %v4415 = vpop.permute.xlu0 %4414
  %4416 = vrot.lane.b32.xlu0 %v414, 72
  %v4417 = vpop.permute.xlu0 %4416
  %v4419 = vsel %vm335, %v4415, 0
  %v4422 = vsel %vm335, %v4417, 0
  %4424 = vmatpush.bf16.xpose.msra.mxu0 0
  %4425 = vmatpush.bf16.xpose.msra.mxu0 0
  %4426 = vmatpush.bf16.xpose.msra.mxu0 0
  %4427 = vmatpush.bf16.xpose.msra.mxu0 0
  %4428 = vmatpush.bf16.xpose.msra.mxu0 0
  %4429 = vmatpush.bf16.xpose.msra.mxu0 0
  %4430 = vmatpush.bf16.xpose.msra.mxu0 0
  %4431 = vmatpush.bf16.xpose.msra.mxu0 %v4422
  %4432 = vmatmul.bf16.gmra.mxu0 %v4419
  %v4433 = vpop.f32.mrf.mxu0
  %v4434 = vadd.f32 %v4340, %v4433
  %v4435 = vpop.f32.mrf.mxu0
  %v4436 = vadd.f32 %v4341, %v4435
  %4437 = vdwg.mxu0
  %4438 = vrot.lane.b32.xlu0 %v441, 104
  %v4439 = vpop.permute.xlu0 %4438
  %4440 = vrot.lane.b32.xlu0 %v441, 72
  %v4441 = vpop.permute.xlu0 %4440
  %v4443 = vsel %vm335, %v4439, 0
  %v4446 = vsel %vm335, %v4441, 0
  %4448 = vmatpush.bf16.xpose.msra.mxu0 0
  %4449 = vmatpush.bf16.xpose.msra.mxu0 0
  %4450 = vmatpush.bf16.xpose.msra.mxu0 0
  %4451 = vmatpush.bf16.xpose.msra.mxu0 0
  %4452 = vmatpush.bf16.xpose.msra.mxu0 0
  %4453 = vmatpush.bf16.xpose.msra.mxu0 0
  %4454 = vmatpush.bf16.xpose.msra.mxu0 0
  %4455 = vmatpush.bf16.xpose.msra.mxu0 %v4446
  %4456 = vmatmul.bf16.gmra.mxu0 %v4443
  %v4457 = vpop.f32.mrf.mxu0
  %v4458 = vadd.f32 %v4340, %v4457
  %v4459 = vpop.f32.mrf.mxu0
  %v4460 = vadd.f32 %v4341, %v4459
  %4461 = vdwg.mxu0
  %4462 = vrot.lane.b32.xlu0 %v468, 104
  %v4463 = vpop.permute.xlu0 %4462
  %4464 = vrot.lane.b32.xlu0 %v468, 72
  %v4465 = vpop.permute.xlu0 %4464
  %v4467 = vsel %vm335, %v4463, 0
  %v4470 = vsel %vm335, %v4465, 0
  %4472 = vmatpush.bf16.xpose.msra.mxu0 0
  %4473 = vmatpush.bf16.xpose.msra.mxu0 0
  %4474 = vmatpush.bf16.xpose.msra.mxu0 0
  %4475 = vmatpush.bf16.xpose.msra.mxu0 0
  %4476 = vmatpush.bf16.xpose.msra.mxu0 0
  %4477 = vmatpush.bf16.xpose.msra.mxu0 0
  %4478 = vmatpush.bf16.xpose.msra.mxu0 0
  %4479 = vmatpush.bf16.xpose.msra.mxu0 %v4470
  %4480 = vmatmul.bf16.gmra.mxu0 %v4467
  %v4481 = vpop.f32.mrf.mxu0
  %v4482 = vadd.f32 %v4340, %v4481
  %v4483 = vpop.f32.mrf.mxu0
  %v4484 = vadd.f32 %v4341, %v4483
  %4485 = vdwg.mxu0
  %4486 = vrot.lane.b32.xlu0 %v495, 104
  %v4487 = vpop.permute.xlu0 %4486
  %4488 = vrot.lane.b32.xlu0 %v495, 72
  %v4489 = vpop.permute.xlu0 %4488
  %v4491 = vsel %vm335, %v4487, 0
  %v4494 = vsel %vm335, %v4489, 0
  %4496 = vmatpush.bf16.xpose.msra.mxu0 0
  %4497 = vmatpush.bf16.xpose.msra.mxu0 0
  %4498 = vmatpush.bf16.xpose.msra.mxu0 0
  %4499 = vmatpush.bf16.xpose.msra.mxu0 0
  %4500 = vmatpush.bf16.xpose.msra.mxu0 0
  %4501 = vmatpush.bf16.xpose.msra.mxu0 0
  %4502 = vmatpush.bf16.xpose.msra.mxu0 0
  %4503 = vmatpush.bf16.xpose.msra.mxu0 %v4494
  %4504 = vmatmul.bf16.gmra.mxu0 %v4491
  %v4505 = vpop.f32.mrf.mxu0
  %v4506 = vadd.f32 %v4340, %v4505
  %v4507 = vpop.f32.mrf.mxu0
  %v4508 = vadd.f32 %v4341, %v4507
  %4509 = vdwg.mxu0
  %4510 = vrot.lane.b32.xlu0 %v522, 104
  %v4511 = vpop.permute.xlu0 %4510
  %4512 = vrot.lane.b32.xlu0 %v522, 72
  %v4513 = vpop.permute.xlu0 %4512
  %v4515 = vsel %vm335, %v4511, 0
  %v4518 = vsel %vm335, %v4513, 0
  %4520 = vmatpush.bf16.xpose.msra.mxu0 0
  %4521 = vmatpush.bf16.xpose.msra.mxu0 0
  %4522 = vmatpush.bf16.xpose.msra.mxu0 0
  %4523 = vmatpush.bf16.xpose.msra.mxu0 0
  %4524 = vmatpush.bf16.xpose.msra.mxu0 0
  %4525 = vmatpush.bf16.xpose.msra.mxu0 0
  %4526 = vmatpush.bf16.xpose.msra.mxu0 0
  %4527 = vmatpush.bf16.xpose.msra.mxu0 %v4518
  %4528 = vmatmul.bf16.gmra.mxu0 %v4515
  %v4529 = vpop.f32.mrf.mxu0
  %v4530 = vadd.f32 %v4340, %v4529
  %v4531 = vpop.f32.mrf.mxu0
  %v4532 = vadd.f32 %v4341, %v4531
  %4533 = vdwg.mxu0
  %4534 = vrot.lane.b32.xlu0 %v549, 104
  %v4535 = vpop.permute.xlu0 %4534
  %4536 = vrot.lane.b32.xlu0 %v549, 72
  %v4537 = vpop.permute.xlu0 %4536
  %v4539 = vsel %vm335, %v4535, 0
  %v4542 = vsel %vm335, %v4537, 0
  %4544 = vmatpush.bf16.xpose.msra.mxu0 0
  %4545 = vmatpush.bf16.xpose.msra.mxu0 0
  %4546 = vmatpush.bf16.xpose.msra.mxu0 0
  %4547 = vmatpush.bf16.xpose.msra.mxu0 0
  %4548 = vmatpush.bf16.xpose.msra.mxu0 0
  %4549 = vmatpush.bf16.xpose.msra.mxu0 0
  %4550 = vmatpush.bf16.xpose.msra.mxu0 0
  %4551 = vmatpush.bf16.xpose.msra.mxu0 %v4542
  %4552 = vmatmul.bf16.gmra.mxu0 %v4539
  %v4553 = vpop.f32.mrf.mxu0
  %v4554 = vadd.f32 %v4340, %v4553
  %v4555 = vpop.f32.mrf.mxu0
  %v4556 = vadd.f32 %v4341, %v4555
  %4557 = vdwg.mxu0
  %4558 = vrot.lane.b32.xlu0 %v576, 104
  %v4559 = vpop.permute.xlu0 %4558
  %4560 = vrot.lane.b32.xlu0 %v576, 72
  %v4561 = vpop.permute.xlu0 %4560
  %v4563 = vsel %vm335, %v4559, 0
  %v4566 = vsel %vm335, %v4561, 0
  %4568 = vmatpush.bf16.xpose.msra.mxu0 0
  %4569 = vmatpush.bf16.xpose.msra.mxu0 0
  %4570 = vmatpush.bf16.xpose.msra.mxu0 0
  %4571 = vmatpush.bf16.xpose.msra.mxu0 0
  %4572 = vmatpush.bf16.xpose.msra.mxu0 0
  %4573 = vmatpush.bf16.xpose.msra.mxu0 0
  %4574 = vmatpush.bf16.xpose.msra.mxu0 0
  %4575 = vmatpush.bf16.xpose.msra.mxu0 %v4566
  %4576 = vmatmul.bf16.gmra.mxu0 %v4563
  %v4577 = vpop.f32.mrf.mxu0
  %v4578 = vadd.f32 %v4340, %v4577
  %v4579 = vpop.f32.mrf.mxu0
  %v4580 = vadd.f32 %v4341, %v4579
  %4581 = vdwg.mxu0
  %4582 = vrot.lane.b32.xlu0 %v603, 104
  %v4583 = vpop.permute.xlu0 %4582
  %4584 = vrot.lane.b32.xlu0 %v603, 72
  %v4585 = vpop.permute.xlu0 %4584
  %v4587 = vsel %vm335, %v4583, 0
  %v4590 = vsel %vm335, %v4585, 0
  %4592 = vmatpush.bf16.xpose.msra.mxu0 0
  %4593 = vmatpush.bf16.xpose.msra.mxu0 0
  %4594 = vmatpush.bf16.xpose.msra.mxu0 0
  %4595 = vmatpush.bf16.xpose.msra.mxu0 0
  %4596 = vmatpush.bf16.xpose.msra.mxu0 0
  %4597 = vmatpush.bf16.xpose.msra.mxu0 0
  %4598 = vmatpush.bf16.xpose.msra.mxu0 0
  %4599 = vmatpush.bf16.xpose.msra.mxu0 %v4590
  %4600 = vmatmul.bf16.gmra.mxu0 %v4587
  %v4601 = vpop.f32.mrf.mxu0
  %v4602 = vadd.f32 %v4340, %v4601
  %v4603 = vpop.f32.mrf.mxu0
  %v4604 = vadd.f32 %v4341, %v4603
  %4605 = vdwg.mxu0
  %4606 = vrot.lane.b32.xlu0 %v630, 104
  %v4607 = vpop.permute.xlu0 %4606
  %4608 = vrot.lane.b32.xlu0 %v630, 72
  %v4609 = vpop.permute.xlu0 %4608
  %v4611 = vsel %vm335, %v4607, 0
  %v4614 = vsel %vm335, %v4609, 0
  %4616 = vmatpush.bf16.xpose.msra.mxu0 0
  %4617 = vmatpush.bf16.xpose.msra.mxu0 0
  %4618 = vmatpush.bf16.xpose.msra.mxu0 0
  %4619 = vmatpush.bf16.xpose.msra.mxu0 0
  %4620 = vmatpush.bf16.xpose.msra.mxu0 0
  %4621 = vmatpush.bf16.xpose.msra.mxu0 0
  %4622 = vmatpush.bf16.xpose.msra.mxu0 0
  %4623 = vmatpush.bf16.xpose.msra.mxu0 %v4614
  %4624 = vmatmul.bf16.gmra.mxu0 %v4611
  %v4625 = vpop.f32.mrf.mxu0
  %v4626 = vadd.f32 %v4340, %v4625
  %v4627 = vpop.f32.mrf.mxu0
  %v4628 = vadd.f32 %v4341, %v4627
  %4629 = vdwg.mxu0
  %4630 = vrot.lane.b32.xlu0 %v657, 104
  %v4631 = vpop.permute.xlu0 %4630
  %4632 = vrot.lane.b32.xlu0 %v657, 72
  %v4633 = vpop.permute.xlu0 %4632
  %v4635 = vsel %vm335, %v4631, 0
  %v4638 = vsel %vm335, %v4633, 0
  %4640 = vmatpush.bf16.xpose.msra.mxu0 0
  %4641 = vmatpush.bf16.xpose.msra.mxu0 0
  %4642 = vmatpush.bf16.xpose.msra.mxu0 0
  %4643 = vmatpush.bf16.xpose.msra.mxu0 0
  %4644 = vmatpush.bf16.xpose.msra.mxu0 0
  %4645 = vmatpush.bf16.xpose.msra.mxu0 0
  %4646 = vmatpush.bf16.xpose.msra.mxu0 0
  %4647 = vmatpush.bf16.xpose.msra.mxu0 %v4638
  %4648 = vmatmul.bf16.gmra.mxu0 %v4635
  %v4649 = vpop.f32.mrf.mxu0
  %v4650 = vadd.f32 %v4340, %v4649
  %v4651 = vpop.f32.mrf.mxu0
  %v4652 = vadd.f32 %v4341, %v4651
  %4653 = vdwg.mxu0
  %4654 = vrot.lane.b32.xlu0 %v684, 104
  %v4655 = vpop.permute.xlu0 %4654
  %4656 = vrot.lane.b32.xlu0 %v684, 72
  %v4657 = vpop.permute.xlu0 %4656
  %v4659 = vsel %vm335, %v4655, 0
  %v4662 = vsel %vm335, %v4657, 0
  %4664 = vmatpush.bf16.xpose.msra.mxu0 0
  %4665 = vmatpush.bf16.xpose.msra.mxu0 0
  %4666 = vmatpush.bf16.xpose.msra.mxu0 0
  %4667 = vmatpush.bf16.xpose.msra.mxu0 0
  %4668 = vmatpush.bf16.xpose.msra.mxu0 0
  %4669 = vmatpush.bf16.xpose.msra.mxu0 0
  %4670 = vmatpush.bf16.xpose.msra.mxu0 0
  %4671 = vmatpush.bf16.xpose.msra.mxu0 %v4662
  %4672 = vmatmul.bf16.gmra.mxu0 %v4659
  %v4673 = vpop.f32.mrf.mxu0
  %v4674 = vadd.f32 %v4340, %v4673
  %v4675 = vpop.f32.mrf.mxu0
  %v4676 = vadd.f32 %v4341, %v4675
  %4677 = vdwg.mxu0
  %4678 = vrot.lane.b32.xlu0 %v711, 104
  %v4679 = vpop.permute.xlu0 %4678
  %4680 = vrot.lane.b32.xlu0 %v711, 72
  %v4681 = vpop.permute.xlu0 %4680
  %v4683 = vsel %vm335, %v4679, 0
  %v4686 = vsel %vm335, %v4681, 0
  %4688 = vmatpush.bf16.xpose.msra.mxu0 0
  %4689 = vmatpush.bf16.xpose.msra.mxu0 0
  %4690 = vmatpush.bf16.xpose.msra.mxu0 0
  %4691 = vmatpush.bf16.xpose.msra.mxu0 0
  %4692 = vmatpush.bf16.xpose.msra.mxu0 0
  %4693 = vmatpush.bf16.xpose.msra.mxu0 0
  %4694 = vmatpush.bf16.xpose.msra.mxu0 0
  %4695 = vmatpush.bf16.xpose.msra.mxu0 %v4686
  %4696 = vmatmul.bf16.gmra.mxu0 %v4683
  %v4697 = vpop.f32.mrf.mxu0
  %v4698 = vadd.f32 %v4340, %v4697
  %v4699 = vpop.f32.mrf.mxu0
  %v4700 = vadd.f32 %v4341, %v4699
  %4701 = vdwg.mxu0
  %4702 = vrot.lane.b32.xlu0 %v738, 104
  %v4703 = vpop.permute.xlu0 %4702
  %4704 = vrot.lane.b32.xlu0 %v738, 72
  %v4705 = vpop.permute.xlu0 %4704
  %v4707 = vsel %vm335, %v4703, 0
  %v4710 = vsel %vm335, %v4705, 0
  %4712 = vmatpush.bf16.xpose.msra.mxu0 0
  %4713 = vmatpush.bf16.xpose.msra.mxu0 0
  %4714 = vmatpush.bf16.xpose.msra.mxu0 0
  %4715 = vmatpush.bf16.xpose.msra.mxu0 0
  %4716 = vmatpush.bf16.xpose.msra.mxu0 0
  %4717 = vmatpush.bf16.xpose.msra.mxu0 0
  %4718 = vmatpush.bf16.xpose.msra.mxu0 0
  %4719 = vmatpush.bf16.xpose.msra.mxu0 %v4710
  %4720 = vmatmul.bf16.gmra.mxu0 %v4707
  %v4721 = vpop.f32.mrf.mxu0
  %v4722 = vadd.f32 %v4340, %v4721
  %v4723 = vpop.f32.mrf.mxu0
  %v4724 = vadd.f32 %v4341, %v4723
  %4725 = vdwg.mxu0
  %v4726 = vsel %vm761, %v4362, -inf
  %4727 = vmax.xlane.f32.xlu0 %v4726
  %v4728 = vpop.xlane.xlu0 %4727
  %v4729 = vsel %vm761, %v4364, -inf
  %4730 = vmax.xlane.f32.xlu0 %v4729
  %v4731 = vpop.xlane.xlu0 %4730
  %v4732 = vsel %vm761, %v4386, -inf
  %4733 = vmax.xlane.f32.xlu0 %v4732
  %v4734 = vpop.xlane.xlu0 %4733
  %v4735 = vsel %vm761, %v4388, -inf
  %4736 = vmax.xlane.f32.xlu0 %v4735
  %v4737 = vpop.xlane.xlu0 %4736
  %v4738 = vsel %vm761, %v4410, -inf
  %4739 = vmax.xlane.f32.xlu0 %v4738
  %v4740 = vpop.xlane.xlu0 %4739
  %v4741 = vsel %vm761, %v4412, -inf
  %4742 = vmax.xlane.f32.xlu0 %v4741
  %v4743 = vpop.xlane.xlu0 %4742
  %v4744 = vsel %vm761, %v4434, -inf
  %4745 = vmax.xlane.f32.xlu0 %v4744
  %v4746 = vpop.xlane.xlu0 %4745
  %v4747 = vsel %vm761, %v4436, -inf
  %4748 = vmax.xlane.f32.xlu0 %v4747
  %v4749 = vpop.xlane.xlu0 %4748
  %v4750 = vsel %vm761, %v4458, -inf
  %4751 = vmax.xlane.f32.xlu0 %v4750
  %v4752 = vpop.xlane.xlu0 %4751
  %v4753 = vsel %vm761, %v4460, -inf
  %4754 = vmax.xlane.f32.xlu0 %v4753
  %v4755 = vpop.xlane.xlu0 %4754
  %v4756 = vsel %vm761, %v4482, -inf
  %4757 = vmax.xlane.f32.xlu0 %v4756
  %v4758 = vpop.xlane.xlu0 %4757
  %v4759 = vsel %vm761, %v4484, -inf
  %4760 = vmax.xlane.f32.xlu0 %v4759
  %v4761 = vpop.xlane.xlu0 %4760
  %v4762 = vsel %vm761, %v4506, -inf
  %4763 = vmax.xlane.f32.xlu0 %v4762
  %v4764 = vpop.xlane.xlu0 %4763
  %v4765 = vsel %vm761, %v4508, -inf
  %4766 = vmax.xlane.f32.xlu0 %v4765
  %v4767 = vpop.xlane.xlu0 %4766
  %v4768 = vsel %vm761, %v4530, -inf
  %4769 = vmax.xlane.f32.xlu0 %v4768
  %v4770 = vpop.xlane.xlu0 %4769
  %v4771 = vsel %vm761, %v4532, -inf
  %4772 = vmax.xlane.f32.xlu0 %v4771
  %v4773 = vpop.xlane.xlu0 %4772
  %v4774 = vsel %vm761, %v4554, -inf
  %4775 = vmax.xlane.f32.xlu0 %v4774
  %v4776 = vpop.xlane.xlu0 %4775
  %v4777 = vsel %vm761, %v4556, -inf
  %4778 = vmax.xlane.f32.xlu0 %v4777
  %v4779 = vpop.xlane.xlu0 %4778
  %v4780 = vsel %vm761, %v4578, -inf
  %4781 = vmax.xlane.f32.xlu0 %v4780
  %v4782 = vpop.xlane.xlu0 %4781
  %v4783 = vsel %vm761, %v4580, -inf
  %4784 = vmax.xlane.f32.xlu0 %v4783
  %v4785 = vpop.xlane.xlu0 %4784
  %v4786 = vsel %vm761, %v4602, -inf
  %4787 = vmax.xlane.f32.xlu0 %v4786
  %v4788 = vpop.xlane.xlu0 %4787
  %v4789 = vsel %vm761, %v4604, -inf
  %4790 = vmax.xlane.f32.xlu0 %v4789
  %v4791 = vpop.xlane.xlu0 %4790
  %v4792 = vsel %vm761, %v4626, -inf
  %4793 = vmax.xlane.f32.xlu0 %v4792
  %v4794 = vpop.xlane.xlu0 %4793
  %v4795 = vsel %vm761, %v4628, -inf
  %4796 = vmax.xlane.f32.xlu0 %v4795
  %v4797 = vpop.xlane.xlu0 %4796
  %v4798 = vsel %vm761, %v4650, -inf
  %4799 = vmax.xlane.f32.xlu0 %v4798
  %v4800 = vpop.xlane.xlu0 %4799
  %v4801 = vsel %vm761, %v4652, -inf
  %4802 = vmax.xlane.f32.xlu0 %v4801
  %v4803 = vpop.xlane.xlu0 %4802
  %v4804 = vsel %vm761, %v4674, -inf
  %4805 = vmax.xlane.f32.xlu0 %v4804
  %v4806 = vpop.xlane.xlu0 %4805
  %v4807 = vsel %vm761, %v4676, -inf
  %4808 = vmax.xlane.f32.xlu0 %v4807
  %v4809 = vpop.xlane.xlu0 %4808
  %v4810 = vsel %vm761, %v4698, -inf
  %4811 = vmax.xlane.f32.xlu0 %v4810
  %v4812 = vpop.xlane.xlu0 %4811
  %v4813 = vsel %vm761, %v4700, -inf
  %4814 = vmax.xlane.f32.xlu0 %v4813
  %v4815 = vpop.xlane.xlu0 %4814
  %v4816 = vsel %vm761, %v4722, -inf
  %4817 = vmax.xlane.f32.xlu0 %v4816
  %v4818 = vpop.xlane.xlu0 %4817
  %v4819 = vsel %vm761, %v4724, -inf
  %4820 = vmax.xlane.f32.xlu0 %v4819
  %v4821 = vpop.xlane.xlu0 %4820
  %v4822 = vsub.f32 %v4362, %v4728
  %v4823 = vsub.f32 %v4364, %v4731
  %v4824 = vsub.f32 %v4386, %v4734
  %v4825 = vsub.f32 %v4388, %v4737
  %v4826 = vsub.f32 %v4410, %v4740
  %v4827 = vsub.f32 %v4412, %v4743
  %v4828 = vsub.f32 %v4434, %v4746
  %v4829 = vsub.f32 %v4436, %v4749
  %v4830 = vsub.f32 %v4458, %v4752
  %v4831 = vsub.f32 %v4460, %v4755
  %v4832 = vsub.f32 %v4482, %v4758
  %v4833 = vsub.f32 %v4484, %v4761
  %v4834 = vsub.f32 %v4506, %v4764
  %v4835 = vsub.f32 %v4508, %v4767
  %v4836 = vsub.f32 %v4530, %v4770
  %v4837 = vsub.f32 %v4532, %v4773
  %v4838 = vsub.f32 %v4554, %v4776
  %v4839 = vsub.f32 %v4556, %v4779
  %v4840 = vsub.f32 %v4578, %v4782
  %v4841 = vsub.f32 %v4580, %v4785
  %v4842 = vsub.f32 %v4602, %v4788
  %v4843 = vsub.f32 %v4604, %v4791
  %v4844 = vsub.f32 %v4626, %v4794
  %v4845 = vsub.f32 %v4628, %v4797
  %v4846 = vsub.f32 %v4650, %v4800
  %v4847 = vsub.f32 %v4652, %v4803
  %v4848 = vsub.f32 %v4674, %v4806
  %v4849 = vsub.f32 %v4676, %v4809
  %v4850 = vsub.f32 %v4698, %v4812
  %v4851 = vsub.f32 %v4700, %v4815
  %v4852 = vsub.f32 %v4722, %v4818
  %v4853 = vsub.f32 %v4724, %v4821
  %v4854 = vmul.f32 %v4822, 1.442695
  %v4855 = vpow.pop %v4854
  %v4856 = vmul.f32 %v4823, 1.442695
  %v4857 = vpow.pop %v4856
  %v4858 = vmul.f32 %v4824, 1.442695
  %v4859 = vpow.pop %v4858
  %v4860 = vmul.f32 %v4825, 1.442695
  %v4861 = vpow.pop %v4860
  %v4862 = vmul.f32 %v4826, 1.442695
  %v4863 = vpow.pop %v4862
  %v4864 = vmul.f32 %v4827, 1.442695
  %v4865 = vpow.pop %v4864
  %v4866 = vmul.f32 %v4828, 1.442695
  %v4867 = vpow.pop %v4866
  %v4868 = vmul.f32 %v4829, 1.442695
  %v4869 = vpow.pop %v4868
  %v4870 = vmul.f32 %v4830, 1.442695
  %v4871 = vpow.pop %v4870
  %v4872 = vmul.f32 %v4831, 1.442695
  %v4873 = vpow.pop %v4872
  %v4874 = vmul.f32 %v4832, 1.442695
  %v4875 = vpow.pop %v4874
  %v4876 = vmul.f32 %v4833, 1.442695
  %v4877 = vpow.pop %v4876
  %v4878 = vmul.f32 %v4834, 1.442695
  %v4879 = vpow.pop %v4878
  %v4880 = vmul.f32 %v4835, 1.442695
  %v4881 = vpow.pop %v4880
  %v4882 = vmul.f32 %v4836, 1.442695
  %v4883 = vpow.pop %v4882
  %v4884 = vmul.f32 %v4837, 1.442695
  %v4885 = vpow.pop %v4884
  %v4886 = vmul.f32 %v4838, 1.442695
  %v4887 = vpow.pop %v4886
  %v4888 = vmul.f32 %v4839, 1.442695
  %v4889 = vpow.pop %v4888
  %v4890 = vmul.f32 %v4840, 1.442695
  %v4891 = vpow.pop %v4890
  %v4892 = vmul.f32 %v4841, 1.442695
  %v4893 = vpow.pop %v4892
  %v4894 = vmul.f32 %v4842, 1.442695
  %v4895 = vpow.pop %v4894
  %v4896 = vmul.f32 %v4843, 1.442695
  %v4897 = vpow.pop %v4896
  %v4898 = vmul.f32 %v4844, 1.442695
  %v4899 = vpow.pop %v4898
  %v4900 = vmul.f32 %v4845, 1.442695
  %v4901 = vpow.pop %v4900
  %v4902 = vmul.f32 %v4846, 1.442695
  %v4903 = vpow.pop %v4902
  %v4904 = vmul.f32 %v4847, 1.442695
  %v4905 = vpow.pop %v4904
  %v4906 = vmul.f32 %v4848, 1.442695
  %v4907 = vpow.pop %v4906
  %v4908 = vmul.f32 %v4849, 1.442695
  %v4909 = vpow.pop %v4908
  %v4910 = vmul.f32 %v4850, 1.442695
  %v4911 = vpow.pop %v4910
  %v4912 = vmul.f32 %v4851, 1.442695
  %v4913 = vpow.pop %v4912
  %v4914 = vmul.f32 %v4852, 1.442695
  %v4915 = vpow.pop %v4914
  %v4916 = vmul.f32 %v4853, 1.442695
  %v4917 = vpow.pop %v4916
  %v4918 = vsel %vm761, %v4855, 0.0
  %4919 = vadd.xlane.f32.xlu0 %v4918
  %v4920 = vpop.xlane.xlu0 %4919
  %v4921 = vsel %vm761, %v4857, 0.0
  %4922 = vadd.xlane.f32.xlu0 %v4921
  %v4923 = vpop.xlane.xlu0 %4922
  %v4924 = vsel %vm761, %v4859, 0.0
  %4925 = vadd.xlane.f32.xlu0 %v4924
  %v4926 = vpop.xlane.xlu0 %4925
  %v4927 = vsel %vm761, %v4861, 0.0
  %4928 = vadd.xlane.f32.xlu0 %v4927
  %v4929 = vpop.xlane.xlu0 %4928
  %v4930 = vsel %vm761, %v4863, 0.0
  %4931 = vadd.xlane.f32.xlu0 %v4930
  %v4932 = vpop.xlane.xlu0 %4931
  %v4933 = vsel %vm761, %v4865, 0.0
  %4934 = vadd.xlane.f32.xlu0 %v4933
  %v4935 = vpop.xlane.xlu0 %4934
  %v4936 = vsel %vm761, %v4867, 0.0
  %4937 = vadd.xlane.f32.xlu0 %v4936
  %v4938 = vpop.xlane.xlu0 %4937
  %v4939 = vsel %vm761, %v4869, 0.0
  %4940 = vadd.xlane.f32.xlu0 %v4939
  %v4941 = vpop.xlane.xlu0 %4940
  %v4942 = vsel %vm761, %v4871, 0.0
  %4943 = vadd.xlane.f32.xlu0 %v4942
  %v4944 = vpop.xlane.xlu0 %4943
  %v4945 = vsel %vm761, %v4873, 0.0
  %4946 = vadd.xlane.f32.xlu0 %v4945
  %v4947 = vpop.xlane.xlu0 %4946
  %v4948 = vsel %vm761, %v4875, 0.0
  %4949 = vadd.xlane.f32.xlu0 %v4948
  %v4950 = vpop.xlane.xlu0 %4949
  %v4951 = vsel %vm761, %v4877, 0.0
  %4952 = vadd.xlane.f32.xlu0 %v4951
  %v4953 = vpop.xlane.xlu0 %4952
  %v4954 = vsel %vm761, %v4879, 0.0
  %4955 = vadd.xlane.f32.xlu0 %v4954
  %v4956 = vpop.xlane.xlu0 %4955
  %v4957 = vsel %vm761, %v4881, 0.0
  %4958 = vadd.xlane.f32.xlu0 %v4957
  %v4959 = vpop.xlane.xlu0 %4958
  %v4960 = vsel %vm761, %v4883, 0.0
  %4961 = vadd.xlane.f32.xlu0 %v4960
  %v4962 = vpop.xlane.xlu0 %4961
  %v4963 = vsel %vm761, %v4885, 0.0
  %4964 = vadd.xlane.f32.xlu0 %v4963
  %v4965 = vpop.xlane.xlu0 %4964
  %v4966 = vsel %vm761, %v4887, 0.0
  %4967 = vadd.xlane.f32.xlu0 %v4966
  %v4968 = vpop.xlane.xlu0 %4967
  %v4969 = vsel %vm761, %v4889, 0.0
  %4970 = vadd.xlane.f32.xlu0 %v4969
  %v4971 = vpop.xlane.xlu0 %4970
  %v4972 = vsel %vm761, %v4891, 0.0
  %4973 = vadd.xlane.f32.xlu0 %v4972
  %v4974 = vpop.xlane.xlu0 %4973
  %v4975 = vsel %vm761, %v4893, 0.0
  %4976 = vadd.xlane.f32.xlu0 %v4975
  %v4977 = vpop.xlane.xlu0 %4976
  %v4978 = vsel %vm761, %v4895, 0.0
  %4979 = vadd.xlane.f32.xlu0 %v4978
  %v4980 = vpop.xlane.xlu0 %4979
  %v4981 = vsel %vm761, %v4897, 0.0
  %4982 = vadd.xlane.f32.xlu0 %v4981
  %v4983 = vpop.xlane.xlu0 %4982
  %v4984 = vsel %vm761, %v4899, 0.0
  %4985 = vadd.xlane.f32.xlu0 %v4984
  %v4986 = vpop.xlane.xlu0 %4985
  %v4987 = vsel %vm761, %v4901, 0.0
  %4988 = vadd.xlane.f32.xlu0 %v4987
  %v4989 = vpop.xlane.xlu0 %4988
  %v4990 = vsel %vm761, %v4903, 0.0
  %4991 = vadd.xlane.f32.xlu0 %v4990
  %v4992 = vpop.xlane.xlu0 %4991
  %v4993 = vsel %vm761, %v4905, 0.0
  %4994 = vadd.xlane.f32.xlu0 %v4993
  %v4995 = vpop.xlane.xlu0 %4994
  %v4996 = vsel %vm761, %v4907, 0.0
  %4997 = vadd.xlane.f32.xlu0 %v4996
  %v4998 = vpop.xlane.xlu0 %4997
  %v4999 = vsel %vm761, %v4909, 0.0
  %5000 = vadd.xlane.f32.xlu0 %v4999
  %v5001 = vpop.xlane.xlu0 %5000
  %v5002 = vsel %vm761, %v4911, 0.0
  %5003 = vadd.xlane.f32.xlu0 %v5002
  %v5004 = vpop.xlane.xlu0 %5003
  %v5005 = vsel %vm761, %v4913, 0.0
  %5006 = vadd.xlane.f32.xlu0 %v5005
  %v5007 = vpop.xlane.xlu0 %5006
  %v5008 = vsel %vm761, %v4915, 0.0
  %5009 = vadd.xlane.f32.xlu0 %v5008
  %v5010 = vpop.xlane.xlu0 %5009
  %v5011 = vsel %vm761, %v4917, 0.0
  %5012 = vadd.xlane.f32.xlu0 %v5011
  %v5013 = vpop.xlane.xlu0 %5012
  %v5014 = vpack.c.bf16 %v4855, %v4855
  %v5015 = vpack.c.bf16 %v4857, %v4857
  %v5016 = vpack.c.bf16 %v4859, %v4859
  %v5017 = vpack.c.bf16 %v4861, %v4861
  %v5018 = vpack.c.bf16 %v4863, %v4863
  %v5019 = vpack.c.bf16 %v4865, %v4865
  %v5020 = vpack.c.bf16 %v4867, %v4867
  %v5021 = vpack.c.bf16 %v4869, %v4869
  %v5022 = vpack.c.bf16 %v4871, %v4871
  %v5023 = vpack.c.bf16 %v4873, %v4873
  %v5024 = vpack.c.bf16 %v4875, %v4875
  %v5025 = vpack.c.bf16 %v4877, %v4877
  %v5026 = vpack.c.bf16 %v4879, %v4879
  %v5027 = vpack.c.bf16 %v4881, %v4881
  %v5028 = vpack.c.bf16 %v4883, %v4883
  %v5029 = vpack.c.bf16 %v4885, %v4885
  %v5030 = vpack.c.bf16 %v4887, %v4887
  %v5031 = vpack.c.bf16 %v4889, %v4889
  %v5032 = vpack.c.bf16 %v4891, %v4891
  %v5033 = vpack.c.bf16 %v4893, %v4893
  %v5034 = vpack.c.bf16 %v4895, %v4895
  %v5035 = vpack.c.bf16 %v4897, %v4897
  %v5036 = vpack.c.bf16 %v4899, %v4899
  %v5037 = vpack.c.bf16 %v4901, %v4901
  %v5038 = vpack.c.bf16 %v4903, %v4903
  %v5039 = vpack.c.bf16 %v4905, %v4905
  %v5040 = vpack.c.bf16 %v4907, %v4907
  %v5041 = vpack.c.bf16 %v4909, %v4909
  %v5042 = vpack.c.bf16 %v4911, %v4911
  %v5043 = vpack.c.bf16 %v4913, %v4913
  %v5044 = vpack.c.bf16 %v4915, %v4915
  %v5045 = vpack.c.bf16 %v4917, %v4917
  %v5048 = vunpack.c.l.b16 %v5014
  %v5049 = vunpack.c.l.b16 %v5015
  %v5050 = vpack.c.b16 %v5049, %v5048
  %5051 = vrot.lane.b32.xlu0 %v332, 40
  %v5052 = vpop.permute.xlu0 %5051
  %v5055 = vsel %vm761, %v5050, 0
  %5057 = vmatpush.bf16.msra.mxu0 0
  %5058 = vmatpush.bf16.msra.mxu0 0
  %5059 = vmatpush.bf16.msra.mxu0 0
  %5060 = vmatpush.bf16.msra.mxu0 0
  %5061 = vmatpush.bf16.msra.mxu0 0
  %5062 = vmatpush.bf16.msra.mxu0 0
  %5063 = vmatpush.bf16.msra.mxu0 0
  %5064 = vmatpush.bf16.msra.mxu0 %v5052
  %5065 = vmatmul.bf16.gmra.mxu0 %v5055
  %v5066 = vpop.f32.mrf.mxu0
  %v5067 = vadd.f32 0.0, %v5066
  %v5068 = vpop.f32.mrf.mxu0
  %v5069 = vadd.f32 0.0, %v5068
  %5070 = vdwg.mxu0
  %v5073 = vunpack.c.l.b16 %v5016
  %v5074 = vunpack.c.l.b16 %v5017
  %v5075 = vpack.c.b16 %v5074, %v5073
  %5076 = vrot.lane.b32.xlu0 %v360, 40
  %v5077 = vpop.permute.xlu0 %5076
  %v5080 = vsel %vm761, %v5075, 0
  %5082 = vmatpush.bf16.msra.mxu0 0
  %5083 = vmatpush.bf16.msra.mxu0 0
  %5084 = vmatpush.bf16.msra.mxu0 0
  %5085 = vmatpush.bf16.msra.mxu0 0
  %5086 = vmatpush.bf16.msra.mxu0 0
  %5087 = vmatpush.bf16.msra.mxu0 0
  %5088 = vmatpush.bf16.msra.mxu0 0
  %5089 = vmatpush.bf16.msra.mxu0 %v5077
  %5090 = vmatmul.bf16.gmra.mxu0 %v5080
  %v5091 = vpop.f32.mrf.mxu0
  %v5092 = vadd.f32 0.0, %v5091
  %v5093 = vpop.f32.mrf.mxu0
  %v5094 = vadd.f32 0.0, %v5093
  %5095 = vdwg.mxu0
  %v5098 = vunpack.c.l.b16 %v5018
  %v5099 = vunpack.c.l.b16 %v5019
  %v5100 = vpack.c.b16 %v5099, %v5098
  %5101 = vrot.lane.b32.xlu0 %v387, 40
  %v5102 = vpop.permute.xlu0 %5101
  %v5105 = vsel %vm761, %v5100, 0
  %5107 = vmatpush.bf16.msra.mxu0 0
  %5108 = vmatpush.bf16.msra.mxu0 0
  %5109 = vmatpush.bf16.msra.mxu0 0
  %5110 = vmatpush.bf16.msra.mxu0 0
  %5111 = vmatpush.bf16.msra.mxu0 0
  %5112 = vmatpush.bf16.msra.mxu0 0
  %5113 = vmatpush.bf16.msra.mxu0 0
  %5114 = vmatpush.bf16.msra.mxu0 %v5102
  %5115 = vmatmul.bf16.gmra.mxu0 %v5105
  %v5116 = vpop.f32.mrf.mxu0
  %v5117 = vadd.f32 0.0, %v5116
  %v5118 = vpop.f32.mrf.mxu0
  %v5119 = vadd.f32 0.0, %v5118
  %5120 = vdwg.mxu0
  %v5123 = vunpack.c.l.b16 %v5020
  %v5124 = vunpack.c.l.b16 %v5021
  %v5125 = vpack.c.b16 %v5124, %v5123
  %5126 = vrot.lane.b32.xlu0 %v414, 40
  %v5127 = vpop.permute.xlu0 %5126
  %v5130 = vsel %vm761, %v5125, 0
  %5132 = vmatpush.bf16.msra.mxu0 0
  %5133 = vmatpush.bf16.msra.mxu0 0
  %5134 = vmatpush.bf16.msra.mxu0 0
  %5135 = vmatpush.bf16.msra.mxu0 0
  %5136 = vmatpush.bf16.msra.mxu0 0
  %5137 = vmatpush.bf16.msra.mxu0 0
  %5138 = vmatpush.bf16.msra.mxu0 0
  %5139 = vmatpush.bf16.msra.mxu0 %v5127
  %5140 = vmatmul.bf16.gmra.mxu0 %v5130
  %v5141 = vpop.f32.mrf.mxu0
  %v5142 = vadd.f32 0.0, %v5141
  %v5143 = vpop.f32.mrf.mxu0
  %v5144 = vadd.f32 0.0, %v5143
  %5145 = vdwg.mxu0
  %v5148 = vunpack.c.l.b16 %v5022
  %v5149 = vunpack.c.l.b16 %v5023
  %v5150 = vpack.c.b16 %v5149, %v5148
  %5151 = vrot.lane.b32.xlu0 %v441, 40
  %v5152 = vpop.permute.xlu0 %5151
  %v5155 = vsel %vm761, %v5150, 0
  %5157 = vmatpush.bf16.msra.mxu0 0
  %5158 = vmatpush.bf16.msra.mxu0 0
  %5159 = vmatpush.bf16.msra.mxu0 0
  %5160 = vmatpush.bf16.msra.mxu0 0
  %5161 = vmatpush.bf16.msra.mxu0 0
  %5162 = vmatpush.bf16.msra.mxu0 0
  %5163 = vmatpush.bf16.msra.mxu0 0
  %5164 = vmatpush.bf16.msra.mxu0 %v5152
  %5165 = vmatmul.bf16.gmra.mxu0 %v5155
  %v5166 = vpop.f32.mrf.mxu0
  %v5167 = vadd.f32 0.0, %v5166
  %v5168 = vpop.f32.mrf.mxu0
  %v5169 = vadd.f32 0.0, %v5168
  %5170 = vdwg.mxu0
  %v5173 = vunpack.c.l.b16 %v5024
  %v5174 = vunpack.c.l.b16 %v5025
  %v5175 = vpack.c.b16 %v5174, %v5173
  %5176 = vrot.lane.b32.xlu0 %v468, 40
  %v5177 = vpop.permute.xlu0 %5176
  %v5180 = vsel %vm761, %v5175, 0
  %5182 = vmatpush.bf16.msra.mxu0 0
  %5183 = vmatpush.bf16.msra.mxu0 0
  %5184 = vmatpush.bf16.msra.mxu0 0
  %5185 = vmatpush.bf16.msra.mxu0 0
  %5186 = vmatpush.bf16.msra.mxu0 0
  %5187 = vmatpush.bf16.msra.mxu0 0
  %5188 = vmatpush.bf16.msra.mxu0 0
  %5189 = vmatpush.bf16.msra.mxu0 %v5177
  %5190 = vmatmul.bf16.gmra.mxu0 %v5180
  %v5191 = vpop.f32.mrf.mxu0
  %v5192 = vadd.f32 0.0, %v5191
  %v5193 = vpop.f32.mrf.mxu0
  %v5194 = vadd.f32 0.0, %v5193
  %5195 = vdwg.mxu0
  %v5198 = vunpack.c.l.b16 %v5026
  %v5199 = vunpack.c.l.b16 %v5027
  %v5200 = vpack.c.b16 %v5199, %v5198
  %5201 = vrot.lane.b32.xlu0 %v495, 40
  %v5202 = vpop.permute.xlu0 %5201
  %v5205 = vsel %vm761, %v5200, 0
  %5207 = vmatpush.bf16.msra.mxu0 0
  %5208 = vmatpush.bf16.msra.mxu0 0
  %5209 = vmatpush.bf16.msra.mxu0 0
  %5210 = vmatpush.bf16.msra.mxu0 0
  %5211 = vmatpush.bf16.msra.mxu0 0
  %5212 = vmatpush.bf16.msra.mxu0 0
  %5213 = vmatpush.bf16.msra.mxu0 0
  %5214 = vmatpush.bf16.msra.mxu0 %v5202
  %5215 = vmatmul.bf16.gmra.mxu0 %v5205
  %v5216 = vpop.f32.mrf.mxu0
  %v5217 = vadd.f32 0.0, %v5216
  %v5218 = vpop.f32.mrf.mxu0
  %v5219 = vadd.f32 0.0, %v5218
  %5220 = vdwg.mxu0
  %v5223 = vunpack.c.l.b16 %v5028
  %v5224 = vunpack.c.l.b16 %v5029
  %v5225 = vpack.c.b16 %v5224, %v5223
  %5226 = vrot.lane.b32.xlu0 %v522, 40
  %v5227 = vpop.permute.xlu0 %5226
  %v5230 = vsel %vm761, %v5225, 0
  %5232 = vmatpush.bf16.msra.mxu0 0
  %5233 = vmatpush.bf16.msra.mxu0 0
  %5234 = vmatpush.bf16.msra.mxu0 0
  %5235 = vmatpush.bf16.msra.mxu0 0
  %5236 = vmatpush.bf16.msra.mxu0 0
  %5237 = vmatpush.bf16.msra.mxu0 0
  %5238 = vmatpush.bf16.msra.mxu0 0
  %5239 = vmatpush.bf16.msra.mxu0 %v5227
  %5240 = vmatmul.bf16.gmra.mxu0 %v5230
  %v5241 = vpop.f32.mrf.mxu0
  %v5242 = vadd.f32 0.0, %v5241
  %v5243 = vpop.f32.mrf.mxu0
  %v5244 = vadd.f32 0.0, %v5243
  %5245 = vdwg.mxu0
  %v5248 = vunpack.c.l.b16 %v5030
  %v5249 = vunpack.c.l.b16 %v5031
  %v5250 = vpack.c.b16 %v5249, %v5248
  %5251 = vrot.lane.b32.xlu0 %v549, 40
  %v5252 = vpop.permute.xlu0 %5251
  %v5255 = vsel %vm761, %v5250, 0
  %5257 = vmatpush.bf16.msra.mxu0 0
  %5258 = vmatpush.bf16.msra.mxu0 0
  %5259 = vmatpush.bf16.msra.mxu0 0
  %5260 = vmatpush.bf16.msra.mxu0 0
  %5261 = vmatpush.bf16.msra.mxu0 0
  %5262 = vmatpush.bf16.msra.mxu0 0
  %5263 = vmatpush.bf16.msra.mxu0 0
  %5264 = vmatpush.bf16.msra.mxu0 %v5252
  %5265 = vmatmul.bf16.gmra.mxu0 %v5255
  %v5266 = vpop.f32.mrf.mxu0
  %v5267 = vadd.f32 0.0, %v5266
  %v5268 = vpop.f32.mrf.mxu0
  %v5269 = vadd.f32 0.0, %v5268
  %5270 = vdwg.mxu0
  %v5273 = vunpack.c.l.b16 %v5032
  %v5274 = vunpack.c.l.b16 %v5033
  %v5275 = vpack.c.b16 %v5274, %v5273
  %5276 = vrot.lane.b32.xlu0 %v576, 40
  %v5277 = vpop.permute.xlu0 %5276
  %v5280 = vsel %vm761, %v5275, 0
  %5282 = vmatpush.bf16.msra.mxu0 0
  %5283 = vmatpush.bf16.msra.mxu0 0
  %5284 = vmatpush.bf16.msra.mxu0 0
  %5285 = vmatpush.bf16.msra.mxu0 0
  %5286 = vmatpush.bf16.msra.mxu0 0
  %5287 = vmatpush.bf16.msra.mxu0 0
  %5288 = vmatpush.bf16.msra.mxu0 0
  %5289 = vmatpush.bf16.msra.mxu0 %v5277
  %5290 = vmatmul.bf16.gmra.mxu0 %v5280
  %v5291 = vpop.f32.mrf.mxu0
  %v5292 = vadd.f32 0.0, %v5291
  %v5293 = vpop.f32.mrf.mxu0
  %v5294 = vadd.f32 0.0, %v5293
  %5295 = vdwg.mxu0
  %v5298 = vunpack.c.l.b16 %v5034
  %v5299 = vunpack.c.l.b16 %v5035
  %v5300 = vpack.c.b16 %v5299, %v5298
  %5301 = vrot.lane.b32.xlu0 %v603, 40
  %v5302 = vpop.permute.xlu0 %5301
  %v5305 = vsel %vm761, %v5300, 0
  %5307 = vmatpush.bf16.msra.mxu0 0
  %5308 = vmatpush.bf16.msra.mxu0 0
  %5309 = vmatpush.bf16.msra.mxu0 0
  %5310 = vmatpush.bf16.msra.mxu0 0
  %5311 = vmatpush.bf16.msra.mxu0 0
  %5312 = vmatpush.bf16.msra.mxu0 0
  %5313 = vmatpush.bf16.msra.mxu0 0
  %5314 = vmatpush.bf16.msra.mxu0 %v5302
  %5315 = vmatmul.bf16.gmra.mxu0 %v5305
  %v5316 = vpop.f32.mrf.mxu0
  %v5317 = vadd.f32 0.0, %v5316
  %v5318 = vpop.f32.mrf.mxu0
  %v5319 = vadd.f32 0.0, %v5318
  %5320 = vdwg.mxu0
  %v5323 = vunpack.c.l.b16 %v5036
  %v5324 = vunpack.c.l.b16 %v5037
  %v5325 = vpack.c.b16 %v5324, %v5323
  %5326 = vrot.lane.b32.xlu0 %v630, 40
  %v5327 = vpop.permute.xlu0 %5326
  %v5330 = vsel %vm761, %v5325, 0
  %5332 = vmatpush.bf16.msra.mxu0 0
  %5333 = vmatpush.bf16.msra.mxu0 0
  %5334 = vmatpush.bf16.msra.mxu0 0
  %5335 = vmatpush.bf16.msra.mxu0 0
  %5336 = vmatpush.bf16.msra.mxu0 0
  %5337 = vmatpush.bf16.msra.mxu0 0
  %5338 = vmatpush.bf16.msra.mxu0 0
  %5339 = vmatpush.bf16.msra.mxu0 %v5327
  %5340 = vmatmul.bf16.gmra.mxu0 %v5330
  %v5341 = vpop.f32.mrf.mxu0
  %v5342 = vadd.f32 0.0, %v5341
  %v5343 = vpop.f32.mrf.mxu0
  %v5344 = vadd.f32 0.0, %v5343
  %5345 = vdwg.mxu0
  %v5348 = vunpack.c.l.b16 %v5038
  %v5349 = vunpack.c.l.b16 %v5039
  %v5350 = vpack.c.b16 %v5349, %v5348
  %5351 = vrot.lane.b32.xlu0 %v657, 40
  %v5352 = vpop.permute.xlu0 %5351
  %v5355 = vsel %vm761, %v5350, 0
  %5357 = vmatpush.bf16.msra.mxu0 0
  %5358 = vmatpush.bf16.msra.mxu0 0
  %5359 = vmatpush.bf16.msra.mxu0 0
  %5360 = vmatpush.bf16.msra.mxu0 0
  %5361 = vmatpush.bf16.msra.mxu0 0
  %5362 = vmatpush.bf16.msra.mxu0 0
  %5363 = vmatpush.bf16.msra.mxu0 0
  %5364 = vmatpush.bf16.msra.mxu0 %v5352
  %5365 = vmatmul.bf16.gmra.mxu0 %v5355
  %v5366 = vpop.f32.mrf.mxu0
  %v5367 = vadd.f32 0.0, %v5366
  %v5368 = vpop.f32.mrf.mxu0
  %v5369 = vadd.f32 0.0, %v5368
  %5370 = vdwg.mxu0
  %v5373 = vunpack.c.l.b16 %v5040
  %v5374 = vunpack.c.l.b16 %v5041
  %v5375 = vpack.c.b16 %v5374, %v5373
  %5376 = vrot.lane.b32.xlu0 %v684, 40
  %v5377 = vpop.permute.xlu0 %5376
  %v5380 = vsel %vm761, %v5375, 0
  %5382 = vmatpush.bf16.msra.mxu0 0
  %5383 = vmatpush.bf16.msra.mxu0 0
  %5384 = vmatpush.bf16.msra.mxu0 0
  %5385 = vmatpush.bf16.msra.mxu0 0
  %5386 = vmatpush.bf16.msra.mxu0 0
  %5387 = vmatpush.bf16.msra.mxu0 0
  %5388 = vmatpush.bf16.msra.mxu0 0
  %5389 = vmatpush.bf16.msra.mxu0 %v5377
  %5390 = vmatmul.bf16.gmra.mxu0 %v5380
  %v5391 = vpop.f32.mrf.mxu0
  %v5392 = vadd.f32 0.0, %v5391
  %v5393 = vpop.f32.mrf.mxu0
  %v5394 = vadd.f32 0.0, %v5393
  %5395 = vdwg.mxu0
  %v5398 = vunpack.c.l.b16 %v5042
  %v5399 = vunpack.c.l.b16 %v5043
  %v5400 = vpack.c.b16 %v5399, %v5398
  %5401 = vrot.lane.b32.xlu0 %v711, 40
  %v5402 = vpop.permute.xlu0 %5401
  %v5405 = vsel %vm761, %v5400, 0
  %5407 = vmatpush.bf16.msra.mxu0 0
  %5408 = vmatpush.bf16.msra.mxu0 0
  %5409 = vmatpush.bf16.msra.mxu0 0
  %5410 = vmatpush.bf16.msra.mxu0 0
  %5411 = vmatpush.bf16.msra.mxu0 0
  %5412 = vmatpush.bf16.msra.mxu0 0
  %5413 = vmatpush.bf16.msra.mxu0 0
  %5414 = vmatpush.bf16.msra.mxu0 %v5402
  %5415 = vmatmul.bf16.gmra.mxu0 %v5405
  %v5416 = vpop.f32.mrf.mxu0
  %v5417 = vadd.f32 0.0, %v5416
  %v5418 = vpop.f32.mrf.mxu0
  %v5419 = vadd.f32 0.0, %v5418
  %5420 = vdwg.mxu0
  %v5423 = vunpack.c.l.b16 %v5044
  %v5424 = vunpack.c.l.b16 %v5045
  %v5425 = vpack.c.b16 %v5424, %v5423
  %5426 = vrot.lane.b32.xlu0 %v738, 40
  %v5427 = vpop.permute.xlu0 %5426
  %v5430 = vsel %vm761, %v5425, 0
  %5432 = vmatpush.bf16.msra.mxu0 0
  %5433 = vmatpush.bf16.msra.mxu0 0
  %5434 = vmatpush.bf16.msra.mxu0 0
  %5435 = vmatpush.bf16.msra.mxu0 0
  %5436 = vmatpush.bf16.msra.mxu0 0
  %5437 = vmatpush.bf16.msra.mxu0 0
  %5438 = vmatpush.bf16.msra.mxu0 0
  %5439 = vmatpush.bf16.msra.mxu0 %v5427
  %5440 = vmatmul.bf16.gmra.mxu0 %v5430
  %v5441 = vpop.f32.mrf.mxu0
  %v5442 = vadd.f32 0.0, %v5441
  %v5443 = vpop.f32.mrf.mxu0
  %v5444 = vadd.f32 0.0, %v5443
  %5445 = vdwg.mxu0
  %v5446 = vrcp.pop %v4920
  %v5447 = vrcp.pop %v4923
  %v5448 = vrcp.pop %v4926
  %v5449 = vrcp.pop %v4929
  %v5450 = vrcp.pop %v4932
  %v5451 = vrcp.pop %v4935
  %v5452 = vrcp.pop %v4938
  %v5453 = vrcp.pop %v4941
  %v5454 = vrcp.pop %v4944
  %v5455 = vrcp.pop %v4947
  %v5456 = vrcp.pop %v4950
  %v5457 = vrcp.pop %v4953
  %v5458 = vrcp.pop %v4956
  %v5459 = vrcp.pop %v4959
  %v5460 = vrcp.pop %v4962
  %v5461 = vrcp.pop %v4965
  %v5462 = vrcp.pop %v4968
  %v5463 = vrcp.pop %v4971
  %v5464 = vrcp.pop %v4974
  %v5465 = vrcp.pop %v4977
  %v5466 = vrcp.pop %v4980
  %v5467 = vrcp.pop %v4983
  %v5468 = vrcp.pop %v4986
  %v5469 = vrcp.pop %v4989
  %v5470 = vrcp.pop %v4992
  %v5471 = vrcp.pop %v4995
  %v5472 = vrcp.pop %v4998
  %v5473 = vrcp.pop %v5001
  %v5474 = vrcp.pop %v5004
  %v5475 = vrcp.pop %v5007
  %v5476 = vrcp.pop %v5010
  %v5477 = vrcp.pop %v5013
  %v5478 = vmul.f32 %v5067, %v5446
  %v5479 = vmul.f32 %v5069, %v5447
  %v5480 = vmul.f32 %v5092, %v5448
  %v5481 = vmul.f32 %v5094, %v5449
  %v5482 = vmul.f32 %v5117, %v5450
  %v5483 = vmul.f32 %v5119, %v5451
  %v5484 = vmul.f32 %v5142, %v5452
  %v5485 = vmul.f32 %v5144, %v5453
  %v5486 = vmul.f32 %v5167, %v5454
  %v5487 = vmul.f32 %v5169, %v5455
  %v5488 = vmul.f32 %v5192, %v5456
  %v5489 = vmul.f32 %v5194, %v5457
  %v5490 = vmul.f32 %v5217, %v5458
  %v5491 = vmul.f32 %v5219, %v5459
  %v5492 = vmul.f32 %v5242, %v5460
  %v5493 = vmul.f32 %v5244, %v5461
  %v5494 = vmul.f32 %v5267, %v5462
  %v5495 = vmul.f32 %v5269, %v5463
  %v5496 = vmul.f32 %v5292, %v5464
  %v5497 = vmul.f32 %v5294, %v5465
  %v5498 = vmul.f32 %v5317, %v5466
  %v5499 = vmul.f32 %v5319, %v5467
  %v5500 = vmul.f32 %v5342, %v5468
  %v5501 = vmul.f32 %v5344, %v5469
  %v5502 = vmul.f32 %v5367, %v5470
  %v5503 = vmul.f32 %v5369, %v5471
  %v5504 = vmul.f32 %v5392, %v5472
  %v5505 = vmul.f32 %v5394, %v5473
  %v5506 = vmul.f32 %v5417, %v5474
  %v5507 = vmul.f32 %v5419, %v5475
  %v5508 = vmul.f32 %v5442, %v5476
  %v5509 = vmul.f32 %v5444, %v5477
  %v5510 = vpack.c.bf16 %v5478, %v5478
  %v5511 = vpack.c.bf16 %v5479, %v5479
  %v5512 = vpack.c.bf16 %v5480, %v5480
  %v5513 = vpack.c.bf16 %v5481, %v5481
  %v5514 = vpack.c.bf16 %v5482, %v5482
  %v5515 = vpack.c.bf16 %v5483, %v5483
  %v5516 = vpack.c.bf16 %v5484, %v5484
  %v5517 = vpack.c.bf16 %v5485, %v5485
  %v5518 = vpack.c.bf16 %v5486, %v5486
  %v5519 = vpack.c.bf16 %v5487, %v5487
  %v5520 = vpack.c.bf16 %v5488, %v5488
  %v5521 = vpack.c.bf16 %v5489, %v5489
  %v5522 = vpack.c.bf16 %v5490, %v5490
  %v5523 = vpack.c.bf16 %v5491, %v5491
  %v5524 = vpack.c.bf16 %v5492, %v5492
  %v5525 = vpack.c.bf16 %v5493, %v5493
  %v5526 = vpack.c.bf16 %v5494, %v5494
  %v5527 = vpack.c.bf16 %v5495, %v5495
  %v5528 = vpack.c.bf16 %v5496, %v5496
  %v5529 = vpack.c.bf16 %v5497, %v5497
  %v5530 = vpack.c.bf16 %v5498, %v5498
  %v5531 = vpack.c.bf16 %v5499, %v5499
  %v5532 = vpack.c.bf16 %v5500, %v5500
  %v5533 = vpack.c.bf16 %v5501, %v5501
  %v5534 = vpack.c.bf16 %v5502, %v5502
  %v5535 = vpack.c.bf16 %v5503, %v5503
  %v5536 = vpack.c.bf16 %v5504, %v5504
  %v5537 = vpack.c.bf16 %v5505, %v5505
  %v5538 = vpack.c.bf16 %v5506, %v5506
  %v5539 = vpack.c.bf16 %v5507, %v5507
  %v5540 = vpack.c.bf16 %v5508, %v5508
  %v5541 = vpack.c.bf16 %v5509, %v5509
  %5574 = vrot.lane.b32.xlu0 %v5510, 24
  %v5575 = vpop.permute.xlu0 %5574
  %5576 = vrot.lane.b32.xlu0 %v5511, 24
  %v5577 = vpop.permute.xlu0 %5576
  %5578 = vrot.lane.b32.xlu0 %v5512, 24
  %v5579 = vpop.permute.xlu0 %5578
  %5580 = vrot.lane.b32.xlu0 %v5513, 24
  %v5581 = vpop.permute.xlu0 %5580
  %5582 = vrot.lane.b32.xlu0 %v5514, 24
  %v5583 = vpop.permute.xlu0 %5582
  %5584 = vrot.lane.b32.xlu0 %v5515, 24
  %v5585 = vpop.permute.xlu0 %5584
  %5586 = vrot.lane.b32.xlu0 %v5516, 24
  %v5587 = vpop.permute.xlu0 %5586
  %5588 = vrot.lane.b32.xlu0 %v5517, 24
  %v5589 = vpop.permute.xlu0 %5588
  %5590 = vrot.lane.b32.xlu0 %v5518, 24
  %v5591 = vpop.permute.xlu0 %5590
  %5592 = vrot.lane.b32.xlu0 %v5519, 24
  %v5593 = vpop.permute.xlu0 %5592
  %5594 = vrot.lane.b32.xlu0 %v5520, 24
  %v5595 = vpop.permute.xlu0 %5594
  %5596 = vrot.lane.b32.xlu0 %v5521, 24
  %v5597 = vpop.permute.xlu0 %5596
  %5598 = vrot.lane.b32.xlu0 %v5522, 24
  %v5599 = vpop.permute.xlu0 %5598
  %5600 = vrot.lane.b32.xlu0 %v5523, 24
  %v5601 = vpop.permute.xlu0 %5600
  %5602 = vrot.lane.b32.xlu0 %v5524, 24
  %v5603 = vpop.permute.xlu0 %5602
  %5604 = vrot.lane.b32.xlu0 %v5525, 24
  %v5605 = vpop.permute.xlu0 %5604
  %5606 = vrot.lane.b32.xlu0 %v5526, 24
  %v5607 = vpop.permute.xlu0 %5606
  %5608 = vrot.lane.b32.xlu0 %v5527, 24
  %v5609 = vpop.permute.xlu0 %5608
  %5610 = vrot.lane.b32.xlu0 %v5528, 24
  %v5611 = vpop.permute.xlu0 %5610
  %5612 = vrot.lane.b32.xlu0 %v5529, 24
  %v5613 = vpop.permute.xlu0 %5612
  %5614 = vrot.lane.b32.xlu0 %v5530, 24
  %v5615 = vpop.permute.xlu0 %5614
  %5616 = vrot.lane.b32.xlu0 %v5531, 24
  %v5617 = vpop.permute.xlu0 %5616
  %5618 = vrot.lane.b32.xlu0 %v5532, 24
  %v5619 = vpop.permute.xlu0 %5618
  %5620 = vrot.lane.b32.xlu0 %v5533, 24
  %v5621 = vpop.permute.xlu0 %5620
  %5622 = vrot.lane.b32.xlu0 %v5534, 24
  %v5623 = vpop.permute.xlu0 %5622
  %5624 = vrot.lane.b32.xlu0 %v5535, 24
  %v5625 = vpop.permute.xlu0 %5624
  %5626 = vrot.lane.b32.xlu0 %v5536, 24
  %v5627 = vpop.permute.xlu0 %5626
  %5628 = vrot.lane.b32.xlu0 %v5537, 24
  %v5629 = vpop.permute.xlu0 %5628
  %5630 = vrot.lane.b32.xlu0 %v5538, 24
  %v5631 = vpop.permute.xlu0 %5630
  %5632 = vrot.lane.b32.xlu0 %v5539, 24
  %v5633 = vpop.permute.xlu0 %5632
  %5634 = vrot.lane.b32.xlu0 %v5540, 24
  %v5635 = vpop.permute.xlu0 %5634
  %5636 = vrot.lane.b32.xlu0 %v5541, 24
  %v5637 = vpop.permute.xlu0 %5636
  %vm5670 = vcmask 257216
  %5671 = vst.msk [vmem:[#allocation2] sm:$0xf] %vm5670, %v5575
  %5672 = vst.msk [vmem:[#allocation2 + $0x4] sm:$0xf] %vm5670, %v5577
  %5673 = vst.msk [vmem:[#allocation2 + $0x8] sm:$0xf] %vm5670, %v5579
  %5674 = vst.msk [vmem:[#allocation2 + $0xc] sm:$0xf] %vm5670, %v5581
  %5675 = vst.msk [vmem:[#allocation2 + $0x10] sm:$0xf] %vm5670, %v5583
  %5676 = vst.msk [vmem:[#allocation2 + $0x14] sm:$0xf] %vm5670, %v5585
  %5677 = vst.msk [vmem:[#allocation2 + $0x18] sm:$0xf] %vm5670, %v5587
  %5678 = vst.msk [vmem:[#allocation2 + $0x1c] sm:$0xf] %vm5670, %v5589
  %5679 = vst.msk [vmem:[#allocation2 + $0x20] sm:$0xf] %vm5670, %v5591
  %5680 = vst.msk [vmem:[#allocation2 + $0x24] sm:$0xf] %vm5670, %v5593
  %5681 = vst.msk [vmem:[#allocation2 + $0x28] sm:$0xf] %vm5670, %v5595
  %5682 = vst.msk [vmem:[#allocation2 + $0x2c] sm:$0xf] %vm5670, %v5597
  %5683 = vst.msk [vmem:[#allocation2 + $0x30] sm:$0xf] %vm5670, %v5599
  %5684 = vst.msk [vmem:[#allocation2 + $0x34] sm:$0xf] %vm5670, %v5601
  %5685 = vst.msk [vmem:[#allocation2 + $0x38] sm:$0xf] %vm5670, %v5603
  %5686 = vst.msk [vmem:[#allocation2 + $0x3c] sm:$0xf] %vm5670, %v5605
  %5687 = vst.msk [vmem:[#allocation2 + $0x40] sm:$0xf] %vm5670, %v5607
  %5688 = vst.msk [vmem:[#allocation2 + $0x44] sm:$0xf] %vm5670, %v5609
  %5689 = vst.msk [vmem:[#allocation2 + $0x48] sm:$0xf] %vm5670, %v5611
  %5690 = vst.msk [vmem:[#allocation2 + $0x4c] sm:$0xf] %vm5670, %v5613
  %5691 = vst.msk [vmem:[#allocation2 + $0x50] sm:$0xf] %vm5670, %v5615
  %5692 = vst.msk [vmem:[#allocation2 + $0x54] sm:$0xf] %vm5670, %v5617
  %5693 = vst.msk [vmem:[#allocation2 + $0x58] sm:$0xf] %vm5670, %v5619
  %5694 = vst.msk [vmem:[#allocation2 + $0x5c] sm:$0xf] %vm5670, %v5621
  %5695 = vst.msk [vmem:[#allocation2 + $0x60] sm:$0xf] %vm5670, %v5623
  %5696 = vst.msk [vmem:[#allocation2 + $0x64] sm:$0xf] %vm5670, %v5625
  %5697 = vst.msk [vmem:[#allocation2 + $0x68] sm:$0xf] %vm5670, %v5627
  %5698 = vst.msk [vmem:[#allocation2 + $0x6c] sm:$0xf] %vm5670, %v5629
  %5699 = vst.msk [vmem:[#allocation2 + $0x70] sm:$0xf] %vm5670, %v5631
  %5700 = vst.msk [vmem:[#allocation2 + $0x74] sm:$0xf] %vm5670, %v5633
  %5701 = vst.msk [vmem:[#allocation2 + $0x78] sm:$0xf] %vm5670, %v5635
  %5702 = vst.msk [vmem:[#allocation2 + $0x7c] sm:$0xf] %vm5670, %v5637
  %v5703 = vld [vmem:[#allocation2] sm:$0xf]
  %v5704 = vld [vmem:[#allocation2 + $0x4] sm:$0xf]
  %v5705 = vld [vmem:[#allocation2 + $0x8] sm:$0xf]
  %v5706 = vld [vmem:[#allocation2 + $0xc] sm:$0xf]
  %v5707 = vld [vmem:[#allocation2 + $0x10] sm:$0xf]
  %v5708 = vld [vmem:[#allocation2 + $0x14] sm:$0xf]
  %v5709 = vld [vmem:[#allocation2 + $0x18] sm:$0xf]
  %v5710 = vld [vmem:[#allocation2 + $0x1c] sm:$0xf]
  %v5711 = vld [vmem:[#allocation2 + $0x20] sm:$0xf]
  %v5712 = vld [vmem:[#allocation2 + $0x24] sm:$0xf]
  %v5713 = vld [vmem:[#allocation2 + $0x28] sm:$0xf]
  %v5714 = vld [vmem:[#allocation2 + $0x2c] sm:$0xf]
  %v5715 = vld [vmem:[#allocation2 + $0x30] sm:$0xf]
  %v5716 = vld [vmem:[#allocation2 + $0x34] sm:$0xf]
  %v5717 = vld [vmem:[#allocation2 + $0x38] sm:$0xf]
  %v5718 = vld [vmem:[#allocation2 + $0x3c] sm:$0xf]
  %v5719 = vld [vmem:[#allocation2 + $0x40] sm:$0xf]
  %v5720 = vld [vmem:[#allocation2 + $0x44] sm:$0xf]
  %v5721 = vld [vmem:[#allocation2 + $0x48] sm:$0xf]
  %v5722 = vld [vmem:[#allocation2 + $0x4c] sm:$0xf]
  %v5723 = vld [vmem:[#allocation2 + $0x50] sm:$0xf]
  %v5724 = vld [vmem:[#allocation2 + $0x54] sm:$0xf]
  %v5725 = vld [vmem:[#allocation2 + $0x58] sm:$0xf]
  %v5726 = vld [vmem:[#allocation2 + $0x5c] sm:$0xf]
  %v5727 = vld [vmem:[#allocation2 + $0x60] sm:$0xf]
  %v5728 = vld [vmem:[#allocation2 + $0x64] sm:$0xf]
  %v5729 = vld [vmem:[#allocation2 + $0x68] sm:$0xf]
  %v5730 = vld [vmem:[#allocation2 + $0x6c] sm:$0xf]
  %v5731 = vld [vmem:[#allocation2 + $0x70] sm:$0xf]
  %v5732 = vld [vmem:[#allocation2 + $0x74] sm:$0xf]
  %v5733 = vld [vmem:[#allocation2 + $0x78] sm:$0xf]
  %v5734 = vld [vmem:[#allocation2 + $0x7c] sm:$0xf]
  %v5735 = vld [vmem:[%s3] sm:$0xf]
  %v5736 = vld [vmem:[%s3 + $0x4] sm:$0xf]
  %v5737 = vld [vmem:[%s3 + $0x8] sm:$0xf]
  %v5738 = vld [vmem:[%s3 + $0xc] sm:$0xf]
  %v5739 = vld [vmem:[%s4] sm:$0x1]
  %v5741 = vperm.slane %v5739, 0
  %v5775 = vunpack.c.l.b16 %v5703
  %v5776 = vunpack.c.l.b16 %v5704
  %v5777 = vunpack.c.l.b16 %v5705
  %v5778 = vunpack.c.l.b16 %v5706
  %v5779 = vunpack.c.l.b16 %v5707
  %v5780 = vunpack.c.l.b16 %v5708
  %v5781 = vunpack.c.l.b16 %v5709
  %v5782 = vunpack.c.l.b16 %v5710
  %v5783 = vunpack.c.l.b16 %v5711
  %v5784 = vunpack.c.l.b16 %v5712
  %v5785 = vunpack.c.l.b16 %v5713
  %v5786 = vunpack.c.l.b16 %v5714
  %v5787 = vunpack.c.l.b16 %v5715
  %v5788 = vunpack.c.l.b16 %v5716
  %v5789 = vunpack.c.l.b16 %v5717
  %v5790 = vunpack.c.l.b16 %v5718
  %v5791 = vunpack.c.l.b16 %v5719
  %v5792 = vunpack.c.l.b16 %v5720
  %v5793 = vunpack.c.l.b16 %v5721
  %v5794 = vunpack.c.l.b16 %v5722
  %v5795 = vunpack.c.l.b16 %v5723
  %v5796 = vunpack.c.l.b16 %v5724
  %v5797 = vunpack.c.l.b16 %v5725
  %v5798 = vunpack.c.l.b16 %v5726
  %v5799 = vunpack.c.l.b16 %v5727
  %v5800 = vunpack.c.l.b16 %v5728
  %v5801 = vunpack.c.l.b16 %v5729
  %v5802 = vunpack.c.l.b16 %v5730
  %v5803 = vunpack.c.l.b16 %v5731
  %v5804 = vunpack.c.l.b16 %v5732
  %v5805 = vunpack.c.l.b16 %v5733
  %v5806 = vunpack.c.l.b16 %v5734
  %v5807 = vpack.c.b16 %v5776, %v5775
  %v5808 = vpack.c.b16 %v5778, %v5777
  %v5809 = vpack.c.b16 %v5780, %v5779
  %v5810 = vpack.c.b16 %v5782, %v5781
  %v5811 = vpack.c.b16 %v5784, %v5783
  %v5812 = vpack.c.b16 %v5786, %v5785
  %v5813 = vpack.c.b16 %v5788, %v5787
  %v5814 = vpack.c.b16 %v5790, %v5789
  %v5815 = vpack.c.b16 %v5792, %v5791
  %v5816 = vpack.c.b16 %v5794, %v5793
  %v5817 = vpack.c.b16 %v5796, %v5795
  %v5818 = vpack.c.b16 %v5798, %v5797
  %v5819 = vpack.c.b16 %v5800, %v5799
  %v5820 = vpack.c.b16 %v5802, %v5801
  %v5821 = vpack.c.b16 %v5804, %v5803
  %v5822 = vpack.c.b16 %v5806, %v5805
  %v5827 = vunpack.c.l.b16 %v5735
  %v5828 = vunpack.c.l.b16 %v5736
  %v5829 = vunpack.c.l.b16 %v5737
  %v5830 = vunpack.c.l.b16 %v5738
  %v5831 = vpack.c.b16 %v5828, %v5827
  %v5832 = vpack.c.b16 %v5830, %v5829
  %v5836 = vsel %vm156, %v5807, 0
  %v5839 = vsel %vm156, %v5808, 0
  %v5842 = vsel %vm156, %v5809, 0
  %v5845 = vsel %vm156, %v5810, 0
  %v5848 = vsel %vm156, %v5811, 0
  %v5851 = vsel %vm156, %v5812, 0
  %v5854 = vsel %vm156, %v5813, 0
  %v5857 = vsel %vm156, %v5814, 0
  %v5860 = vsel %vm156, %v5815, 0
  %v5863 = vsel %vm156, %v5816, 0
  %v5866 = vsel %vm156, %v5817, 0
  %v5869 = vsel %vm156, %v5818, 0
  %v5872 = vsel %vm156, %v5819, 0
  %v5875 = vsel %vm156, %v5820, 0
  %v5878 = vsel %vm156, %v5821, 0
  %v5881 = vsel %vm156, %v5822, 0
  %5883 = vmatpush.bf16.msra.mxu0 0
  %5884 = vmatpush.bf16.msra.mxu0 0
  %5885 = vmatpush.bf16.msra.mxu0 0
  %5886 = vmatpush.bf16.msra.mxu0 0
  %5887 = vmatpush.bf16.msra.mxu0 0
  %5888 = vmatpush.bf16.msra.mxu0 0
  %5889 = vmatpush.bf16.msra.mxu0 %v5832
  %5890 = vmatpush.bf16.msra.mxu0 %v5831
  %5891 = vmatmul.bf16.gmra.mxu0 %v5836
  %v5892 = vpop.f32.mrf.mxu0
  %v5893 = vadd.f32 %v5741, %v5892
  %v5894 = vpop.f32.mrf.mxu0
  %v5895 = vadd.f32 %v5741, %v5894
  %5896 = vmatmul.bf16.gmra.mxu0 %v5839
  %v5897 = vpop.f32.mrf.mxu0
  %v5898 = vadd.f32 %v5741, %v5897
  %v5899 = vpop.f32.mrf.mxu0
  %v5900 = vadd.f32 %v5741, %v5899
  %5901 = vmatmul.bf16.gmra.mxu0 %v5842
  %v5902 = vpop.f32.mrf.mxu0
  %v5903 = vadd.f32 %v5741, %v5902
  %v5904 = vpop.f32.mrf.mxu0
  %v5905 = vadd.f32 %v5741, %v5904
  %5906 = vmatmul.bf16.gmra.mxu0 %v5845
  %v5907 = vpop.f32.mrf.mxu0
  %v5908 = vadd.f32 %v5741, %v5907
  %v5909 = vpop.f32.mrf.mxu0
  %v5910 = vadd.f32 %v5741, %v5909
  %5911 = vmatmul.bf16.gmra.mxu0 %v5848
  %v5912 = vpop.f32.mrf.mxu0
  %v5913 = vadd.f32 %v5741, %v5912
  %v5914 = vpop.f32.mrf.mxu0
  %v5915 = vadd.f32 %v5741, %v5914
  %5916 = vmatmul.bf16.gmra.mxu0 %v5851
  %v5917 = vpop.f32.mrf.mxu0
  %v5918 = vadd.f32 %v5741, %v5917
  %v5919 = vpop.f32.mrf.mxu0
  %v5920 = vadd.f32 %v5741, %v5919
  %5921 = vmatmul.bf16.gmra.mxu0 %v5854
  %v5922 = vpop.f32.mrf.mxu0
  %v5923 = vadd.f32 %v5741, %v5922
  %v5924 = vpop.f32.mrf.mxu0
  %v5925 = vadd.f32 %v5741, %v5924
  %5926 = vmatmul.bf16.gmra.mxu0 %v5857
  %v5927 = vpop.f32.mrf.mxu0
  %v5928 = vadd.f32 %v5741, %v5927
  %v5929 = vpop.f32.mrf.mxu0
  %v5930 = vadd.f32 %v5741, %v5929
  %5931 = vmatmul.bf16.gmra.mxu0 %v5860
  %v5932 = vpop.f32.mrf.mxu0
  %v5933 = vadd.f32 %v5741, %v5932
  %v5934 = vpop.f32.mrf.mxu0
  %v5935 = vadd.f32 %v5741, %v5934
  %5936 = vmatmul.bf16.gmra.mxu0 %v5863
  %v5937 = vpop.f32.mrf.mxu0
  %v5938 = vadd.f32 %v5741, %v5937
  %v5939 = vpop.f32.mrf.mxu0
  %v5940 = vadd.f32 %v5741, %v5939
  %5941 = vmatmul.bf16.gmra.mxu0 %v5866
  %v5942 = vpop.f32.mrf.mxu0
  %v5943 = vadd.f32 %v5741, %v5942
  %v5944 = vpop.f32.mrf.mxu0
  %v5945 = vadd.f32 %v5741, %v5944
  %5946 = vmatmul.bf16.gmra.mxu0 %v5869
  %v5947 = vpop.f32.mrf.mxu0
  %v5948 = vadd.f32 %v5741, %v5947
  %v5949 = vpop.f32.mrf.mxu0
  %v5950 = vadd.f32 %v5741, %v5949
  %5951 = vmatmul.bf16.gmra.mxu0 %v5872
  %v5952 = vpop.f32.mrf.mxu0
  %v5953 = vadd.f32 %v5741, %v5952
  %v5954 = vpop.f32.mrf.mxu0
  %v5955 = vadd.f32 %v5741, %v5954
  %5956 = vmatmul.bf16.gmra.mxu0 %v5875
  %v5957 = vpop.f32.mrf.mxu0
  %v5958 = vadd.f32 %v5741, %v5957
  %v5959 = vpop.f32.mrf.mxu0
  %v5960 = vadd.f32 %v5741, %v5959
  %5961 = vmatmul.bf16.gmra.mxu0 %v5878
  %v5962 = vpop.f32.mrf.mxu0
  %v5963 = vadd.f32 %v5741, %v5962
  %v5964 = vpop.f32.mrf.mxu0
  %v5965 = vadd.f32 %v5741, %v5964
  %5966 = vmatmul.bf16.gmra.mxu0 %v5881
  %v5967 = vpop.f32.mrf.mxu0
  %v5968 = vadd.f32 %v5741, %v5967
  %v5969 = vpop.f32.mrf.mxu0
  %v5970 = vadd.f32 %v5741, %v5969
  %5971 = vdwg.mxu0
  %v5972 = vpack.c.bf16 %v5893, %v5893
  %v5973 = vpack.c.bf16 %v5895, %v5895
  %v5974 = vpack.c.bf16 %v5898, %v5898
  %v5975 = vpack.c.bf16 %v5900, %v5900
  %v5976 = vpack.c.bf16 %v5903, %v5903
  %v5977 = vpack.c.bf16 %v5905, %v5905
  %v5978 = vpack.c.bf16 %v5908, %v5908
  %v5979 = vpack.c.bf16 %v5910, %v5910
  %v5980 = vpack.c.bf16 %v5913, %v5913
  %v5981 = vpack.c.bf16 %v5915, %v5915
  %v5982 = vpack.c.bf16 %v5918, %v5918
  %v5983 = vpack.c.bf16 %v5920, %v5920
  %v5984 = vpack.c.bf16 %v5923, %v5923
  %v5985 = vpack.c.bf16 %v5925, %v5925
  %v5986 = vpack.c.bf16 %v5928, %v5928
  %v5987 = vpack.c.bf16 %v5930, %v5930
  %v5988 = vpack.c.bf16 %v5933, %v5933
  %v5989 = vpack.c.bf16 %v5935, %v5935
  %v5990 = vpack.c.bf16 %v5938, %v5938
  %v5991 = vpack.c.bf16 %v5940, %v5940
  %v5992 = vpack.c.bf16 %v5943, %v5943
  %v5993 = vpack.c.bf16 %v5945, %v5945
  %v5994 = vpack.c.bf16 %v5948, %v5948
  %v5995 = vpack.c.bf16 %v5950, %v5950
  %v5996 = vpack.c.bf16 %v5953, %v5953
  %v5997 = vpack.c.bf16 %v5955, %v5955
  %v5998 = vpack.c.bf16 %v5958, %v5958
  %v5999 = vpack.c.bf16 %v5960, %v5960
  %v6000 = vpack.c.bf16 %v5963, %v5963
  %v6001 = vpack.c.bf16 %v5965, %v5965
  %v6002 = vpack.c.bf16 %v5968, %v5968
  %v6003 = vpack.c.bf16 %v5970, %v5970
  %vm6004 = vcmask 257024
  %6005 = vst.msk [vmem:[%s6] sm:$0xf] %vm6004, %v5972
  %6006 = vst.msk [vmem:[%s6 + $0x4] sm:$0xf] %vm6004, %v5973
  %6007 = vst.msk [vmem:[%s6 + $0x8] sm:$0xf] %vm6004, %v5974
  %6008 = vst.msk [vmem:[%s6 + $0xc] sm:$0xf] %vm6004, %v5975
  %6009 = vst.msk [vmem:[%s6 + $0x10] sm:$0xf] %vm6004, %v5976
  %6010 = vst.msk [vmem:[%s6 + $0x14] sm:$0xf] %vm6004, %v5977
  %6011 = vst.msk [vmem:[%s6 + $0x18] sm:$0xf] %vm6004, %v5978
  %6012 = vst.msk [vmem:[%s6 + $0x1c] sm:$0xf] %vm6004, %v5979
  %6013 = vst.msk [vmem:[%s6 + $0x20] sm:$0xf] %vm6004, %v5980
  %6014 = vst.msk [vmem:[%s6 + $0x24] sm:$0xf] %vm6004, %v5981
  %6015 = vst.msk [vmem:[%s6 + $0x28] sm:$0xf] %vm6004, %v5982
  %6016 = vst.msk [vmem:[%s6 + $0x2c] sm:$0xf] %vm6004, %v5983
  %6017 = vst.msk [vmem:[%s6 + $0x30] sm:$0xf] %vm6004, %v5984
  %6018 = vst.msk [vmem:[%s6 + $0x34] sm:$0xf] %vm6004, %v5985
  %6019 = vst.msk [vmem:[%s6 + $0x38] sm:$0xf] %vm6004, %v5986
  %6020 = vst.msk [vmem:[%s6 + $0x3c] sm:$0xf] %vm6004, %v5987
  %6021 = vst.msk [vmem:[%s6 + $0x40] sm:$0xf] %vm6004, %v5988
  %6022 = vst.msk [vmem:[%s6 + $0x44] sm:$0xf] %vm6004, %v5989
  %6023 = vst.msk [vmem:[%s6 + $0x48] sm:$0xf] %vm6004, %v5990
  %6024 = vst.msk [vmem:[%s6 + $0x4c] sm:$0xf] %vm6004, %v5991
  %6025 = vst.msk [vmem:[%s6 + $0x50] sm:$0xf] %vm6004, %v5992
  %6026 = vst.msk [vmem:[%s6 + $0x54] sm:$0xf] %vm6004, %v5993
  %6027 = vst.msk [vmem:[%s6 + $0x58] sm:$0xf] %vm6004, %v5994
  %6028 = vst.msk [vmem:[%s6 + $0x5c] sm:$0xf] %vm6004, %v5995
  %6029 = vst.msk [vmem:[%s6 + $0x60] sm:$0xf] %vm6004, %v5996
  %6030 = vst.msk [vmem:[%s6 + $0x64] sm:$0xf] %vm6004, %v5997
  %6031 = vst.msk [vmem:[%s6 + $0x68] sm:$0xf] %vm6004, %v5998
  %6032 = vst.msk [vmem:[%s6 + $0x6c] sm:$0xf] %vm6004, %v5999
  %6033 = vst.msk [vmem:[%s6 + $0x70] sm:$0xf] %vm6004, %v6000
  %6034 = vst.msk [vmem:[%s6 + $0x74] sm:$0xf] %vm6004, %v6001
  %6035 = vst.msk [vmem:[%s6 + $0x78] sm:$0xf] %vm6004, %v6002
  %6036 = vst.msk [vmem:[%s6 + $0x7c] sm:$0xf] %vm6004, %v6003
  // Predicated region
  $region26: #{tpu_custom_call.1} parent=0 // pred_check
    _
  $region27: #{tpu_custom_call.1} parent=0 // pred_check_branch
    %6038 = sbr.rel (0) target = $region29
  $region28: #{tpu_custom_call.1} parent=0 // pred_region
    _
  $region29: #{tpu_custom_call.1} parent=0 // pred_fallthru
    _
  // Predicated region
  $region30: #{tpu_custom_call.1} parent=0 // pred_check
    _
  $region31: #{tpu_custom_call.1} parent=0 // pred_check_branch
    %6040 = sbr.rel (0) target = $region33
  $region32: #{tpu_custom_call.1} parent=0 // pred_region
    _
  $region33: #{tpu_custom_call.1} parent=0 // pred_fallthru
    _

</llo_original>
